<compile_context>
chip_gen: v6e
topology: v6e:2x2x1
jax: 0.10.0
libtpu: 0.0.40
codegen_flags: <defaults>
</compile_context>

<pallas_src>
import functools

import jax
import jax.numpy as jnp
import numpy as np
from jax import lax
from jax.experimental import pallas as pl
from jax.experimental.pallas import tpu as pltpu

EPS = 1e-5
LANE = 128                      # channel axes padded to the TPU lane width
MATMUL_DTYPE = jnp.bfloat16     # MXU operand dtype (accumulation stays f32)
# 48 MiB is safe on every generation (v7x physical VMEM is 64 MiB); on
# v5e/v6e (128 MiB) this can be raised further once shapes grow.
VMEM_LIMIT = 48 * 1024 * 1024


def _round_up(x, m):
    return (x + m - 1) // m * m


def _pick_row_tile(h, w, max_rows=1024):
    """Largest divisor of h whose row tile keeps the matmul M dim <= max_rows."""
    best = 1
    for d in range(1, h + 1):
        if h % d == 0 and d * w <= max_rows:
            best = d
    return best


# --------------------------------------------------------------------------
# Kernel A: 3x3 conv as 9 accumulating bf16 MXU dots over shifted views of a
# zero-padded VMEM scratch, with optional fused input BN+ReLU, plus per-image
# BN statistic partials (sum / sum-of-squares).
# --------------------------------------------------------------------------
def conv_stats_kernel(x_ref, w_ref, a_ref, c_ref, y_ref, stats_ref, xpad_ref,
                      *, fuse_bn_relu):
    # x_ref    : [H, W, Cpad]      pre-BN input for this image (f32, unpadded)
    # w_ref    : [9, Cpad, Cpad]   bf16 weights, tap-major (t = ky*3 + kx)
    # a_ref    : [1, Cpad]         BN scale for the input (used iff fuse_bn_relu)
    # c_ref    : [1, Cpad]         BN shift for the input (used iff fuse_bn_relu)
    # y_ref    : [TH, W, Cpad]     pre-BN conv output row tile (f32)
    # stats_ref: [8, Cpad]         rows 0/1 = per-image sum / sum-of-squares
    # xpad_ref : [H+2, W+2, Cpad]  VMEM scratch: activated, zero-padded input
    h = pl.program_id(1)
    H, W, Cpad = x_ref.shape
    TH = y_ref.shape[0]

    @pl.when(h == 0)
    def _prologue():                 # runs once per image (x block changes w/ n)
        stats_ref[...] = jnp.zeros_like(stats_ref)
        xpad_ref[...] = jnp.zeros_like(xpad_ref)          # zero halo
        act = x_ref[...]
        if fuse_bn_relu:             # fused BN+ReLU of the *previous* stage
            a = a_ref[...].reshape(1, 1, Cpad)
            c = c_ref[...].reshape(1, 1, Cpad)
            act = jnp.maximum(act * a + c, 0.0)
        xpad_ref[1:H + 1, 1:W + 1, :] = act

    row0 = pl.multiple_of(h * TH, TH)
    acc = jnp.zeros((TH * W, Cpad), jnp.float32)
    for ky in range(3):
        for kx in range(3):
            tap = xpad_ref[pl.ds(row0 + ky, TH), pl.ds(kx, W), :]
            tap = tap.reshape(TH * W, Cpad).astype(MATMUL_DTYPE)
            acc = acc + jnp.dot(tap, w_ref[ky * 3 + kx],
                                preferred_element_type=jnp.float32)

    y_ref[...] = acc.reshape(TH, W, Cpad)
    # Single-pass per-image statistics in f32.
    # TODO(synk): switch to a shifted / Welford-style accumulation if
    #             |mean| >> std at production scale (cancellation risk).
    stats_ref[0:1, :] += jnp.sum(acc, axis=0, keepdims=True)
    stats_ref[1:2, :] += jnp.sum(acc * acc, axis=0, keepdims=True)


# --------------------------------------------------------------------------
# Kernel B: final fused BN (precomputed a, c) + ReLU apply.
# --------------------------------------------------------------------------
def bn_relu_kernel(y_ref, a_ref, c_ref, o_ref):
    Cpad = y_ref.shape[-1]
    a = a_ref[...].reshape(1, 1, Cpad)
    c = c_ref[...].reshape(1, 1, Cpad)
    o_ref[...] = jnp.maximum(y_ref[...] * a + c, 0.0)


# --------------------------------------------------------------------------
# Wrappers
# --------------------------------------------------------------------------
def conv_stage(x, w, a_in, c_in, *, fuse_bn_relu):
    """One 3x3 conv over channel-padded NHWC input.

    Returns (pre-BN conv output [N,H,W,Cpad] f32, global stats [8,Cpad])."""
    N, H, W, Cpad = x.shape
    TH = _pick_row_tile(H, W)
    NH = H // TH
    M = N * H * W

    flops = 2 * M * 9 * Cpad * Cpad
    bytes_accessed = 4 * (x.size + M * Cpad + N * 8 * Cpad) + 2 * w.size

    y, stats = pl.pallas_call(
        functools.partial(conv_stats_kernel, fuse_bn_relu=fuse_bn_relu),
        out_shape=(
            jax.ShapeDtypeStruct((N, H, W, Cpad), jnp.float32),
            jax.ShapeDtypeStruct((N, 8, Cpad), jnp.float32),
        ),
        grid_spec=pltpu.PrefetchScalarGridSpec(
            num_scalar_prefetch=0,
            grid=(N, NH),
            in_specs=[
                # Whole (unpadded) image resident per batch element; DMA'd once
                # per n since the block index ignores h.
                # TODO(synk): for large H*W on v7x (64 MiB VMEM), switch to
                #             memory_space=pl.ANY + a manually double-buffered
                #             (TH+2)-row halo window.
                pl.BlockSpec((None, H, W, Cpad), lambda n, h: (n, 0, 0, 0)),
                pl.BlockSpec((9, Cpad, Cpad), lambda n, h: (0, 0, 0)),
                pl.BlockSpec((1, Cpad), lambda n, h: (0, 0)),
                pl.BlockSpec((1, Cpad), lambda n, h: (0, 0)),
            ],
            out_specs=(
                pl.BlockSpec((None, TH, W, Cpad), lambda n, h: (n, h, 0, 0)),
                # per-image stats partial -> keeps the n axis "parallel"
                pl.BlockSpec((None, 8, Cpad), lambda n, h: (n, 0, 0)),
            ),
            scratch_shapes=[pltpu.VMEM((H + 2, W + 2, Cpad), jnp.float32)],
        ),
        compiler_params=pltpu.CompilerParams(
            dimension_semantics=("parallel", "arbitrary"),
            vmem_limit_bytes=VMEM_LIMIT,
        ),
        cost_estimate=pl.CostEstimate(
            flops=flops, transcendentals=0, bytes_accessed=bytes_accessed),
    )(x, w, a_in, c_in)

    return y, jnp.sum(stats, axis=0)      # tiny cross-image reduction


def _bn_coeffs(stats, gamma, beta, m):
    """Fold global (training-mode) BatchNorm into y*a + c. stats: [8, Cpad]."""
    inv_m = 1.0 / float(m)
    mean = stats[0:1, :] * inv_m
    var = jnp.maximum(stats[1:2, :] * inv_m - mean * mean, 0.0)
    a = gamma * lax.rsqrt(var + EPS)
    return a, beta - mean * a


def bn_relu_apply(y, a, c):
    N, H, W, Cpad = y.shape
    TH = _pick_row_tile(H, W, max_rows=4096)   # no halo: fat blocks
    return pl.pallas_call(
        bn_relu_kernel,
        out_shape=jax.ShapeDtypeStruct((N, H, W, Cpad), jnp.float32),
        grid_spec=pltpu.PrefetchScalarGridSpec(
            num_scalar_prefetch=0,
            grid=(N, H // TH),
            in_specs=[
                pl.BlockSpec((None, TH, W, Cpad), lambda n, h: (n, h, 0, 0)),
                pl.BlockSpec((1, Cpad), lambda n, h: (0, 0)),
                pl.BlockSpec((1, Cpad), lambda n, h: (0, 0)),
            ],
            out_specs=pl.BlockSpec((None, TH, W, Cpad),
                                   lambda n, h: (n, h, 0, 0)),
        ),
        compiler_params=pltpu.CompilerParams(
            dimension_semantics=("parallel", "parallel"),
            vmem_limit_bytes=VMEM_LIMIT,
        ),
    )(y, a, c)


def conv_block_forward(x_nchw, params):
    """Forward pass equivalent to the PyTorch conv_block (training-mode BN)."""
    in_ch = x_nchw.shape[1]
    out_ch = params["out_ch"]
    cpad = params["cpad"]
    N, _, H, W = x_nchw.shape
    m = N * H * W

    x = jnp.transpose(x_nchw, (0, 2, 3, 1)).astype(jnp.float32)   # NCHW -> NHWC
    x = jnp.pad(x, ((0, 0), (0, 0), (0, 0), (0, cpad - in_ch)))   # lane-pad C

    one = jnp.ones((1, cpad), jnp.float32)
    zero = jnp.zeros((1, cpad), jnp.float32)

    # Stage 1: conv only (its BN + ReLU is fused into stage 2's kernel).
    y1, stats1 = conv_stage(x, params["w1"], one, zero, fuse_bn_relu=False)
    a1, c1 = _bn_coeffs(stats1, params["g1"], params["beta1"], m)

    # Stage 2: fused [BN1 + ReLU] -> conv, reading pre-BN y1 directly.
    y2, stats2 = conv_stage(y1, params["w2"], a1, c1, fuse_bn_relu=True)
    a2, c2 = _bn_coeffs(stats2, params["g2"], params["beta2"], m)

    out = bn_relu_apply(y2, a2, c2)               # final BN + ReLU
    out = out[..., :out_ch]                       # drop lane padding
    return jnp.transpose(out, (0, 3, 1, 2))       # NHWC -> NCHW


# --------------------------------------------------------------------------
# Parameter setup (PyTorch-shaped -> lane-padded kernel layout) and reference
# --------------------------------------------------------------------------
def _prep_conv_params(w_oihw, gamma, beta, cin_pad, cout_pad):
    cout, cin = w_oihw.shape[0], w_oihw.shape[1]
    w = jnp.transpose(w_oihw, (2, 3, 1, 0))                      # [3,3,Cin,Cout]
    w = jnp.pad(w, ((0, 0), (0, 0), (0, cin_pad - cin), (0, cout_pad - cout)))
    w9 = w.reshape(9, cin_pad, cout_pad).astype(MATMUL_DTYPE)    # tap-major
    pad1 = lambda v: jnp.pad(v, (0, cout_pad - cout)).reshape(1, cout_pad)
    return w9, pad1(gamma), pad1(beta)


def init_params(key, in_ch, out_ch):
    # TODO(synk): for tiny in_ch (layer 1) a compact K layout (pack the 9 taps
    #             into one/two 128-lane groups) would avoid padding Cin to 128.
    cpad = _round_up(max(in_ch, out_ch, LANE), LANE)
    k = jax.random.split(key, 4)
    w1 = jax.random.normal(k[0], (out_ch, in_ch, 3, 3), jnp.float32) * 0.2
    b1 = jax.random.normal(k[1], (out_ch,), jnp.float32) * 0.1
    w2 = jax.random.normal(k[2], (out_ch, out_ch, 3, 3), jnp.float32) * 0.2
    b2 = jax.random.normal(k[3], (out_ch,), jnp.float32) * 0.1
    g = jnp.ones((out_ch,), jnp.float32)
    z = jnp.zeros((out_ch,), jnp.float32)
    # NOTE: conv biases are NOT passed to the kernels -- a bias immediately
    # followed by BatchNorm cancels exactly; the reference keeps them.
    w1p, g1p, z1p = _prep_conv_params(w1, g, z, cpad, cpad)
    w2p, g2p, z2p = _prep_conv_params(w2, g, z, cpad, cpad)
    params = {
        "w1": w1p, "g1": g1p, "beta1": z1p,
        "w2": w2p, "g2": g2p, "beta2": z2p,
        "out_ch": out_ch, "cpad": cpad,
    }
    return params, (w1, b1, w2, b2)


def ref_stage(x_nhwc, w_oihw, b, gamma, beta):
    w_hwio = jnp.transpose(w_oihw, (2, 3, 1, 0))
    y = lax.conv_general_dilated(
        x_nhwc, w_hwio, window_strides=(1, 1), padding="SAME",
        dimension_numbers=("NHWC", "HWIO", "NHWC")) + b
    mean = jnp.mean(y, axis=(0, 1, 2), keepdims=True)
    var = jnp.mean((y - mean) ** 2, axis=(0, 1, 2), keepdims=True)
    y = (y - mean) * lax.rsqrt(var + EPS) * gamma + beta
    return jnp.maximum(y, 0.0)


def ref_forward(x_nchw, raw):
    w1, b1, w2, b2 = raw
    x = jnp.transpose(x_nchw, (0, 2, 3, 1))
    g = lambda cc: jnp.ones((cc,), jnp.float32)
    z = lambda cc: jnp.zeros((cc,), jnp.float32)
    x = ref_stage(x, w1, b1, g(w1.shape[0]), z(w1.shape[0]))
    x = ref_stage(x, w2, b2, g(w2.shape[0]), z(w2.shape[0]))
    return jnp.transpose(x, (0, 3, 1, 2))


# --------------------------------------------------------------------------
if __name__ == "__main__":
    key = jax.random.PRNGKey(0)
    kx, kp = jax.random.split(key)

    N, in_ch, out_ch, H, W = 2, 4, 8, 16, 16
    x = jax.random.normal(kx, (N, in_ch, H, W), jnp.float32)   # PyTorch NCHW
    params, raw = init_params(kp, in_ch, out_ch)

    out = jax.block_until_ready(conv_block_forward(x, params))
    assert out.shape == (N, out_ch, H, W), out.shape

    ref = jax.block_until_ready(ref_forward(x, raw))
    # Tolerance reflects bf16 MXU operands (f32 accumulation) in the kernels.
    np.testing.assert_allclose(np.asarray(out), np.asarray(ref),
                               rtol=2e-2, atol=2e-2)

    print("KERNEL_OK")
</pallas_src>

<mosaic_0001>
module attributes {stable_mosaic.version = 11 : i64} {
  func.func @conv_stats_kernel(%arg0: i32, %arg1: i32, %arg2: memref<1x16x16x128xf32, #tpu.memory_space<vmem>>, %arg3: memref<9x128x128xbf16, #tpu.memory_space<vmem>>, %arg4: memref<1x128xf32, #tpu.memory_space<vmem>>, %arg5: memref<1x128xf32, #tpu.memory_space<vmem>>, %arg6: memref<1x16x16x128xf32, #tpu.memory_space<vmem>>, %arg7: memref<1x8x128xf32, #tpu.memory_space<vmem>>, %arg8: memref<18x18x128xf32, #tpu.memory_space<vmem>>) attributes {dimension_semantics = [#tpu.dimension_semantics<parallel>, #tpu.dimension_semantics<arbitrary>], iteration_bounds = array<i64: 2, 1>, scalar_prefetch = 0 : i64, scratch_operands = 1 : i64, tpu.core_type = #tpu.core_type<tc>, window_params = [{transform_indices = @transform_0, window_bounds = array<i64: 1, 16, 16, 128>}, {pipeline_mode = #tpu.pipeline_mode<synchronous>, transform_indices = @transform_1, window_bounds = array<i64: 9, 128, 128>}, {pipeline_mode = #tpu.pipeline_mode<synchronous>, transform_indices = @transform_2, window_bounds = array<i64: 1, 128>}, {pipeline_mode = #tpu.pipeline_mode<synchronous>, transform_indices = @transform_3, window_bounds = array<i64: 1, 128>}, {transform_indices = @transform_4, window_bounds = array<i64: 1, 16, 16, 128>}, {transform_indices = @transform_5, window_bounds = array<i64: 1, 8, 128>}]} {
    %c0_i32 = arith.constant 0 : i32
    %0 = arith.cmpi eq, %arg1, %c0_i32 : i32
    %1 = arith.extui %0 : i1 to i32
    %c0_i32_0 = arith.constant 0 : i32
    %2 = arith.cmpi ne, %1, %c0_i32_0 : i32
    scf.if %2 {
      %cst_71 = arith.constant 0.000000e+00 : f32
      %108 = vector.broadcast %cst_71 : f32 to vector<8x128xf32>
      %c0_72 = arith.constant 0 : index
      %c0_73 = arith.constant 0 : index
      %c0_74 = arith.constant 0 : index
      %109 = vector.load %arg7[%c0_72, %c0_73, %c0_74] : memref<1x8x128xf32, #tpu.memory_space<vmem>>, vector<1x8x128xf32>
      %110 = vector.shape_cast %109 : vector<1x8x128xf32> to vector<8x128xf32>
      %111 = vector.shape_cast %108 : vector<8x128xf32> to vector<1x8x128xf32>
      tpu.vector_store %arg7[%c0_72, %c0_73, %c0_74], %111 {strides = array<i32>} : memref<1x8x128xf32, #tpu.memory_space<vmem>>, vector<1x8x128xf32>,
      %cst_75 = arith.constant 0.000000e+00 : f32
      %112 = vector.broadcast %cst_75 : f32 to vector<18x18x128xf32>
      %c0_76 = arith.constant 0 : index
      %c0_77 = arith.constant 0 : index
      %c0_78 = arith.constant 0 : index
      %113 = vector.load %arg8[%c0_76, %c0_77, %c0_78] : memref<18x18x128xf32, #tpu.memory_space<vmem>>, vector<18x18x128xf32>
      tpu.vector_store %arg8[%c0_76, %c0_77, %c0_78], %112 {strides = array<i32>} : memref<18x18x128xf32, #tpu.memory_space<vmem>>, vector<18x18x128xf32>,
      %c0_79 = arith.constant 0 : index
      %c0_80 = arith.constant 0 : index
      %c0_81 = arith.constant 0 : index
      %c0_82 = arith.constant 0 : index
      %114 = vector.load %arg2[%c0_79, %c0_80, %c0_81, %c0_82] : memref<1x16x16x128xf32, #tpu.memory_space<vmem>>, vector<1x16x16x128xf32>
      %115 = vector.shape_cast %114 : vector<1x16x16x128xf32> to vector<16x16x128xf32>
      %c1_83 = arith.constant 1 : index
      %c1_84 = arith.constant 1 : index
      %c0_85 = arith.constant 0 : index
      %116 = vector.load %arg8[%c1_83, %c1_84, %c0_85] : memref<18x18x128xf32, #tpu.memory_space<vmem>>, vector<16x16x128xf32>
      tpu.vector_store %arg8[%c1_83, %c1_84, %c0_85], %115 {strides = array<i32>} : memref<18x18x128xf32, #tpu.memory_space<vmem>>, vector<16x16x128xf32>,
    } else {
    }
    %c16_i32 = arith.constant 16 : i32
    %3 = arith.muli %arg1, %c16_i32 : i32
    %4 = tpu.assume_multiple %3, 16 : i32
    %cst = arith.constant 0.000000e+00 : f32
    %5 = vector.broadcast %cst : f32 to vector<256x128xf32>
    %c0_i32_1 = arith.constant 0 : i32
    %6 = arith.addi %4, %c0_i32_1 : i32
    %7 = arith.index_cast %6 : i32 to index
    %c0 = arith.constant 0 : index
    %c0_2 = arith.constant 0 : index
    %8 = vector.load %arg8[%7, %c0, %c0_2] : memref<18x18x128xf32, #tpu.memory_space<vmem>>, vector<16x16x128xf32>
    %9 = vector.shape_cast %8 : vector<16x16x128xf32> to vector<256x128xf32>
    %10 = arith.truncf %9 : vector<256x128xf32> to vector<256x128xbf16>
    %c0_3 = arith.constant 0 : index
    %c0_4 = arith.constant 0 : index
    %c0_5 = arith.constant 0 : index
    %11 = vector.load %arg3[%c0_3, %c0_4, %c0_5] : memref<9x128x128xbf16, #tpu.memory_space<vmem>>, vector<1x128x128xbf16>
    %12 = vector.shape_cast %11 : vector<1x128x128xbf16> to vector<128x128xbf16>
    %cst_6 = arith.constant dense<0.000000e+00> : vector<256x128xf32>
    %13 = tpu.matmul %10, %12, %cst_6 {dimension_numbers = #tpu.dot_dimension_numbers<[1], [0], [0], [1], [0, 0, 1, 1], [], []>} : vector<256x128xbf16>, vector<128x128xbf16>, vector<256x128xf32> -> vector<256x128xf32>
    %14 = arith.addf %5, %13 : vector<256x128xf32>
    %c0_i32_7 = arith.constant 0 : i32
    %15 = arith.addi %4, %c0_i32_7 : i32
    %16 = arith.index_cast %15 : i32 to index
    %c1 = arith.constant 1 : index
    %c0_8 = arith.constant 0 : index
    %17 = vector.load %arg8[%16, %c1, %c0_8] : memref<18x18x128xf32, #tpu.memory_space<vmem>>, vector<16x16x128xf32>
    %18 = vector.shape_cast %17 : vector<16x16x128xf32> to vector<256x128xf32>
    %19 = arith.truncf %18 : vector<256x128xf32> to vector<256x128xbf16>
    %c1_9 = arith.constant 1 : index
    %c0_10 = arith.constant 0 : index
    %c0_11 = arith.constant 0 : index
    %20 = vector.load %arg3[%c1_9, %c0_10, %c0_11] : memref<9x128x128xbf16, #tpu.memory_space<vmem>>, vector<1x128x128xbf16>
    %21 = vector.shape_cast %20 : vector<1x128x128xbf16> to vector<128x128xbf16>
    %cst_12 = arith.constant dense<0.000000e+00> : vector<256x128xf32>
    %22 = tpu.matmul %19, %21, %cst_12 {dimension_numbers = #tpu.dot_dimension_numbers<[1], [0], [0], [1], [0, 0, 1, 1], [], []>} : vector<256x128xbf16>, vector<128x128xbf16>, vector<256x128xf32> -> vector<256x128xf32>
    %23 = arith.addf %14, %22 : vector<256x128xf32>
    %c0_i32_13 = arith.constant 0 : i32
    %24 = arith.addi %4, %c0_i32_13 : i32
    %25 = arith.index_cast %24 : i32 to index
    %c2 = arith.constant 2 : index
    %c0_14 = arith.constant 0 : index
    %26 = vector.load %arg8[%25, %c2, %c0_14] : memref<18x18x128xf32, #tpu.memory_space<vmem>>, vector<16x16x128xf32>
    %27 = vector.shape_cast %26 : vector<16x16x128xf32> to vector<256x128xf32>
    %28 = arith.truncf %27 : vector<256x128xf32> to vector<256x128xbf16>
    %c2_15 = arith.constant 2 : index
    %c0_16 = arith.constant 0 : index
    %c0_17 = arith.constant 0 : index
    %29 = vector.load %arg3[%c2_15, %c0_16, %c0_17] : memref<9x128x128xbf16, #tpu.memory_space<vmem>>, vector<1x128x128xbf16>
    %30 = vector.shape_cast %29 : vector<1x128x128xbf16> to vector<128x128xbf16>
    %cst_18 = arith.constant dense<0.000000e+00> : vector<256x128xf32>
    %31 = tpu.matmul %28, %30, %cst_18 {dimension_numbers = #tpu.dot_dimension_numbers<[1], [0], [0], [1], [0, 0, 1, 1], [], []>} : vector<256x128xbf16>, vector<128x128xbf16>, vector<256x128xf32> -> vector<256x128xf32>
    %32 = arith.addf %23, %31 : vector<256x128xf32>
    %c1_i32 = arith.constant 1 : i32
    %33 = arith.addi %4, %c1_i32 : i32
    %34 = arith.index_cast %33 : i32 to index
    %c0_19 = arith.constant 0 : index
    %c0_20 = arith.constant 0 : index
    %35 = vector.load %arg8[%34, %c0_19, %c0_20] : memref<18x18x128xf32, #tpu.memory_space<vmem>>, vector<16x16x128xf32>
    %36 = vector.shape_cast %35 : vector<16x16x128xf32> to vector<256x128xf32>
    %37 = arith.truncf %36 : vector<256x128xf32> to vector<256x128xbf16>
    %c3 = arith.constant 3 : index
    %c0_21 = arith.constant 0 : index
    %c0_22 = arith.constant 0 : index
    %38 = vector.load %arg3[%c3, %c0_21, %c0_22] : memref<9x128x128xbf16, #tpu.memory_space<vmem>>, vector<1x128x128xbf16>
    %39 = vector.shape_cast %38 : vector<1x128x128xbf16> to vector<128x128xbf16>
    %cst_23 = arith.constant dense<0.000000e+00> : vector<256x128xf32>
    %40 = tpu.matmul %37, %39, %cst_23 {dimension_numbers = #tpu.dot_dimension_numbers<[1], [0], [0], [1], [0, 0, 1, 1], [], []>} : vector<256x128xbf16>, vector<128x128xbf16>, vector<256x128xf32> -> vector<256x128xf32>
    %41 = arith.addf %32, %40 : vector<256x128xf32>
    %c1_i32_24 = arith.constant 1 : i32
    %42 = arith.addi %4, %c1_i32_24 : i32
    %43 = arith.index_cast %42 : i32 to index
    %c1_25 = arith.constant 1 : index
    %c0_26 = arith.constant 0 : index
    %44 = vector.load %arg8[%43, %c1_25, %c0_26] : memref<18x18x128xf32, #tpu.memory_space<vmem>>, vector<16x16x128xf32>
    %45 = vector.shape_cast %44 : vector<16x16x128xf32> to vector<256x128xf32>
    %46 = arith.truncf %45 : vector<256x128xf32> to vector<256x128xbf16>
    %c4 = arith.constant 4 : index
    %c0_27 = arith.constant 0 : index
    %c0_28 = arith.constant 0 : index
    %47 = vector.load %arg3[%c4, %c0_27, %c0_28] : memref<9x128x128xbf16, #tpu.memory_space<vmem>>, vector<1x128x128xbf16>
    %48 = vector.shape_cast %47 : vector<1x128x128xbf16> to vector<128x128xbf16>
    %cst_29 = arith.constant dense<0.000000e+00> : vector<256x128xf32>
    %49 = tpu.matmul %46, %48, %cst_29 {dimension_numbers = #tpu.dot_dimension_numbers<[1], [0], [0], [1], [0, 0, 1, 1], [], []>} : vector<256x128xbf16>, vector<128x128xbf16>, vector<256x128xf32> -> vector<256x128xf32>
    %50 = arith.addf %41, %49 : vector<256x128xf32>
    %c1_i32_30 = arith.constant 1 : i32
    %51 = arith.addi %4, %c1_i32_30 : i32
    %52 = arith.index_cast %51 : i32 to index
    %c2_31 = arith.constant 2 : index
    %c0_32 = arith.constant 0 : index
    %53 = vector.load %arg8[%52, %c2_31, %c0_32] : memref<18x18x128xf32, #tpu.memory_space<vmem>>, vector<16x16x128xf32>
    %54 = vector.shape_cast %53 : vector<16x16x128xf32> to vector<256x128xf32>
    %55 = arith.truncf %54 : vector<256x128xf32> to vector<256x128xbf16>
    %c5 = arith.constant 5 : index
    %c0_33 = arith.constant 0 : index
    %c0_34 = arith.constant 0 : index
    %56 = vector.load %arg3[%c5, %c0_33, %c0_34] : memref<9x128x128xbf16, #tpu.memory_space<vmem>>, vector<1x128x128xbf16>
    %57 = vector.shape_cast %56 : vector<1x128x128xbf16> to vector<128x128xbf16>
    %cst_35 = arith.constant dense<0.000000e+00> : vector<256x128xf32>
    %58 = tpu.matmul %55, %57, %cst_35 {dimension_numbers = #tpu.dot_dimension_numbers<[1], [0], [0], [1], [0, 0, 1, 1], [], []>} : vector<256x128xbf16>, vector<128x128xbf16>, vector<256x128xf32> -> vector<256x128xf32>
    %59 = arith.addf %50, %58 : vector<256x128xf32>
    %c2_i32 = arith.constant 2 : i32
    %60 = arith.addi %4, %c2_i32 : i32
    %61 = arith.index_cast %60 : i32 to index
    %c0_36 = arith.constant 0 : index
    %c0_37 = arith.constant 0 : index
    %62 = vector.load %arg8[%61, %c0_36, %c0_37] : memref<18x18x128xf32, #tpu.memory_space<vmem>>, vector<16x16x128xf32>
    %63 = vector.shape_cast %62 : vector<16x16x128xf32> to vector<256x128xf32>
    %64 = arith.truncf %63 : vector<256x128xf32> to vector<256x128xbf16>
    %c6 = arith.constant 6 : index
    %c0_38 = arith.constant 0 : index
    %c0_39 = arith.constant 0 : index
    %65 = vector.load %arg3[%c6, %c0_38, %c0_39] : memref<9x128x128xbf16, #tpu.memory_space<vmem>>, vector<1x128x128xbf16>
    %66 = vector.shape_cast %65 : vector<1x128x128xbf16> to vector<128x128xbf16>
    %cst_40 = arith.constant dense<0.000000e+00> : vector<256x128xf32>
    %67 = tpu.matmul %64, %66, %cst_40 {dimension_numbers = #tpu.dot_dimension_numbers<[1], [0], [0], [1], [0, 0, 1, 1], [], []>} : vector<256x128xbf16>, vector<128x128xbf16>, vector<256x128xf32> -> vector<256x128xf32>
    %68 = arith.addf %59, %67 : vector<256x128xf32>
    %c2_i32_41 = arith.constant 2 : i32
    %69 = arith.addi %4, %c2_i32_41 : i32
    %70 = arith.index_cast %69 : i32 to index
    %c1_42 = arith.constant 1 : index
    %c0_43 = arith.constant 0 : index
    %71 = vector.load %arg8[%70, %c1_42, %c0_43] : memref<18x18x128xf32, #tpu.memory_space<vmem>>, vector<16x16x128xf32>
    %72 = vector.shape_cast %71 : vector<16x16x128xf32> to vector<256x128xf32>
    %73 = arith.truncf %72 : vector<256x128xf32> to vector<256x128xbf16>
    %c7 = arith.constant 7 : index
    %c0_44 = arith.constant 0 : index
    %c0_45 = arith.constant 0 : index
    %74 = vector.load %arg3[%c7, %c0_44, %c0_45] : memref<9x128x128xbf16, #tpu.memory_space<vmem>>, vector<1x128x128xbf16>
    %75 = vector.shape_cast %74 : vector<1x128x128xbf16> to vector<128x128xbf16>
    %cst_46 = arith.constant dense<0.000000e+00> : vector<256x128xf32>
    %76 = tpu.matmul %73, %75, %cst_46 {dimension_numbers = #tpu.dot_dimension_numbers<[1], [0], [0], [1], [0, 0, 1, 1], [], []>} : vector<256x128xbf16>, vector<128x128xbf16>, vector<256x128xf32> -> vector<256x128xf32>
    %77 = arith.addf %68, %76 : vector<256x128xf32>
    %c2_i32_47 = arith.constant 2 : i32
    %78 = arith.addi %4, %c2_i32_47 : i32
    %79 = arith.index_cast %78 : i32 to index
    %c2_48 = arith.constant 2 : index
    %c0_49 = arith.constant 0 : index
    %80 = vector.load %arg8[%79, %c2_48, %c0_49] : memref<18x18x128xf32, #tpu.memory_space<vmem>>, vector<16x16x128xf32>
    %81 = vector.shape_cast %80 : vector<16x16x128xf32> to vector<256x128xf32>
    %82 = arith.truncf %81 : vector<256x128xf32> to vector<256x128xbf16>
    %c8 = arith.constant 8 : index
    %c0_50 = arith.constant 0 : index
    %c0_51 = arith.constant 0 : index
    %83 = vector.load %arg3[%c8, %c0_50, %c0_51] : memref<9x128x128xbf16, #tpu.memory_space<vmem>>, vector<1x128x128xbf16>
    %84 = vector.shape_cast %83 : vector<1x128x128xbf16> to vector<128x128xbf16>
    %cst_52 = arith.constant dense<0.000000e+00> : vector<256x128xf32>
    %85 = tpu.matmul %82, %84, %cst_52 {dimension_numbers = #tpu.dot_dimension_numbers<[1], [0], [0], [1], [0, 0, 1, 1], [], []>} : vector<256x128xbf16>, vector<128x128xbf16>, vector<256x128xf32> -> vector<256x128xf32>
    %86 = arith.addf %77, %85 : vector<256x128xf32>
    %87 = vector.shape_cast %86 : vector<256x128xf32> to vector<16x16x128xf32>
    %c0_53 = arith.constant 0 : index
    %c0_54 = arith.constant 0 : index
    %c0_55 = arith.constant 0 : index
    %c0_56 = arith.constant 0 : index
    %88 = vector.load %arg6[%c0_53, %c0_54, %c0_55, %c0_56] : memref<1x16x16x128xf32, #tpu.memory_space<vmem>>, vector<1x16x16x128xf32>
    %89 = vector.shape_cast %88 : vector<1x16x16x128xf32> to vector<16x16x128xf32>
    %90 = vector.shape_cast %87 : vector<16x16x128xf32> to vector<1x16x16x128xf32>
    tpu.vector_store %arg6[%c0_53, %c0_54, %c0_55, %c0_56], %90 {strides = array<i32>} : memref<1x16x16x128xf32, #tpu.memory_space<vmem>>, vector<1x16x16x128xf32>,
    %c0_57 = arith.constant 0 : index
    %c0_58 = arith.constant 0 : index
    %c0_59 = arith.constant 0 : index
    %91 = vector.load %arg7[%c0_57, %c0_58, %c0_59] : memref<1x8x128xf32, #tpu.memory_space<vmem>>, vector<1x1x128xf32>
    %92 = vector.shape_cast %91 : vector<1x1x128xf32> to vector<1x128xf32>
    %cst_60 = arith.constant dense<0.000000e+00> : vector<128xf32>
    %93 = vector.multi_reduction <add>, %86, %cst_60 [0] : vector<256x128xf32> to vector<128xf32>
    %94 = vector.shape_cast %93 : vector<128xf32> to vector<1x128xf32>
    %95 = arith.addf %92, %94 : vector<1x128xf32>
    %c0_61 = arith.constant 0 : index
    %c0_62 = arith.constant 0 : index
    %c0_63 = arith.constant 0 : index
    %96 = vector.load %arg7[%c0_61, %c0_62, %c0_63] : memref<1x8x128xf32, #tpu.memory_space<vmem>>, vector<1x1x128xf32>
    %97 = vector.shape_cast %96 : vector<1x1x128xf32> to vector<1x128xf32>
    %98 = vector.shape_cast %95 : vector<1x128xf32> to vector<1x1x128xf32>
    tpu.vector_store %arg7[%c0_61, %c0_62, %c0_63], %98 {strides = array<i32>} : memref<1x8x128xf32, #tpu.memory_space<vmem>>, vector<1x1x128xf32>,
    %c0_64 = arith.constant 0 : index
    %c1_65 = arith.constant 1 : index
    %c0_66 = arith.constant 0 : index
    %99 = vector.load %arg7[%c0_64, %c1_65, %c0_66] : memref<1x8x128xf32, #tpu.memory_space<vmem>>, vector<1x1x128xf32>
    %100 = vector.shape_cast %99 : vector<1x1x128xf32> to vector<1x128xf32>
    %101 = arith.mulf %86, %86 : vector<256x128xf32>
    %cst_67 = arith.constant dense<0.000000e+00> : vector<128xf32>
    %102 = vector.multi_reduction <add>, %101, %cst_67 [0] : vector<256x128xf32> to vector<128xf32>
    %103 = vector.shape_cast %102 : vector<128xf32> to vector<1x128xf32>
    %104 = arith.addf %100, %103 : vector<1x128xf32>
    %c0_68 = arith.constant 0 : index
    %c1_69 = arith.constant 1 : index
    %c0_70 = arith.constant 0 : index
    %105 = vector.load %arg7[%c0_68, %c1_69, %c0_70] : memref<1x8x128xf32, #tpu.memory_space<vmem>>, vector<1x1x128xf32>
    %106 = vector.shape_cast %105 : vector<1x1x128xf32> to vector<1x128xf32>
    %107 = vector.shape_cast %104 : vector<1x128xf32> to vector<1x1x128xf32>
    tpu.vector_store %arg7[%c0_68, %c1_69, %c0_70], %107 {strides = array<i32>} : memref<1x8x128xf32, #tpu.memory_space<vmem>>, vector<1x1x128xf32>,
    return
  }
  func.func @transform_0(%arg0: i32, %arg1: i32) -> (i32, i32, i32, i32) {
    %c0_i32 = arith.constant 0 : i32
    %c0_i32_0 = arith.constant 0 : i32
    %c0_i32_1 = arith.constant 0 : i32
    %c0_i32_2 = arith.constant 0 : i32
    return %arg0, %c0_i32, %c0_i32_0, %c0_i32_1 : i32, i32, i32, i32
  }
  func.func @transform_1(%arg0: i32, %arg1: i32) -> (i32, i32, i32) {
    %c0_i32 = arith.constant 0 : i32
    %c0_i32_0 = arith.constant 0 : i32
    %c0_i32_1 = arith.constant 0 : i32
    %c0_i32_2 = arith.constant 0 : i32
    return %c0_i32, %c0_i32_0, %c0_i32_1 : i32, i32, i32
  }
  func.func @transform_2(%arg0: i32, %arg1: i32) -> (i32, i32) {
    %c0_i32 = arith.constant 0 : i32
    %c0_i32_0 = arith.constant 0 : i32
    %c0_i32_1 = arith.constant 0 : i32
    return %c0_i32, %c0_i32_0 : i32, i32
  }
  func.func @transform_3(%arg0: i32, %arg1: i32) -> (i32, i32) {
    %c0_i32 = arith.constant 0 : i32
    %c0_i32_0 = arith.constant 0 : i32
    %c0_i32_1 = arith.constant 0 : i32
    return %c0_i32, %c0_i32_0 : i32, i32
  }
  func.func @transform_4(%arg0: i32, %arg1: i32) -> (i32, i32, i32, i32) {
    %c0_i32 = arith.constant 0 : i32
    %c0_i32_0 = arith.constant 0 : i32
    %c0_i32_1 = arith.constant 0 : i32
    return %arg0, %arg1, %c0_i32, %c0_i32_0 : i32, i32, i32, i32
  }
  func.func @transform_5(%arg0: i32, %arg1: i32) -> (i32, i32, i32) {
    %c0_i32 = arith.constant 0 : i32
    %c0_i32_0 = arith.constant 0 : i32
    %c0_i32_1 = arith.constant 0 : i32
    return %arg0, %c0_i32, %c0_i32_0 : i32, i32, i32
  }
}

</mosaic_0001>

<llo_original>
// kernel: tpu_custom_call.1
$region0: #{tpu_custom_call.1}
  #allocation0 [shape = 'u32[]', space=smem, size = 0x4, offset = 0x4, fixed_abs, tag = 'smem constant byte address 0x4 - core index']
  #allocation1 [shape = 'u32[144,128]{1,0:T(1,128)}', space=vmem, size = 0x12000, scoped, tag = 'internal scratch']
  #allocation2 [shape = 'f32[18,18,128]{2,1,0:T(8,128)}', space=vmem, size = 0x36000, scoped, tag = 'scratch operand']
  %s0 = inlined_call_operand.hbm [shape: f32[2,16,16,128], index: 0, kind: input, shape index: {}]
  %s1 = inlined_call_operand.hbm [shape: bf16[9,128,128], index: 1, kind: input, shape index: {}]
  %s2 = inlined_call_operand.vmem [shape: f32[1,128], index: 2, kind: input, shape index: {}]
  %s3 = inlined_call_operand.vmem [shape: f32[1,128], index: 3, kind: input, shape index: {}]
  %s4 = inlined_call_operand.hbm [shape: f32[2,16,16,128], index: 4, kind: output, shape index: {0}]
  %s5 = inlined_call_operand.hbm [shape: f32[2,8,128], index: 5, kind: output, shape index: {1}]
  %6 = xla_tuple %s4, %s5
  %s7 = sld [smem:[#allocation0]]
  $region69: #{tpu_custom_call.1} parent=0
    _
  %s9 = ssub.s32 1, %s7
  %s10 = scalar_select 0, %s9, %s7
  $region1: #{tpu_custom_call.1} parent=0
    #allocation3 [shape = 'u8[262144]{0}', space=vmem, size = 0x40000, scoped, tag = 'input window, operand 0']
    #allocation4 [shape = 's32[2]{0}', space=sflag, size = 0x8, scoped, tag = 'scoped memory for tpu_custom_call.1']
    #allocation5 [shape = 's32[2]{0}', space=sflag, size = 0x8, scoped, tag = 'scoped memory for tpu_custom_call.1']
    #allocation6 [shape = 'u8[294912]{0}', space=vmem, size = 0x48000, scoped, tag = 'input window, operand 1, single buffered']
    #allocation7 [shape = 's32[1]{0}', space=sflag, size = 0x4, scoped, tag = 'scoped memory for tpu_custom_call.1']
    #allocation8 [shape = 'u8[262144]{0}', space=vmem, size = 0x40000, scoped, tag = 'output window, operand 0']
    #allocation9 [shape = 'u8[8192]{0}', space=vmem, size = 0x2000, scoped, tag = 'output window, operand 1']
    #allocation10 [shape = 's32[2]{0}', space=sflag, size = 0x8, scoped, tag = 'scoped memory for tpu_custom_call.1']
    %11 = vsyncpa [#allocation4], 0
    %s12 = scalar_lea.sflag [#allocation4], 1
    %13 = vsyncpa %s12, 0
    %14 = vsyncpa [#allocation7], 0
    %15 = vsyncpa [#allocation5], 0
    %s16 = scalar_lea.sflag [#allocation5], 1
    %17 = vsyncpa %s16, 0
    %18 = vsyncpa [#allocation10], 0
    %s19 = scalar_lea.sflag [#allocation10], 1
    %20 = vsyncpa %s19, 0
    loop: start=0, step=1, limit=4
    $region2: #{tpu_custom_call.1} parent=1 // loop_pre_header
      _
    $region3: #{tpu_custom_call.1} parent=1 // loop_header
      %s22 = sphi 0, %s26
      %p23 = scmp.ge.s32.totalorder %s22, 4
      %s29 = sphi 0, %s41
      %s30 = sphi 0, %s37
      %s31 = sphi 0, %s29
      %s32 = sphi 0, %s30
      %s33 = sphi 0, %s31
      %s34 = sphi 0, %s32
      %s44 = sphi 0, %s46
      %s47 = sphi 0, %s44
      %s48 = sphi 0, %s47
      %s64 = sphi 0, %s48
      %s68 = sphi 0, %s68
      %s70 = sphi 0, %s68
      %s71 = sphi 0, %s70
      %s85 = sphi 0, %s71
      %s89 = sphi 0, %s89
      %s91 = sphi 0, %s89
      %s92 = sphi 0, %s91
      %s106 = sphi 0, %s92
      %s110 = sphi 0, %s110
      %s112 = sphi 0, %s110
      %s113 = sphi 0, %s112
      %s127 = sphi 0, %s113
      %s135 = sphi 0, %s137
      %s138 = sphi 0, %s135
      %s139 = sphi 0, %s138
      %s155 = sphi 0, %s139
      %s161 = sphi 0, %s163
      %s164 = sphi 0, %s161
      %s165 = sphi 0, %s164
      %s181 = sphi 0, %s165
    $region4: #{tpu_custom_call.1} parent=1 // loop_header_branch
      %25 = sbr.rel (%p23) target = $region8
    $region5: #{tpu_custom_call.1} parent=1 // loop_body
      %s27 = ssub.s32 %s22, 1
      %s28 = ssub.s32 %s22, 2
      %s35 = sadd.s32 1, %s30
      %p36 = scmp.ge.s32.totalorder %s35, 1
      %s37 = scalar_select %p36, 0, %s35
      %s38 = sadd.s32 1, %s29
      %s39 = scalar_select %p36, %s38, %s29
      %p40 = scmp.ge.s32.totalorder %s39, 2
      %s41 = scalar_select %p40, 0, %s39
      %s42 = ssub.s32 %s29, %s41
      %p43 = scmp.eq.s32.totalorder %s42, 0
      %s45 = sadd.s32 %s44, 1
      %s46 = scalar_select %p43, %s44, %s45
      %p49 = pneg %p43
      %p50 = scmp.eq.s32.totalorder %s22, 1
      %p51 = por %p49, %p50
      %p52 = scmp.ne.s32.totalorder %s44, %s47
      %p53 = scmp.eq.s32.totalorder %s22, 0
      %p54 = por %p52, %p53
      %p55 = scmp.ne.s32.totalorder %s44, %s47
      %p56 = scmp.eq.s32.totalorder %s27, 1
      %p57 = por %p55, %p56
      %p58 = scmp.ne.s32.totalorder %s47, %s48
      %p59 = scmp.eq.s32.totalorder %s27, 0
      %p60 = por %p58, %p59
      %p61 = scmp.ne.s32.totalorder %s47, %s48
      %p62 = scmp.eq.s32.totalorder %s28, 1
      %p63 = por %p61, %p62
      %p65 = scmp.ne.s32.totalorder %s48, %s64
      %p66 = scmp.eq.s32.totalorder %s28, 0
      %p67 = por %p65, %p66
      %s69 = sadd.s32 %s68, 1
      %p72 = scmp.eq.s32.totalorder %s22, 1
      %p73 = scmp.ne.s32.totalorder %s68, %s70
      %p74 = scmp.eq.s32.totalorder %s22, 0
      %p75 = por %p73, %p74
      %p76 = scmp.ne.s32.totalorder %s68, %s70
      %p77 = scmp.eq.s32.totalorder %s27, 1
      %p78 = por %p76, %p77
      %p79 = scmp.ne.s32.totalorder %s70, %s71
      %p80 = scmp.eq.s32.totalorder %s27, 0
      %p81 = por %p79, %p80
      %p82 = scmp.ne.s32.totalorder %s70, %s71
      %p83 = scmp.eq.s32.totalorder %s28, 1
      %p84 = por %p82, %p83
      %p86 = scmp.ne.s32.totalorder %s71, %s85
      %p87 = scmp.eq.s32.totalorder %s28, 0
      %p88 = por %p86, %p87
      %s90 = sadd.s32 %s89, 1
      %p93 = scmp.eq.s32.totalorder %s22, 1
      %p94 = scmp.ne.s32.totalorder %s89, %s91
      %p95 = scmp.eq.s32.totalorder %s22, 0
      %p96 = por %p94, %p95
      %p97 = scmp.ne.s32.totalorder %s89, %s91
      %p98 = scmp.eq.s32.totalorder %s27, 1
      %p99 = por %p97, %p98
      %p100 = scmp.ne.s32.totalorder %s91, %s92
      %p101 = scmp.eq.s32.totalorder %s27, 0
      %p102 = por %p100, %p101
      %p103 = scmp.ne.s32.totalorder %s91, %s92
      %p104 = scmp.eq.s32.totalorder %s28, 1
      %p105 = por %p103, %p104
      %p107 = scmp.ne.s32.totalorder %s92, %s106
      %p108 = scmp.eq.s32.totalorder %s28, 0
      %p109 = por %p107, %p108
      %s111 = sadd.s32 %s110, 1
      %p114 = scmp.eq.s32.totalorder %s22, 1
      %p115 = scmp.ne.s32.totalorder %s110, %s112
      %p116 = scmp.eq.s32.totalorder %s22, 0
      %p117 = por %p115, %p116
      %p118 = scmp.ne.s32.totalorder %s110, %s112
      %p119 = scmp.eq.s32.totalorder %s27, 1
      %p120 = por %p118, %p119
      %p121 = scmp.ne.s32.totalorder %s112, %s113
      %p122 = scmp.eq.s32.totalorder %s27, 0
      %p123 = por %p121, %p122
      %p124 = scmp.ne.s32.totalorder %s112, %s113
      %p125 = scmp.eq.s32.totalorder %s28, 1
      %p126 = por %p124, %p125
      %p128 = scmp.ne.s32.totalorder %s113, %s127
      %p129 = scmp.eq.s32.totalorder %s28, 0
      %p130 = por %p128, %p129
      %s131 = ssub.s32 %s29, %s41
      %s132 = ssub.s32 %s30, %s37
      %s133 = sor.u32 %s131, %s132
      %p134 = scmp.eq.s32.totalorder %s133, 0
      %s136 = sadd.s32 %s135, 1
      %s137 = scalar_select %p134, %s135, %s136
      %p140 = pneg %p134
      %p141 = scmp.eq.s32.totalorder %s22, 1
      %p142 = por %p140, %p141
      %p143 = scmp.ne.s32.totalorder %s135, %s138
      %p144 = scmp.eq.s32.totalorder %s22, 0
      %p145 = por %p143, %p144
      %p146 = scmp.ne.s32.totalorder %s135, %s138
      %p147 = scmp.eq.s32.totalorder %s27, 1
      %p148 = por %p146, %p147
      %p149 = scmp.ne.s32.totalorder %s138, %s139
      %p150 = scmp.eq.s32.totalorder %s27, 0
      %p151 = por %p149, %p150
      %p152 = scmp.ne.s32.totalorder %s138, %s139
      %p153 = scmp.eq.s32.totalorder %s28, 1
      %p154 = por %p152, %p153
      %p156 = scmp.ne.s32.totalorder %s139, %s155
      %p157 = scmp.eq.s32.totalorder %s28, 0
      %p158 = por %p156, %p157
      %s159 = ssub.s32 %s29, %s41
      %p160 = scmp.eq.s32.totalorder %s159, 0
      %s162 = sadd.s32 %s161, 1
      %s163 = scalar_select %p160, %s161, %s162
      %p166 = pneg %p160
      %p167 = scmp.eq.s32.totalorder %s22, 1
      %p168 = por %p166, %p167
      %p169 = scmp.ne.s32.totalorder %s161, %s164
      %p170 = scmp.eq.s32.totalorder %s22, 0
      %p171 = por %p169, %p170
      %p172 = scmp.ne.s32.totalorder %s161, %s164
      %p173 = scmp.eq.s32.totalorder %s27, 1
      %p174 = por %p172, %p173
      %p175 = scmp.ne.s32.totalorder %s164, %s165
      %p176 = scmp.eq.s32.totalorder %s27, 0
      %p177 = por %p175, %p176
      %p178 = scmp.ne.s32.totalorder %s164, %s165
      %p179 = scmp.eq.s32.totalorder %s28, 1
      %p180 = por %p178, %p179
      %p182 = scmp.ne.s32.totalorder %s165, %s181
      %p183 = scmp.eq.s32.totalorder %s28, 0
      %p184 = por %p182, %p183
      %p185 = scmp.le.s32.totalorder 1, %s22
      %p186 = scmp.lt.s32.totalorder %s22, 3
      %p187 = pnand %p185, %p186
      %p188 = pneg %p187
      // Predicated region
      $region9: #{tpu_custom_call.1} parent=5 // pred_check
        _
      $region10: #{tpu_custom_call.1} parent=5 // pred_check_branch
        %190 = sbr.rel (%p187) target = $region12
      $region11: #{tpu_custom_call.1} parent=5 // pred_region
        %s191 = ssub.s32 %s22, 1
        // Predicated region
        $region13: #{tpu_custom_call.1} parent=11 // pred_check
          %p192 = pneg %p81
        $region14: #{tpu_custom_call.1} parent=11 // pred_check_branch
          %194 = sbr.rel (%p192) target = $region16
        $region15: #{tpu_custom_call.1} parent=11 // pred_region
          %s196 = ssub.s32 9216, 9216
          %197 = vsyncadd [#allocation7], %s196
          %s198 = sshll.u32 [#allocation6], 4
          %s199 = int_to_ptr.vmem [resolvable:$true] %s198
          %204 = dma.hbm_to_vmem [thread:$0]  %s1, 9216, %s199, [#allocation7], 64, 64, 4
        $region16: #{tpu_custom_call.1} parent=11 // pred_fallthru
          _
        // Predicated region
        $region17: #{tpu_custom_call.1} parent=11 // pred_check
          %p205 = pneg %p102
        $region18: #{tpu_custom_call.1} parent=11 // pred_check_branch
          %207 = sbr.rel (%p205) target = $region20
        $region19: #{tpu_custom_call.1} parent=11 // pred_region
          _
        $region20: #{tpu_custom_call.1} parent=11 // pred_fallthru
          _
        // Predicated region
        $region21: #{tpu_custom_call.1} parent=11 // pred_check
          %p208 = pneg %p123
        $region22: #{tpu_custom_call.1} parent=11 // pred_check_branch
          %210 = sbr.rel (%p208) target = $region24
        $region23: #{tpu_custom_call.1} parent=11 // pred_region
          _
        $region24: #{tpu_custom_call.1} parent=11 // pred_fallthru
          _
      $region12: #{tpu_custom_call.1} parent=5 // pred_fallthru
        _
      %p211 = scmp.lt.s32.totalorder %s22, 2
      // Predicated region
      $region25: #{tpu_custom_call.1} parent=5 // pred_check
        %p212 = pneg %p211
      $region26: #{tpu_custom_call.1} parent=5 // pred_check_branch
        %214 = sbr.rel (%p212) target = $region28
      $region27: #{tpu_custom_call.1} parent=5 // pred_region
        // Predicated region
        $region29: #{tpu_custom_call.1} parent=27 // pred_check
          %p215 = pneg %p54
        $region30: #{tpu_custom_call.1} parent=27 // pred_check_branch
          %217 = sbr.rel (%p215) target = $region32
        $region31: #{tpu_custom_call.1} parent=27 // pred_region
          %s218 = sand.u32 %s44, 1
          %s219 = scalar_lea.sflag [#allocation4], %s218
          %s220 = sand.u32 %s44, 1
          %s221 = smul.addr %s220, 256
          %s222 = scalar_lea.vmem [#allocation3], %s221
          %s224 = ssub.s32 4096, 4096
          %225 = vsyncadd %s219, %s224
          %s226 = smul.addr %s29, 32
          %s227 = smul.addr %s226, 128
          %s228 = scalar_lea.hbm %s0, %s227
          %s229 = sshll.u32 %s222, 4
          %s230 = int_to_ptr.vmem [resolvable:$true] %s229
          %235 = dma.hbm_to_vmem [thread:$0]  %s228, 4096, %s230, %s219, 128, 128, 8
        $region32: #{tpu_custom_call.1} parent=27 // pred_fallthru
          _
      $region28: #{tpu_custom_call.1} parent=5 // pred_fallthru
        _
      %p236 = scmp.le.s32.totalorder 1, %s22
      %p237 = scmp.lt.s32.totalorder %s22, 3
      %p238 = pnand %p236, %p237
      %p239 = pneg %p238
      // Predicated region
      $region33: #{tpu_custom_call.1} parent=5 // pred_check
        _
      $region34: #{tpu_custom_call.1} parent=5 // pred_check_branch
        %241 = sbr.rel (%p238) target = $region36
      $region35: #{tpu_custom_call.1} parent=5 // pred_region
        %s242 = ssub.s32 %s22, 1
        %s243 = sand.u32 %s47, 1
        %s244 = scalar_lea.sflag [#allocation4], %s243
        %s245 = sand.u32 %s47, 1
        %s246 = smul.addr %s245, 256
        %s247 = scalar_lea.vmem [#allocation3], %s246
        // Predicated region
        $region37: #{tpu_custom_call.1} parent=35 // pred_check
          %p248 = pneg %p60
        $region38: #{tpu_custom_call.1} parent=35 // pred_check_branch
          %250 = sbr.rel (%p248) target = $region40
        $region39: #{tpu_custom_call.1} parent=35 // pred_region
          %251 = dma.done %s244, 4096
        $region40: #{tpu_custom_call.1} parent=35 // pred_fallthru
          _
        // Predicated region
        $region41: #{tpu_custom_call.1} parent=35 // pred_check
          %p252 = pneg %p81
        $region42: #{tpu_custom_call.1} parent=35 // pred_check_branch
          %254 = sbr.rel (%p252) target = $region44
        $region43: #{tpu_custom_call.1} parent=35 // pred_region
          %255 = dma.done [#allocation7], 9216
        $region44: #{tpu_custom_call.1} parent=35 // pred_fallthru
          _
        %s256 = sand.u32 %s47, 1
        %s257 = scalar_lea.sflag [#allocation4], %s256
        %s258 = sand.u32 %s47, 1
        %s259 = smul.addr %s258, 256
        %s260 = scalar_lea.vmem [#allocation3], %s259
        %p261 = pneg %p60
        %p262 = pneg %p57
        %p263 = pneg %p81
        %p264 = pneg %p78
        %p265 = pneg %p102
        %p266 = pneg %p99
        %p267 = pneg %p123
        %p268 = pneg %p120
        %p269 = pneg %p151
        %p270 = pneg %p148
        %s271 = sand.u32 %s138, 1
        %s272 = scalar_lea.sflag [#allocation5], %s271
        %s273 = sand.u32 %s138, 1
        %s274 = smul.addr %s273, 256
        %s275 = scalar_lea.vmem [#allocation8], %s274
        %p276 = pneg %p177
        %p277 = pneg %p174
        %s278 = sand.u32 %s164, 1
        %s279 = scalar_lea.sflag [#allocation10], %s278
        %s280 = sand.u32 %s164, 1
        %s281 = smul.addr %s280, 8
        %s282 = scalar_lea.vmem [#allocation9], %s281
        %s283 = smul.u32 16, %s32
        %p285 = scmp.eq.s32.totalorder %s32, 0
        // Predicated region
        $region45: #{tpu_custom_call.1} parent=35 // pred_check
          %p286 = pneg %p285
        $region46: #{tpu_custom_call.1} parent=35 // pred_check_branch
          %288 = sbr.rel (%p286) target = $region48
        $region47: #{tpu_custom_call.1} parent=35 // pred_region
          %289 = vst [vmem:[%s282] sm:$0xff] 0.0
          %290 = vst [vmem:[#allocation2] sm:$0xff] 0.0
          %291 = vst [vmem:[#allocation2 + $0x8] sm:$0xff] 0.0
          %292 = vst [vmem:[#allocation2 + $0x10] sm:$0x3] 0.0
          %293 = vst [vmem:[#allocation2 + $0x18] sm:$0xff] 0.0
          %294 = vst [vmem:[#allocation2 + $0x20] sm:$0xff] 0.0
          %295 = vst [vmem:[#allocation2 + $0x28] sm:$0x3] 0.0
          %296 = vst [vmem:[#allocation2 + $0x30] sm:$0xff] 0.0
          %297 = vst [vmem:[#allocation2 + $0x38] sm:$0xff] 0.0
          %298 = vst [vmem:[#allocation2 + $0x40] sm:$0x3] 0.0
          %299 = vst [vmem:[#allocation2 + $0x48] sm:$0xff] 0.0
          %300 = vst [vmem:[#allocation2 + $0x50] sm:$0xff] 0.0
          %301 = vst [vmem:[#allocation2 + $0x58] sm:$0x3] 0.0
          %302 = vst [vmem:[#allocation2 + $0x60] sm:$0xff] 0.0
          %303 = vst [vmem:[#allocation2 + $0x68] sm:$0xff] 0.0
          %304 = vst [vmem:[#allocation2 + $0x70] sm:$0x3] 0.0
          %305 = vst [vmem:[#allocation2 + $0x78] sm:$0xff] 0.0
          %306 = vst [vmem:[#allocation2 + $0x80] sm:$0xff] 0.0
          %307 = vst [vmem:[#allocation2 + $0x88] sm:$0x3] 0.0
          %308 = vst [vmem:[#allocation2 + $0x90] sm:$0xff] 0.0
          %309 = vst [vmem:[#allocation2 + $0x98] sm:$0xff] 0.0
          %310 = vst [vmem:[#allocation2 + $0xa0] sm:$0x3] 0.0
          %311 = vst [vmem:[#allocation2 + $0xa8] sm:$0xff] 0.0
          %312 = vst [vmem:[#allocation2 + $0xb0] sm:$0xff] 0.0
          %313 = vst [vmem:[#allocation2 + $0xb8] sm:$0x3] 0.0
          %314 = vst [vmem:[#allocation2 + $0xc0] sm:$0xff] 0.0
          %315 = vst [vmem:[#allocation2 + $0xc8] sm:$0xff] 0.0
          %316 = vst [vmem:[#allocation2 + $0xd0] sm:$0x3] 0.0
          %317 = vst [vmem:[#allocation2 + $0xd8] sm:$0xff] 0.0
          %318 = vst [vmem:[#allocation2 + $0xe0] sm:$0xff] 0.0
          %319 = vst [vmem:[#allocation2 + $0xe8] sm:$0x3] 0.0
          %320 = vst [vmem:[#allocation2 + $0xf0] sm:$0xff] 0.0
          %321 = vst [vmem:[#allocation2 + $0xf8] sm:$0xff] 0.0
          %322 = vst [vmem:[#allocation2 + $0x100] sm:$0x3] 0.0
          %323 = vst [vmem:[#allocation2 + $0x108] sm:$0xff] 0.0
          %324 = vst [vmem:[#allocation2 + $0x110] sm:$0xff] 0.0
          %325 = vst [vmem:[#allocation2 + $0x118] sm:$0x3] 0.0
          %326 = vst [vmem:[#allocation2 + $0x120] sm:$0xff] 0.0
          %327 = vst [vmem:[#allocation2 + $0x128] sm:$0xff] 0.0
          %328 = vst [vmem:[#allocation2 + $0x130] sm:$0x3] 0.0
          %329 = vst [vmem:[#allocation2 + $0x138] sm:$0xff] 0.0
          %330 = vst [vmem:[#allocation2 + $0x140] sm:$0xff] 0.0
          %331 = vst [vmem:[#allocation2 + $0x148] sm:$0x3] 0.0
          %332 = vst [vmem:[#allocation2 + $0x150] sm:$0xff] 0.0
          %333 = vst [vmem:[#allocation2 + $0x158] sm:$0xff] 0.0
          %334 = vst [vmem:[#allocation2 + $0x160] sm:$0x3] 0.0
          %335 = vst [vmem:[#allocation2 + $0x168] sm:$0xff] 0.0
          %336 = vst [vmem:[#allocation2 + $0x170] sm:$0xff] 0.0
          %337 = vst [vmem:[#allocation2 + $0x178] sm:$0x3] 0.0
          %338 = vst [vmem:[#allocation2 + $0x180] sm:$0xff] 0.0
          %339 = vst [vmem:[#allocation2 + $0x188] sm:$0xff] 0.0
          %340 = vst [vmem:[#allocation2 + $0x190] sm:$0x3] 0.0
          %341 = vst [vmem:[#allocation2 + $0x198] sm:$0xff] 0.0
          %342 = vst [vmem:[#allocation2 + $0x1a0] sm:$0xff] 0.0
          %343 = vst [vmem:[#allocation2 + $0x1a8] sm:$0x3] 0.0
          %v344 = vld [vmem:[%s247] sm:$0xff]
          %v345 = vld [vmem:[%s247 + $0x8] sm:$0xff]
          %v346 = vld [vmem:[%s247 + $0x10] sm:$0xff]
          %v347 = vld [vmem:[%s247 + $0x18] sm:$0xff]
          %v348 = vld [vmem:[%s247 + $0x20] sm:$0xff]
          %v349 = vld [vmem:[%s247 + $0x28] sm:$0xff]
          %v350 = vld [vmem:[%s247 + $0x30] sm:$0xff]
          %v351 = vld [vmem:[%s247 + $0x38] sm:$0xff]
          %v352 = vld [vmem:[%s247 + $0x40] sm:$0xff]
          %v353 = vld [vmem:[%s247 + $0x48] sm:$0xff]
          %v354 = vld [vmem:[%s247 + $0x50] sm:$0xff]
          %v355 = vld [vmem:[%s247 + $0x58] sm:$0xff]
          %v356 = vld [vmem:[%s247 + $0x60] sm:$0xff]
          %v357 = vld [vmem:[%s247 + $0x68] sm:$0xff]
          %v358 = vld [vmem:[%s247 + $0x70] sm:$0xff]
          %v359 = vld [vmem:[%s247 + $0x78] sm:$0xff]
          %v360 = vld [vmem:[%s247 + $0x80] sm:$0xff]
          %v361 = vld [vmem:[%s247 + $0x88] sm:$0xff]
          %v362 = vld [vmem:[%s247 + $0x90] sm:$0xff]
          %v363 = vld [vmem:[%s247 + $0x98] sm:$0xff]
          %v364 = vld [vmem:[%s247 + $0xa0] sm:$0xff]
          %v365 = vld [vmem:[%s247 + $0xa8] sm:$0xff]
          %v366 = vld [vmem:[%s247 + $0xb0] sm:$0xff]
          %v367 = vld [vmem:[%s247 + $0xb8] sm:$0xff]
          %v368 = vld [vmem:[%s247 + $0xc0] sm:$0xff]
          %v369 = vld [vmem:[%s247 + $0xc8] sm:$0xff]
          %v370 = vld [vmem:[%s247 + $0xd0] sm:$0xff]
          %v371 = vld [vmem:[%s247 + $0xd8] sm:$0xff]
          %v372 = vld [vmem:[%s247 + $0xe0] sm:$0xff]
          %v373 = vld [vmem:[%s247 + $0xe8] sm:$0xff]
          %v374 = vld [vmem:[%s247 + $0xf0] sm:$0xff]
          %v375 = vld [vmem:[%s247 + $0xf8] sm:$0xff]
          %s376 = scalar_lea.vmem [#allocation2], 24
          %377 = vst [vmem:[%s376 + $0x1] sm:$0xff] %v344
          %378 = vst [vmem:[%s376 + $0x9] sm:$0xff] %v345
          %379 = vst [vmem:[%s376 + $0x19] sm:$0xff] %v346
          %380 = vst [vmem:[%s376 + $0x21] sm:$0xff] %v347
          %381 = vst [vmem:[%s376 + $0x31] sm:$0xff] %v348
          %382 = vst [vmem:[%s376 + $0x39] sm:$0xff] %v349
          %383 = vst [vmem:[%s376 + $0x49] sm:$0xff] %v350
          %384 = vst [vmem:[%s376 + $0x51] sm:$0xff] %v351
          %385 = vst [vmem:[%s376 + $0x61] sm:$0xff] %v352
          %386 = vst [vmem:[%s376 + $0x69] sm:$0xff] %v353
          %387 = vst [vmem:[%s376 + $0x79] sm:$0xff] %v354
          %388 = vst [vmem:[%s376 + $0x81] sm:$0xff] %v355
          %389 = vst [vmem:[%s376 + $0x91] sm:$0xff] %v356
          %390 = vst [vmem:[%s376 + $0x99] sm:$0xff] %v357
          %391 = vst [vmem:[%s376 + $0xa9] sm:$0xff] %v358
          %392 = vst [vmem:[%s376 + $0xb1] sm:$0xff] %v359
          %393 = vst [vmem:[%s376 + $0xc1] sm:$0xff] %v360
          %394 = vst [vmem:[%s376 + $0xc9] sm:$0xff] %v361
          %395 = vst [vmem:[%s376 + $0xd9] sm:$0xff] %v362
          %396 = vst [vmem:[%s376 + $0xe1] sm:$0xff] %v363
          %397 = vst [vmem:[%s376 + $0xf1] sm:$0xff] %v364
          %398 = vst [vmem:[%s376 + $0xf9] sm:$0xff] %v365
          %399 = vst [vmem:[%s376 + $0x109] sm:$0xff] %v366
          %400 = vst [vmem:[%s376 + $0x111] sm:$0xff] %v367
          %401 = vst [vmem:[%s376 + $0x121] sm:$0xff] %v368
          %402 = vst [vmem:[%s376 + $0x129] sm:$0xff] %v369
          %403 = vst [vmem:[%s376 + $0x139] sm:$0xff] %v370
          %404 = vst [vmem:[%s376 + $0x141] sm:$0xff] %v371
          %405 = vst [vmem:[%s376 + $0x151] sm:$0xff] %v372
          %406 = vst [vmem:[%s376 + $0x159] sm:$0xff] %v373
          %407 = vst [vmem:[%s376 + $0x169] sm:$0xff] %v374
          %408 = vst [vmem:[%s376 + $0x171] sm:$0xff] %v375
        $region48: #{tpu_custom_call.1} parent=35 // pred_fallthru
          _
        %s409 = smul.u32 %s32, 16
        %s410 = smul.u32 %s409, 24
        %s411 = scalar_lea.vmem [#allocation2], %s410
        %v412 = vld [vmem:[%s411] sm:$0xff]
        %v413 = vld [vmem:[%s411 + $0x8] sm:$0xff]
        %v414 = vld [vmem:[%s411 + $0x18] sm:$0xff]
        %v415 = vld [vmem:[%s411 + $0x20] sm:$0xff]
        %v416 = vld [vmem:[%s411 + $0x30] sm:$0xff]
        %v417 = vld [vmem:[%s411 + $0x38] sm:$0xff]
        %v418 = vld [vmem:[%s411 + $0x48] sm:$0xff]
        %v419 = vld [vmem:[%s411 + $0x50] sm:$0xff]
        %v420 = vld [vmem:[%s411 + $0x60] sm:$0xff]
        %v421 = vld [vmem:[%s411 + $0x68] sm:$0xff]
        %v422 = vld [vmem:[%s411 + $0x78] sm:$0xff]
        %v423 = vld [vmem:[%s411 + $0x80] sm:$0xff]
        %v424 = vld [vmem:[%s411 + $0x90] sm:$0xff]
        %v425 = vld [vmem:[%s411 + $0x98] sm:$0xff]
        %v426 = vld [vmem:[%s411 + $0xa8] sm:$0xff]
        %v427 = vld [vmem:[%s411 + $0xb0] sm:$0xff]
        %v428 = vld [vmem:[%s411 + $0xc0] sm:$0xff]
        %v429 = vld [vmem:[%s411 + $0xc8] sm:$0xff]
        %v430 = vld [vmem:[%s411 + $0xd8] sm:$0xff]
        %v431 = vld [vmem:[%s411 + $0xe0] sm:$0xff]
        %v432 = vld [vmem:[%s411 + $0xf0] sm:$0xff]
        %v433 = vld [vmem:[%s411 + $0xf8] sm:$0xff]
        %v434 = vld [vmem:[%s411 + $0x108] sm:$0xff]
        %v435 = vld [vmem:[%s411 + $0x110] sm:$0xff]
        %v436 = vld [vmem:[%s411 + $0x120] sm:$0xff]
        %v437 = vld [vmem:[%s411 + $0x128] sm:$0xff]
        %v438 = vld [vmem:[%s411 + $0x138] sm:$0xff]
        %v439 = vld [vmem:[%s411 + $0x140] sm:$0xff]
        %v440 = vld [vmem:[%s411 + $0x150] sm:$0xff]
        %v441 = vld [vmem:[%s411 + $0x158] sm:$0xff]
        %v442 = vld [vmem:[%s411 + $0x168] sm:$0xff]
        %v443 = vld [vmem:[%s411 + $0x170] sm:$0xff]
        %v444 = vpack.c.bf16 %v413, %v412
        %v445 = vpack.c.bf16 %v415, %v414
        %v446 = vpack.c.bf16 %v417, %v416
        %v447 = vpack.c.bf16 %v419, %v418
        %v448 = vpack.c.bf16 %v421, %v420
        %v449 = vpack.c.bf16 %v423, %v422
        %v450 = vpack.c.bf16 %v425, %v424
        %v451 = vpack.c.bf16 %v427, %v426
        %v452 = vpack.c.bf16 %v429, %v428
        %v453 = vpack.c.bf16 %v431, %v430
        %v454 = vpack.c.bf16 %v433, %v432
        %v455 = vpack.c.bf16 %v435, %v434
        %v456 = vpack.c.bf16 %v437, %v436
        %v457 = vpack.c.bf16 %v439, %v438
        %v458 = vpack.c.bf16 %v441, %v440
        %v459 = vpack.c.bf16 %v443, %v442
        %v460 = vld [vmem:[#allocation6] sm:$0xf]
        %v461 = vld [vmem:[#allocation6 + $0x4] sm:$0xf]
        %v462 = vld [vmem:[#allocation6 + $0x8] sm:$0xf]
        %v463 = vld [vmem:[#allocation6 + $0xc] sm:$0xf]
        %v464 = vld [vmem:[#allocation6 + $0x10] sm:$0xf]
        %v465 = vld [vmem:[#allocation6 + $0x14] sm:$0xf]
        %v466 = vld [vmem:[#allocation6 + $0x18] sm:$0xf]
        %v467 = vld [vmem:[#allocation6 + $0x1c] sm:$0xf]
        %v468 = vld [vmem:[#allocation6 + $0x20] sm:$0xf]
        %v469 = vld [vmem:[#allocation6 + $0x24] sm:$0xf]
        %v470 = vld [vmem:[#allocation6 + $0x28] sm:$0xf]
        %v471 = vld [vmem:[#allocation6 + $0x2c] sm:$0xf]
        %v472 = vld [vmem:[#allocation6 + $0x30] sm:$0xf]
        %v473 = vld [vmem:[#allocation6 + $0x34] sm:$0xf]
        %v474 = vld [vmem:[#allocation6 + $0x38] sm:$0xf]
        %v475 = vld [vmem:[#allocation6 + $0x3c] sm:$0xf]
        %v476 = vld [vmem:[%s411 + $0x1] sm:$0xff]
        %v477 = vld [vmem:[%s411 + $0x9] sm:$0xff]
        %v478 = vld [vmem:[%s411 + $0x19] sm:$0xff]
        %v479 = vld [vmem:[%s411 + $0x21] sm:$0xff]
        %v480 = vld [vmem:[%s411 + $0x31] sm:$0xff]
        %v481 = vld [vmem:[%s411 + $0x39] sm:$0xff]
        %v482 = vld [vmem:[%s411 + $0x49] sm:$0xff]
        %v483 = vld [vmem:[%s411 + $0x51] sm:$0xff]
        %v484 = vld [vmem:[%s411 + $0x61] sm:$0xff]
        %v485 = vld [vmem:[%s411 + $0x69] sm:$0xff]
        %v486 = vld [vmem:[%s411 + $0x79] sm:$0xff]
        %v487 = vld [vmem:[%s411 + $0x81] sm:$0xff]
        %v488 = vld [vmem:[%s411 + $0x91] sm:$0xff]
        %v489 = vld [vmem:[%s411 + $0x99] sm:$0xff]
        %v490 = vld [vmem:[%s411 + $0xa9] sm:$0xff]
        %v491 = vld [vmem:[%s411 + $0xb1] sm:$0xff]
        %v492 = vld [vmem:[%s411 + $0xc1] sm:$0xff]
        %v493 = vld [vmem:[%s411 + $0xc9] sm:$0xff]
        %v494 = vld [vmem:[%s411 + $0xd9] sm:$0xff]
        %v495 = vld [vmem:[%s411 + $0xe1] sm:$0xff]
        %v496 = vld [vmem:[%s411 + $0xf1] sm:$0xff]
        %v497 = vld [vmem:[%s411 + $0xf9] sm:$0xff]
        %v498 = vld [vmem:[%s411 + $0x109] sm:$0xff]
        %v499 = vld [vmem:[%s411 + $0x111] sm:$0xff]
        %v500 = vld [vmem:[%s411 + $0x121] sm:$0xff]
        %v501 = vld [vmem:[%s411 + $0x129] sm:$0xff]
        %v502 = vld [vmem:[%s411 + $0x139] sm:$0xff]
        %v503 = vld [vmem:[%s411 + $0x141] sm:$0xff]
        %v504 = vld [vmem:[%s411 + $0x151] sm:$0xff]
        %v505 = vld [vmem:[%s411 + $0x159] sm:$0xff]
        %v506 = vld [vmem:[%s411 + $0x169] sm:$0xff]
        %v507 = vld [vmem:[%s411 + $0x171] sm:$0xff]
        %v508 = vpack.c.bf16 %v477, %v476
        %v509 = vpack.c.bf16 %v479, %v478
        %v510 = vpack.c.bf16 %v481, %v480
        %v511 = vpack.c.bf16 %v483, %v482
        %v512 = vpack.c.bf16 %v485, %v484
        %v513 = vpack.c.bf16 %v487, %v486
        %v514 = vpack.c.bf16 %v489, %v488
        %v515 = vpack.c.bf16 %v491, %v490
        %v516 = vpack.c.bf16 %v493, %v492
        %v517 = vpack.c.bf16 %v495, %v494
        %v518 = vpack.c.bf16 %v497, %v496
        %v519 = vpack.c.bf16 %v499, %v498
        %v520 = vpack.c.bf16 %v501, %v500
        %v521 = vpack.c.bf16 %v503, %v502
        %v522 = vpack.c.bf16 %v505, %v504
        %v523 = vpack.c.bf16 %v507, %v506
        %s524 = scalar_lea.vmem [#allocation6], 64
        %v525 = vld [vmem:[%s524] sm:$0xf]
        %v526 = vld [vmem:[%s524 + $0x4] sm:$0xf]
        %v527 = vld [vmem:[%s524 + $0x8] sm:$0xf]
        %v528 = vld [vmem:[%s524 + $0xc] sm:$0xf]
        %v529 = vld [vmem:[%s524 + $0x10] sm:$0xf]
        %v530 = vld [vmem:[%s524 + $0x14] sm:$0xf]
        %v531 = vld [vmem:[%s524 + $0x18] sm:$0xf]
        %v532 = vld [vmem:[%s524 + $0x1c] sm:$0xf]
        %v533 = vld [vmem:[%s524 + $0x20] sm:$0xf]
        %v534 = vld [vmem:[%s524 + $0x24] sm:$0xf]
        %v535 = vld [vmem:[%s524 + $0x28] sm:$0xf]
        %v536 = vld [vmem:[%s524 + $0x2c] sm:$0xf]
        %v537 = vld [vmem:[%s524 + $0x30] sm:$0xf]
        %v538 = vld [vmem:[%s524 + $0x34] sm:$0xf]
        %v539 = vld [vmem:[%s524 + $0x38] sm:$0xf]
        %v540 = vld [vmem:[%s524 + $0x3c] sm:$0xf]
        %v557 = vunpack.c.l.b16 %v525
        %v558 = vunpack.c.l.b16 %v526
        %v559 = vunpack.c.l.b16 %v527
        %v560 = vunpack.c.l.b16 %v528
        %v561 = vunpack.c.l.b16 %v529
        %v562 = vunpack.c.l.b16 %v530
        %v563 = vunpack.c.l.b16 %v531
        %v564 = vunpack.c.l.b16 %v532
        %v565 = vunpack.c.l.b16 %v533
        %v566 = vunpack.c.l.b16 %v534
        %v567 = vunpack.c.l.b16 %v535
        %v568 = vunpack.c.l.b16 %v536
        %v569 = vunpack.c.l.b16 %v537
        %v570 = vunpack.c.l.b16 %v538
        %v571 = vunpack.c.l.b16 %v539
        %v572 = vunpack.c.l.b16 %v540
        %v573 = vpack.c.b16 %v558, %v557
        %v574 = vpack.c.b16 %v560, %v559
        %v575 = vpack.c.b16 %v562, %v561
        %v576 = vpack.c.b16 %v564, %v563
        %v577 = vpack.c.b16 %v566, %v565
        %v578 = vpack.c.b16 %v568, %v567
        %v579 = vpack.c.b16 %v570, %v569
        %v580 = vpack.c.b16 %v572, %v571
        %589 = vmatprep.subr.bf16.mxu0 0
        %590 = vmatpush1.bf16.msra.mxu0 %v580
        %591 = vmatprep.subr.bf16.mxu0 0
        %592 = vmatpush1.bf16.msra.mxu0 %v579
        %593 = vmatprep.subr.bf16.mxu0 0
        %594 = vmatpush1.bf16.msra.mxu0 %v578
        %595 = vmatprep.subr.bf16.mxu0 0
        %596 = vmatpush1.bf16.msra.mxu0 %v577
        %597 = vmatprep.subr.bf16.mxu0 0
        %598 = vmatpush1.bf16.msra.mxu0 %v576
        %599 = vmatprep.subr.bf16.mxu0 0
        %600 = vmatpush1.bf16.msra.mxu0 %v575
        %601 = vmatprep.subr.bf16.mxu0 0
        %602 = vmatpush1.bf16.msra.mxu0 %v574
        %603 = vmatprep.subr.bf16.mxu0 0
        %604 = vmatpush1.bf16.msra.mxu0 %v573
        %605 = vmatprep.subr.bf16.mxu0 0
        %606 = vmatpush2.bf16.msra.mxu0 0
        %607 = vmatprep.subr.bf16.mxu0 0
        %608 = vmatpush2.bf16.msra.mxu0 0
        %609 = vmatprep.subr.bf16.mxu0 0
        %610 = vmatpush2.bf16.msra.mxu0 0
        %611 = vmatprep.subr.bf16.mxu0 0
        %612 = vmatpush2.bf16.msra.mxu0 0
        %613 = vmatprep.subr.bf16.mxu0 0
        %614 = vmatpush2.bf16.msra.mxu0 0
        %615 = vmatprep.subr.bf16.mxu0 0
        %616 = vmatpush2.bf16.msra.mxu0 0
        %617 = vmatprep.subr.bf16.mxu0 0
        %618 = vmatpush2.bf16.msra.mxu0 0
        %619 = vmatprep.subr.bf16.mxu0 0
        %620 = vmatpush2.bf16.msra.mxu0 0
        %621 = vmatprep.mubr.bf16.mxu0 0
        %622 = vmatmul.mubr.bf16.gmra.mxu0 %v508
        %v623 = vpop.f32.mrf.mxu0
        %v624 = vadd.f32 0.0, %v623
        %v625 = vpop.f32.mrf.mxu0
        %v626 = vpop.f32.mrf.mxu0
        %v627 = vadd.f32 0.0, %v626
        %v628 = vpop.f32.mrf.mxu0
        %629 = vmatprep.mubr.bf16.mxu0 0
        %630 = vmatmul.mubr.bf16.gmra.mxu0 %v509
        %v631 = vpop.f32.mrf.mxu0
        %v632 = vadd.f32 0.0, %v631
        %v633 = vpop.f32.mrf.mxu0
        %v634 = vpop.f32.mrf.mxu0
        %v635 = vadd.f32 0.0, %v634
        %v636 = vpop.f32.mrf.mxu0
        %637 = vmatprep.mubr.bf16.mxu0 0
        %638 = vmatmul.mubr.bf16.gmra.mxu0 %v510
        %v639 = vpop.f32.mrf.mxu0
        %v640 = vadd.f32 0.0, %v639
        %v641 = vpop.f32.mrf.mxu0
        %v642 = vpop.f32.mrf.mxu0
        %v643 = vadd.f32 0.0, %v642
        %v644 = vpop.f32.mrf.mxu0
        %645 = vmatprep.mubr.bf16.mxu0 0
        %646 = vmatmul.mubr.bf16.gmra.mxu0 %v511
        %v647 = vpop.f32.mrf.mxu0
        %v648 = vadd.f32 0.0, %v647
        %v649 = vpop.f32.mrf.mxu0
        %v650 = vpop.f32.mrf.mxu0
        %v651 = vadd.f32 0.0, %v650
        %v652 = vpop.f32.mrf.mxu0
        %653 = vmatprep.mubr.bf16.mxu0 0
        %654 = vmatmul.mubr.bf16.gmra.mxu0 %v512
        %v655 = vpop.f32.mrf.mxu0
        %v656 = vadd.f32 0.0, %v655
        %v657 = vpop.f32.mrf.mxu0
        %v658 = vpop.f32.mrf.mxu0
        %v659 = vadd.f32 0.0, %v658
        %v660 = vpop.f32.mrf.mxu0
        %661 = vmatprep.mubr.bf16.mxu0 0
        %662 = vmatmul.mubr.bf16.gmra.mxu0 %v513
        %v663 = vpop.f32.mrf.mxu0
        %v664 = vadd.f32 0.0, %v663
        %v665 = vpop.f32.mrf.mxu0
        %v666 = vpop.f32.mrf.mxu0
        %v667 = vadd.f32 0.0, %v666
        %v668 = vpop.f32.mrf.mxu0
        %669 = vmatprep.mubr.bf16.mxu0 0
        %670 = vmatmul.mubr.bf16.gmra.mxu0 %v514
        %v671 = vpop.f32.mrf.mxu0
        %v672 = vadd.f32 0.0, %v671
        %v673 = vpop.f32.mrf.mxu0
        %v674 = vpop.f32.mrf.mxu0
        %v675 = vadd.f32 0.0, %v674
        %v676 = vpop.f32.mrf.mxu0
        %677 = vmatprep.mubr.bf16.mxu0 0
        %678 = vmatmul.mubr.bf16.gmra.mxu0 %v515
        %v679 = vpop.f32.mrf.mxu0
        %v680 = vadd.f32 0.0, %v679
        %v681 = vpop.f32.mrf.mxu0
        %v682 = vpop.f32.mrf.mxu0
        %v683 = vadd.f32 0.0, %v682
        %v684 = vpop.f32.mrf.mxu0
        %685 = vmatprep.mubr.bf16.mxu0 0
        %686 = vmatmul.mubr.bf16.gmra.mxu0 %v516
        %v687 = vpop.f32.mrf.mxu0
        %v688 = vadd.f32 0.0, %v687
        %v689 = vpop.f32.mrf.mxu0
        %v690 = vpop.f32.mrf.mxu0
        %v691 = vadd.f32 0.0, %v690
        %v692 = vpop.f32.mrf.mxu0
        %693 = vmatprep.mubr.bf16.mxu0 0
        %694 = vmatmul.mubr.bf16.gmra.mxu0 %v517
        %v695 = vpop.f32.mrf.mxu0
        %v696 = vadd.f32 0.0, %v695
        %v697 = vpop.f32.mrf.mxu0
        %v698 = vpop.f32.mrf.mxu0
        %v699 = vadd.f32 0.0, %v698
        %v700 = vpop.f32.mrf.mxu0
        %701 = vmatprep.mubr.bf16.mxu0 0
        %702 = vmatmul.mubr.bf16.gmra.mxu0 %v518
        %v703 = vpop.f32.mrf.mxu0
        %v704 = vadd.f32 0.0, %v703
        %v705 = vpop.f32.mrf.mxu0
        %v706 = vpop.f32.mrf.mxu0
        %v707 = vadd.f32 0.0, %v706
        %v708 = vpop.f32.mrf.mxu0
        %709 = vmatprep.mubr.bf16.mxu0 0
        %710 = vmatmul.mubr.bf16.gmra.mxu0 %v519
        %v711 = vpop.f32.mrf.mxu0
        %v712 = vadd.f32 0.0, %v711
        %v713 = vpop.f32.mrf.mxu0
        %v714 = vpop.f32.mrf.mxu0
        %v715 = vadd.f32 0.0, %v714
        %v716 = vpop.f32.mrf.mxu0
        %717 = vmatprep.mubr.bf16.mxu0 0
        %718 = vmatmul.mubr.bf16.gmra.mxu0 %v520
        %v719 = vpop.f32.mrf.mxu0
        %v720 = vadd.f32 0.0, %v719
        %v721 = vpop.f32.mrf.mxu0
        %v722 = vpop.f32.mrf.mxu0
        %v723 = vadd.f32 0.0, %v722
        %v724 = vpop.f32.mrf.mxu0
        %725 = vmatprep.mubr.bf16.mxu0 0
        %726 = vmatmul.mubr.bf16.gmra.mxu0 %v521
        %v727 = vpop.f32.mrf.mxu0
        %v728 = vadd.f32 0.0, %v727
        %v729 = vpop.f32.mrf.mxu0
        %v730 = vpop.f32.mrf.mxu0
        %v731 = vadd.f32 0.0, %v730
        %v732 = vpop.f32.mrf.mxu0
        %733 = vmatprep.mubr.bf16.mxu0 0
        %734 = vmatmul.mubr.bf16.gmra.mxu0 %v522
        %v735 = vpop.f32.mrf.mxu0
        %v736 = vadd.f32 0.0, %v735
        %v737 = vpop.f32.mrf.mxu0
        %v738 = vpop.f32.mrf.mxu0
        %v739 = vadd.f32 0.0, %v738
        %v740 = vpop.f32.mrf.mxu0
        %741 = vmatprep.mubr.bf16.mxu0 0
        %742 = vmatmul.mubr.bf16.gmra.mxu0 %v523
        %v743 = vpop.f32.mrf.mxu0
        %v744 = vadd.f32 0.0, %v743
        %v745 = vpop.f32.mrf.mxu0
        %v746 = vpop.f32.mrf.mxu0
        %v747 = vadd.f32 0.0, %v746
        %v748 = vpop.f32.mrf.mxu0
        %749 = vdwg.mxu0
        %v766 = vunpack.c.l.b16 %v460
        %v767 = vunpack.c.l.b16 %v461
        %v768 = vunpack.c.l.b16 %v462
        %v769 = vunpack.c.l.b16 %v463
        %v770 = vunpack.c.l.b16 %v464
        %v771 = vunpack.c.l.b16 %v465
        %v772 = vunpack.c.l.b16 %v466
        %v773 = vunpack.c.l.b16 %v467
        %v774 = vunpack.c.l.b16 %v468
        %v775 = vunpack.c.l.b16 %v469
        %v776 = vunpack.c.l.b16 %v470
        %v777 = vunpack.c.l.b16 %v471
        %v778 = vunpack.c.l.b16 %v472
        %v779 = vunpack.c.l.b16 %v473
        %v780 = vunpack.c.l.b16 %v474
        %v781 = vunpack.c.l.b16 %v475
        %v782 = vpack.c.b16 %v767, %v766
        %v783 = vpack.c.b16 %v769, %v768
        %v784 = vpack.c.b16 %v771, %v770
        %v785 = vpack.c.b16 %v773, %v772
        %v786 = vpack.c.b16 %v775, %v774
        %v787 = vpack.c.b16 %v777, %v776
        %v788 = vpack.c.b16 %v779, %v778
        %v789 = vpack.c.b16 %v781, %v780
        %798 = vmatprep.subr.bf16.mxu0 0
        %799 = vmatpush1.bf16.msra.mxu0 %v789
        %800 = vmatprep.subr.bf16.mxu0 0
        %801 = vmatpush1.bf16.msra.mxu0 %v788
        %802 = vmatprep.subr.bf16.mxu0 0
        %803 = vmatpush1.bf16.msra.mxu0 %v787
        %804 = vmatprep.subr.bf16.mxu0 0
        %805 = vmatpush1.bf16.msra.mxu0 %v786
        %806 = vmatprep.subr.bf16.mxu0 0
        %807 = vmatpush1.bf16.msra.mxu0 %v785
        %808 = vmatprep.subr.bf16.mxu0 0
        %809 = vmatpush1.bf16.msra.mxu0 %v784
        %810 = vmatprep.subr.bf16.mxu0 0
        %811 = vmatpush1.bf16.msra.mxu0 %v783
        %812 = vmatprep.subr.bf16.mxu0 0
        %813 = vmatpush1.bf16.msra.mxu0 %v782
        %814 = vmatprep.subr.bf16.mxu0 0
        %815 = vmatpush2.bf16.msra.mxu0 0
        %816 = vmatprep.subr.bf16.mxu0 0
        %817 = vmatpush2.bf16.msra.mxu0 0
        %818 = vmatprep.subr.bf16.mxu0 0
        %819 = vmatpush2.bf16.msra.mxu0 0
        %820 = vmatprep.subr.bf16.mxu0 0
        %821 = vmatpush2.bf16.msra.mxu0 0
        %822 = vmatprep.subr.bf16.mxu0 0
        %823 = vmatpush2.bf16.msra.mxu0 0
        %824 = vmatprep.subr.bf16.mxu0 0
        %825 = vmatpush2.bf16.msra.mxu0 0
        %826 = vmatprep.subr.bf16.mxu0 0
        %827 = vmatpush2.bf16.msra.mxu0 0
        %828 = vmatprep.subr.bf16.mxu0 0
        %829 = vmatpush2.bf16.msra.mxu0 0
        %830 = vmatprep.mubr.bf16.mxu0 0
        %831 = vmatmul.mubr.bf16.gmra.mxu0 %v444
        %v832 = vpop.f32.mrf.mxu0
        %v833 = vadd.f32 %v624, %v832
        %v834 = vpop.f32.mrf.mxu0
        %v835 = vpop.f32.mrf.mxu0
        %v836 = vadd.f32 %v627, %v835
        %v837 = vpop.f32.mrf.mxu0
        %838 = vmatprep.mubr.bf16.mxu0 0
        %839 = vmatmul.mubr.bf16.gmra.mxu0 %v445
        %v840 = vpop.f32.mrf.mxu0
        %v841 = vadd.f32 %v632, %v840
        %v842 = vpop.f32.mrf.mxu0
        %v843 = vpop.f32.mrf.mxu0
        %v844 = vadd.f32 %v635, %v843
        %v845 = vpop.f32.mrf.mxu0
        %846 = vmatprep.mubr.bf16.mxu0 0
        %847 = vmatmul.mubr.bf16.gmra.mxu0 %v446
        %v848 = vpop.f32.mrf.mxu0
        %v849 = vadd.f32 %v640, %v848
        %v850 = vpop.f32.mrf.mxu0
        %v851 = vpop.f32.mrf.mxu0
        %v852 = vadd.f32 %v643, %v851
        %v853 = vpop.f32.mrf.mxu0
        %854 = vmatprep.mubr.bf16.mxu0 0
        %855 = vmatmul.mubr.bf16.gmra.mxu0 %v447
        %v856 = vpop.f32.mrf.mxu0
        %v857 = vadd.f32 %v648, %v856
        %v858 = vpop.f32.mrf.mxu0
        %v859 = vpop.f32.mrf.mxu0
        %v860 = vadd.f32 %v651, %v859
        %v861 = vpop.f32.mrf.mxu0
        %862 = vmatprep.mubr.bf16.mxu0 0
        %863 = vmatmul.mubr.bf16.gmra.mxu0 %v448
        %v864 = vpop.f32.mrf.mxu0
        %v865 = vadd.f32 %v656, %v864
        %v866 = vpop.f32.mrf.mxu0
        %v867 = vpop.f32.mrf.mxu0
        %v868 = vadd.f32 %v659, %v867
        %v869 = vpop.f32.mrf.mxu0
        %870 = vmatprep.mubr.bf16.mxu0 0
        %871 = vmatmul.mubr.bf16.gmra.mxu0 %v449
        %v872 = vpop.f32.mrf.mxu0
        %v873 = vadd.f32 %v664, %v872
        %v874 = vpop.f32.mrf.mxu0
        %v875 = vpop.f32.mrf.mxu0
        %v876 = vadd.f32 %v667, %v875
        %v877 = vpop.f32.mrf.mxu0
        %878 = vmatprep.mubr.bf16.mxu0 0
        %879 = vmatmul.mubr.bf16.gmra.mxu0 %v450
        %v880 = vpop.f32.mrf.mxu0
        %v881 = vadd.f32 %v672, %v880
        %v882 = vpop.f32.mrf.mxu0
        %v883 = vpop.f32.mrf.mxu0
        %v884 = vadd.f32 %v675, %v883
        %v885 = vpop.f32.mrf.mxu0
        %886 = vmatprep.mubr.bf16.mxu0 0
        %887 = vmatmul.mubr.bf16.gmra.mxu0 %v451
        %v888 = vpop.f32.mrf.mxu0
        %v889 = vadd.f32 %v680, %v888
        %v890 = vpop.f32.mrf.mxu0
        %v891 = vpop.f32.mrf.mxu0
        %v892 = vadd.f32 %v683, %v891
        %v893 = vpop.f32.mrf.mxu0
        %894 = vmatprep.mubr.bf16.mxu0 0
        %895 = vmatmul.mubr.bf16.gmra.mxu0 %v452
        %v896 = vpop.f32.mrf.mxu0
        %v897 = vadd.f32 %v688, %v896
        %v898 = vpop.f32.mrf.mxu0
        %v899 = vpop.f32.mrf.mxu0
        %v900 = vadd.f32 %v691, %v899
        %v901 = vpop.f32.mrf.mxu0
        %902 = vmatprep.mubr.bf16.mxu0 0
        %903 = vmatmul.mubr.bf16.gmra.mxu0 %v453
        %v904 = vpop.f32.mrf.mxu0
        %v905 = vadd.f32 %v696, %v904
        %v906 = vpop.f32.mrf.mxu0
        %v907 = vpop.f32.mrf.mxu0
        %v908 = vadd.f32 %v699, %v907
        %v909 = vpop.f32.mrf.mxu0
        %910 = vmatprep.mubr.bf16.mxu0 0
        %911 = vmatmul.mubr.bf16.gmra.mxu0 %v454
        %v912 = vpop.f32.mrf.mxu0
        %v913 = vadd.f32 %v704, %v912
        %v914 = vpop.f32.mrf.mxu0
        %v915 = vpop.f32.mrf.mxu0
        %v916 = vadd.f32 %v707, %v915
        %v917 = vpop.f32.mrf.mxu0
        %918 = vmatprep.mubr.bf16.mxu0 0
        %919 = vmatmul.mubr.bf16.gmra.mxu0 %v455
        %v920 = vpop.f32.mrf.mxu0
        %v921 = vadd.f32 %v712, %v920
        %v922 = vpop.f32.mrf.mxu0
        %v923 = vpop.f32.mrf.mxu0
        %v924 = vadd.f32 %v715, %v923
        %v925 = vpop.f32.mrf.mxu0
        %926 = vmatprep.mubr.bf16.mxu0 0
        %927 = vmatmul.mubr.bf16.gmra.mxu0 %v456
        %v928 = vpop.f32.mrf.mxu0
        %v929 = vadd.f32 %v720, %v928
        %v930 = vpop.f32.mrf.mxu0
        %v931 = vpop.f32.mrf.mxu0
        %v932 = vadd.f32 %v723, %v931
        %v933 = vpop.f32.mrf.mxu0
        %934 = vmatprep.mubr.bf16.mxu0 0
        %935 = vmatmul.mubr.bf16.gmra.mxu0 %v457
        %v936 = vpop.f32.mrf.mxu0
        %v937 = vadd.f32 %v728, %v936
        %v938 = vpop.f32.mrf.mxu0
        %v939 = vpop.f32.mrf.mxu0
        %v940 = vadd.f32 %v731, %v939
        %v941 = vpop.f32.mrf.mxu0
        %942 = vmatprep.mubr.bf16.mxu0 0
        %943 = vmatmul.mubr.bf16.gmra.mxu0 %v458
        %v944 = vpop.f32.mrf.mxu0
        %v945 = vadd.f32 %v736, %v944
        %v946 = vpop.f32.mrf.mxu0
        %v947 = vpop.f32.mrf.mxu0
        %v948 = vadd.f32 %v739, %v947
        %v949 = vpop.f32.mrf.mxu0
        %950 = vmatprep.mubr.bf16.mxu0 0
        %951 = vmatmul.mubr.bf16.gmra.mxu0 %v459
        %v952 = vpop.f32.mrf.mxu0
        %v953 = vadd.f32 %v744, %v952
        %v954 = vpop.f32.mrf.mxu0
        %v955 = vpop.f32.mrf.mxu0
        %v956 = vadd.f32 %v747, %v955
        %v957 = vpop.f32.mrf.mxu0
        %958 = vdwg.mxu0
        %v959 = vld [vmem:[%s411 + $0x2] sm:$0xff]
        %v960 = vld [vmem:[%s411 + $0xa] sm:$0xff]
        %v961 = vld [vmem:[%s411 + $0x1a] sm:$0xff]
        %v962 = vld [vmem:[%s411 + $0x22] sm:$0xff]
        %v963 = vld [vmem:[%s411 + $0x32] sm:$0xff]
        %v964 = vld [vmem:[%s411 + $0x3a] sm:$0xff]
        %v965 = vld [vmem:[%s411 + $0x4a] sm:$0xff]
        %v966 = vld [vmem:[%s411 + $0x52] sm:$0xff]
        %v967 = vld [vmem:[%s411 + $0x62] sm:$0xff]
        %v968 = vld [vmem:[%s411 + $0x6a] sm:$0xff]
        %v969 = vld [vmem:[%s411 + $0x7a] sm:$0xff]
        %v970 = vld [vmem:[%s411 + $0x82] sm:$0xff]
        %v971 = vld [vmem:[%s411 + $0x92] sm:$0xff]
        %v972 = vld [vmem:[%s411 + $0x9a] sm:$0xff]
        %v973 = vld [vmem:[%s411 + $0xaa] sm:$0xff]
        %v974 = vld [vmem:[%s411 + $0xb2] sm:$0xff]
        %v975 = vld [vmem:[%s411 + $0xc2] sm:$0xff]
        %v976 = vld [vmem:[%s411 + $0xca] sm:$0xff]
        %v977 = vld [vmem:[%s411 + $0xda] sm:$0xff]
        %v978 = vld [vmem:[%s411 + $0xe2] sm:$0xff]
        %v979 = vld [vmem:[%s411 + $0xf2] sm:$0xff]
        %v980 = vld [vmem:[%s411 + $0xfa] sm:$0xff]
        %v981 = vld [vmem:[%s411 + $0x10a] sm:$0xff]
        %v982 = vld [vmem:[%s411 + $0x112] sm:$0xff]
        %v983 = vld [vmem:[%s411 + $0x122] sm:$0xff]
        %v984 = vld [vmem:[%s411 + $0x12a] sm:$0xff]
        %v985 = vld [vmem:[%s411 + $0x13a] sm:$0xff]
        %v986 = vld [vmem:[%s411 + $0x142] sm:$0xff]
        %v987 = vld [vmem:[%s411 + $0x152] sm:$0xff]
        %v988 = vld [vmem:[%s411 + $0x15a] sm:$0xff]
        %v989 = vld [vmem:[%s411 + $0x16a] sm:$0xff]
        %v990 = vld [vmem:[%s411 + $0x172] sm:$0xff]
        %v991 = vpack.c.bf16 %v960, %v959
        %v992 = vpack.c.bf16 %v962, %v961
        %v993 = vpack.c.bf16 %v964, %v963
        %v994 = vpack.c.bf16 %v966, %v965
        %v995 = vpack.c.bf16 %v968, %v967
        %v996 = vpack.c.bf16 %v970, %v969
        %v997 = vpack.c.bf16 %v972, %v971
        %v998 = vpack.c.bf16 %v974, %v973
        %v999 = vpack.c.bf16 %v976, %v975
        %v1000 = vpack.c.bf16 %v978, %v977
        %v1001 = vpack.c.bf16 %v980, %v979
        %v1002 = vpack.c.bf16 %v982, %v981
        %v1003 = vpack.c.bf16 %v984, %v983
        %v1004 = vpack.c.bf16 %v986, %v985
        %v1005 = vpack.c.bf16 %v988, %v987
        %v1006 = vpack.c.bf16 %v990, %v989
        %s1007 = scalar_lea.vmem [#allocation6], 128
        %v1008 = vld [vmem:[%s1007] sm:$0xf]
        %v1009 = vld [vmem:[%s1007 + $0x4] sm:$0xf]
        %v1010 = vld [vmem:[%s1007 + $0x8] sm:$0xf]
        %v1011 = vld [vmem:[%s1007 + $0xc] sm:$0xf]
        %v1012 = vld [vmem:[%s1007 + $0x10] sm:$0xf]
        %v1013 = vld [vmem:[%s1007 + $0x14] sm:$0xf]
        %v1014 = vld [vmem:[%s1007 + $0x18] sm:$0xf]
        %v1015 = vld [vmem:[%s1007 + $0x1c] sm:$0xf]
        %v1016 = vld [vmem:[%s1007 + $0x20] sm:$0xf]
        %v1017 = vld [vmem:[%s1007 + $0x24] sm:$0xf]
        %v1018 = vld [vmem:[%s1007 + $0x28] sm:$0xf]
        %v1019 = vld [vmem:[%s1007 + $0x2c] sm:$0xf]
        %v1020 = vld [vmem:[%s1007 + $0x30] sm:$0xf]
        %v1021 = vld [vmem:[%s1007 + $0x34] sm:$0xf]
        %v1022 = vld [vmem:[%s1007 + $0x38] sm:$0xf]
        %v1023 = vld [vmem:[%s1007 + $0x3c] sm:$0xf]
        %v1040 = vunpack.c.l.b16 %v1008
        %v1041 = vunpack.c.l.b16 %v1009
        %v1042 = vunpack.c.l.b16 %v1010
        %v1043 = vunpack.c.l.b16 %v1011
        %v1044 = vunpack.c.l.b16 %v1012
        %v1045 = vunpack.c.l.b16 %v1013
        %v1046 = vunpack.c.l.b16 %v1014
        %v1047 = vunpack.c.l.b16 %v1015
        %v1048 = vunpack.c.l.b16 %v1016
        %v1049 = vunpack.c.l.b16 %v1017
        %v1050 = vunpack.c.l.b16 %v1018
        %v1051 = vunpack.c.l.b16 %v1019
        %v1052 = vunpack.c.l.b16 %v1020
        %v1053 = vunpack.c.l.b16 %v1021
        %v1054 = vunpack.c.l.b16 %v1022
        %v1055 = vunpack.c.l.b16 %v1023
        %v1056 = vpack.c.b16 %v1041, %v1040
        %v1057 = vpack.c.b16 %v1043, %v1042
        %v1058 = vpack.c.b16 %v1045, %v1044
        %v1059 = vpack.c.b16 %v1047, %v1046
        %v1060 = vpack.c.b16 %v1049, %v1048
        %v1061 = vpack.c.b16 %v1051, %v1050
        %v1062 = vpack.c.b16 %v1053, %v1052
        %v1063 = vpack.c.b16 %v1055, %v1054
        %1072 = vmatprep.subr.bf16.mxu0 0
        %1073 = vmatpush1.bf16.msra.mxu0 %v1063
        %1074 = vmatprep.subr.bf16.mxu0 0
        %1075 = vmatpush1.bf16.msra.mxu0 %v1062
        %1076 = vmatprep.subr.bf16.mxu0 0
        %1077 = vmatpush1.bf16.msra.mxu0 %v1061
        %1078 = vmatprep.subr.bf16.mxu0 0
        %1079 = vmatpush1.bf16.msra.mxu0 %v1060
        %1080 = vmatprep.subr.bf16.mxu0 0
        %1081 = vmatpush1.bf16.msra.mxu0 %v1059
        %1082 = vmatprep.subr.bf16.mxu0 0
        %1083 = vmatpush1.bf16.msra.mxu0 %v1058
        %1084 = vmatprep.subr.bf16.mxu0 0
        %1085 = vmatpush1.bf16.msra.mxu0 %v1057
        %1086 = vmatprep.subr.bf16.mxu0 0
        %1087 = vmatpush1.bf16.msra.mxu0 %v1056
        %1088 = vmatprep.subr.bf16.mxu0 0
        %1089 = vmatpush2.bf16.msra.mxu0 0
        %1090 = vmatprep.subr.bf16.mxu0 0
        %1091 = vmatpush2.bf16.msra.mxu0 0
        %1092 = vmatprep.subr.bf16.mxu0 0
        %1093 = vmatpush2.bf16.msra.mxu0 0
        %1094 = vmatprep.subr.bf16.mxu0 0
        %1095 = vmatpush2.bf16.msra.mxu0 0
        %1096 = vmatprep.subr.bf16.mxu0 0
        %1097 = vmatpush2.bf16.msra.mxu0 0
        %1098 = vmatprep.subr.bf16.mxu0 0
        %1099 = vmatpush2.bf16.msra.mxu0 0
        %1100 = vmatprep.subr.bf16.mxu0 0
        %1101 = vmatpush2.bf16.msra.mxu0 0
        %1102 = vmatprep.subr.bf16.mxu0 0
        %1103 = vmatpush2.bf16.msra.mxu0 0
        %1104 = vmatprep.mubr.bf16.mxu0 0
        %1105 = vmatmul.mubr.bf16.gmra.mxu0 %v991
        %v1106 = vpop.f32.mrf.mxu0
        %v1107 = vadd.f32 0.0, %v1106
        %v1108 = vpop.f32.mrf.mxu0
        %v1109 = vpop.f32.mrf.mxu0
        %v1110 = vadd.f32 0.0, %v1109
        %v1111 = vpop.f32.mrf.mxu0
        %1112 = vmatprep.mubr.bf16.mxu0 0
        %1113 = vmatmul.mubr.bf16.gmra.mxu0 %v992
        %v1114 = vpop.f32.mrf.mxu0
        %v1115 = vadd.f32 0.0, %v1114
        %v1116 = vpop.f32.mrf.mxu0
        %v1117 = vpop.f32.mrf.mxu0
        %v1118 = vadd.f32 0.0, %v1117
        %v1119 = vpop.f32.mrf.mxu0
        %1120 = vmatprep.mubr.bf16.mxu0 0
        %1121 = vmatmul.mubr.bf16.gmra.mxu0 %v993
        %v1122 = vpop.f32.mrf.mxu0
        %v1123 = vadd.f32 0.0, %v1122
        %v1124 = vpop.f32.mrf.mxu0
        %v1125 = vpop.f32.mrf.mxu0
        %v1126 = vadd.f32 0.0, %v1125
        %v1127 = vpop.f32.mrf.mxu0
        %1128 = vmatprep.mubr.bf16.mxu0 0
        %1129 = vmatmul.mubr.bf16.gmra.mxu0 %v994
        %v1130 = vpop.f32.mrf.mxu0
        %v1131 = vadd.f32 0.0, %v1130
        %v1132 = vpop.f32.mrf.mxu0
        %v1133 = vpop.f32.mrf.mxu0
        %v1134 = vadd.f32 0.0, %v1133
        %v1135 = vpop.f32.mrf.mxu0
        %1136 = vmatprep.mubr.bf16.mxu0 0
        %1137 = vmatmul.mubr.bf16.gmra.mxu0 %v995
        %v1138 = vpop.f32.mrf.mxu0
        %v1139 = vadd.f32 0.0, %v1138
        %v1140 = vpop.f32.mrf.mxu0
        %v1141 = vpop.f32.mrf.mxu0
        %v1142 = vadd.f32 0.0, %v1141
        %v1143 = vpop.f32.mrf.mxu0
        %1144 = vmatprep.mubr.bf16.mxu0 0
        %1145 = vmatmul.mubr.bf16.gmra.mxu0 %v996
        %v1146 = vpop.f32.mrf.mxu0
        %v1147 = vadd.f32 0.0, %v1146
        %v1148 = vpop.f32.mrf.mxu0
        %v1149 = vpop.f32.mrf.mxu0
        %v1150 = vadd.f32 0.0, %v1149
        %v1151 = vpop.f32.mrf.mxu0
        %1152 = vmatprep.mubr.bf16.mxu0 0
        %1153 = vmatmul.mubr.bf16.gmra.mxu0 %v997
        %v1154 = vpop.f32.mrf.mxu0
        %v1155 = vadd.f32 0.0, %v1154
        %v1156 = vpop.f32.mrf.mxu0
        %v1157 = vpop.f32.mrf.mxu0
        %v1158 = vadd.f32 0.0, %v1157
        %v1159 = vpop.f32.mrf.mxu0
        %1160 = vmatprep.mubr.bf16.mxu0 0
        %1161 = vmatmul.mubr.bf16.gmra.mxu0 %v998
        %v1162 = vpop.f32.mrf.mxu0
        %v1163 = vadd.f32 0.0, %v1162
        %v1164 = vpop.f32.mrf.mxu0
        %v1165 = vpop.f32.mrf.mxu0
        %v1166 = vadd.f32 0.0, %v1165
        %v1167 = vpop.f32.mrf.mxu0
        %1168 = vmatprep.mubr.bf16.mxu0 0
        %1169 = vmatmul.mubr.bf16.gmra.mxu0 %v999
        %v1170 = vpop.f32.mrf.mxu0
        %v1171 = vadd.f32 0.0, %v1170
        %v1172 = vpop.f32.mrf.mxu0
        %v1173 = vpop.f32.mrf.mxu0
        %v1174 = vadd.f32 0.0, %v1173
        %v1175 = vpop.f32.mrf.mxu0
        %1176 = vmatprep.mubr.bf16.mxu0 0
        %1177 = vmatmul.mubr.bf16.gmra.mxu0 %v1000
        %v1178 = vpop.f32.mrf.mxu0
        %v1179 = vadd.f32 0.0, %v1178
        %v1180 = vpop.f32.mrf.mxu0
        %v1181 = vpop.f32.mrf.mxu0
        %v1182 = vadd.f32 0.0, %v1181
        %v1183 = vpop.f32.mrf.mxu0
        %1184 = vmatprep.mubr.bf16.mxu0 0
        %1185 = vmatmul.mubr.bf16.gmra.mxu0 %v1001
        %v1186 = vpop.f32.mrf.mxu0
        %v1187 = vadd.f32 0.0, %v1186
        %v1188 = vpop.f32.mrf.mxu0
        %v1189 = vpop.f32.mrf.mxu0
        %v1190 = vadd.f32 0.0, %v1189
        %v1191 = vpop.f32.mrf.mxu0
        %1192 = vmatprep.mubr.bf16.mxu0 0
        %1193 = vmatmul.mubr.bf16.gmra.mxu0 %v1002
        %v1194 = vpop.f32.mrf.mxu0
        %v1195 = vadd.f32 0.0, %v1194
        %v1196 = vpop.f32.mrf.mxu0
        %v1197 = vpop.f32.mrf.mxu0
        %v1198 = vadd.f32 0.0, %v1197
        %v1199 = vpop.f32.mrf.mxu0
        %1200 = vmatprep.mubr.bf16.mxu0 0
        %1201 = vmatmul.mubr.bf16.gmra.mxu0 %v1003
        %v1202 = vpop.f32.mrf.mxu0
        %v1203 = vadd.f32 0.0, %v1202
        %v1204 = vpop.f32.mrf.mxu0
        %v1205 = vpop.f32.mrf.mxu0
        %v1206 = vadd.f32 0.0, %v1205
        %v1207 = vpop.f32.mrf.mxu0
        %1208 = vmatprep.mubr.bf16.mxu0 0
        %1209 = vmatmul.mubr.bf16.gmra.mxu0 %v1004
        %v1210 = vpop.f32.mrf.mxu0
        %v1211 = vadd.f32 0.0, %v1210
        %v1212 = vpop.f32.mrf.mxu0
        %v1213 = vpop.f32.mrf.mxu0
        %v1214 = vadd.f32 0.0, %v1213
        %v1215 = vpop.f32.mrf.mxu0
        %1216 = vmatprep.mubr.bf16.mxu0 0
        %1217 = vmatmul.mubr.bf16.gmra.mxu0 %v1005
        %v1218 = vpop.f32.mrf.mxu0
        %v1219 = vadd.f32 0.0, %v1218
        %v1220 = vpop.f32.mrf.mxu0
        %v1221 = vpop.f32.mrf.mxu0
        %v1222 = vadd.f32 0.0, %v1221
        %v1223 = vpop.f32.mrf.mxu0
        %1224 = vmatprep.mubr.bf16.mxu0 0
        %1225 = vmatmul.mubr.bf16.gmra.mxu0 %v1006
        %v1226 = vpop.f32.mrf.mxu0
        %v1227 = vadd.f32 0.0, %v1226
        %v1228 = vpop.f32.mrf.mxu0
        %v1229 = vpop.f32.mrf.mxu0
        %v1230 = vadd.f32 0.0, %v1229
        %v1231 = vpop.f32.mrf.mxu0
        %1232 = vdwg.mxu0
        %v1233 = vadd.f32 %v833, %v1107
        %v1234 = vadd.f32 %v836, %v1110
        %v1235 = vadd.f32 %v841, %v1115
        %v1236 = vadd.f32 %v844, %v1118
        %v1237 = vadd.f32 %v849, %v1123
        %v1238 = vadd.f32 %v852, %v1126
        %v1239 = vadd.f32 %v857, %v1131
        %v1240 = vadd.f32 %v860, %v1134
        %v1241 = vadd.f32 %v865, %v1139
        %v1242 = vadd.f32 %v868, %v1142
        %v1243 = vadd.f32 %v873, %v1147
        %v1244 = vadd.f32 %v876, %v1150
        %v1245 = vadd.f32 %v881, %v1155
        %v1246 = vadd.f32 %v884, %v1158
        %v1247 = vadd.f32 %v889, %v1163
        %v1248 = vadd.f32 %v892, %v1166
        %v1249 = vadd.f32 %v897, %v1171
        %v1250 = vadd.f32 %v900, %v1174
        %v1251 = vadd.f32 %v905, %v1179
        %v1252 = vadd.f32 %v908, %v1182
        %v1253 = vadd.f32 %v913, %v1187
        %v1254 = vadd.f32 %v916, %v1190
        %v1255 = vadd.f32 %v921, %v1195
        %v1256 = vadd.f32 %v924, %v1198
        %v1257 = vadd.f32 %v929, %v1203
        %v1258 = vadd.f32 %v932, %v1206
        %v1259 = vadd.f32 %v937, %v1211
        %v1260 = vadd.f32 %v940, %v1214
        %v1261 = vadd.f32 %v945, %v1219
        %v1262 = vadd.f32 %v948, %v1222
        %v1263 = vadd.f32 %v953, %v1227
        %v1264 = vadd.f32 %v956, %v1230
        %s1265 = sadd.s32 %s409, 1
        %s1266 = smul.u32 %s1265, 24
        %s1267 = scalar_lea.vmem [#allocation2], %s1266
        %v1268 = vld [vmem:[%s1267] sm:$0xff]
        %v1269 = vld [vmem:[%s1267 + $0x8] sm:$0xff]
        %v1270 = vld [vmem:[%s1267 + $0x18] sm:$0xff]
        %v1271 = vld [vmem:[%s1267 + $0x20] sm:$0xff]
        %v1272 = vld [vmem:[%s1267 + $0x30] sm:$0xff]
        %v1273 = vld [vmem:[%s1267 + $0x38] sm:$0xff]
        %v1274 = vld [vmem:[%s1267 + $0x48] sm:$0xff]
        %v1275 = vld [vmem:[%s1267 + $0x50] sm:$0xff]
        %v1276 = vld [vmem:[%s1267 + $0x60] sm:$0xff]
        %v1277 = vld [vmem:[%s1267 + $0x68] sm:$0xff]
        %v1278 = vld [vmem:[%s1267 + $0x78] sm:$0xff]
        %v1279 = vld [vmem:[%s1267 + $0x80] sm:$0xff]
        %v1280 = vld [vmem:[%s1267 + $0x90] sm:$0xff]
        %v1281 = vld [vmem:[%s1267 + $0x98] sm:$0xff]
        %v1282 = vld [vmem:[%s1267 + $0xa8] sm:$0xff]
        %v1283 = vld [vmem:[%s1267 + $0xb0] sm:$0xff]
        %v1284 = vld [vmem:[%s1267 + $0xc0] sm:$0xff]
        %v1285 = vld [vmem:[%s1267 + $0xc8] sm:$0xff]
        %v1286 = vld [vmem:[%s1267 + $0xd8] sm:$0xff]
        %v1287 = vld [vmem:[%s1267 + $0xe0] sm:$0xff]
        %v1288 = vld [vmem:[%s1267 + $0xf0] sm:$0xff]
        %v1289 = vld [vmem:[%s1267 + $0xf8] sm:$0xff]
        %v1290 = vld [vmem:[%s1267 + $0x108] sm:$0xff]
        %v1291 = vld [vmem:[%s1267 + $0x110] sm:$0xff]
        %v1292 = vld [vmem:[%s1267 + $0x120] sm:$0xff]
        %v1293 = vld [vmem:[%s1267 + $0x128] sm:$0xff]
        %v1294 = vld [vmem:[%s1267 + $0x138] sm:$0xff]
        %v1295 = vld [vmem:[%s1267 + $0x140] sm:$0xff]
        %v1296 = vld [vmem:[%s1267 + $0x150] sm:$0xff]
        %v1297 = vld [vmem:[%s1267 + $0x158] sm:$0xff]
        %v1298 = vld [vmem:[%s1267 + $0x168] sm:$0xff]
        %v1299 = vld [vmem:[%s1267 + $0x170] sm:$0xff]
        %v1300 = vpack.c.bf16 %v1269, %v1268
        %v1301 = vpack.c.bf16 %v1271, %v1270
        %v1302 = vpack.c.bf16 %v1273, %v1272
        %v1303 = vpack.c.bf16 %v1275, %v1274
        %v1304 = vpack.c.bf16 %v1277, %v1276
        %v1305 = vpack.c.bf16 %v1279, %v1278
        %v1306 = vpack.c.bf16 %v1281, %v1280
        %v1307 = vpack.c.bf16 %v1283, %v1282
        %v1308 = vpack.c.bf16 %v1285, %v1284
        %v1309 = vpack.c.bf16 %v1287, %v1286
        %v1310 = vpack.c.bf16 %v1289, %v1288
        %v1311 = vpack.c.bf16 %v1291, %v1290
        %v1312 = vpack.c.bf16 %v1293, %v1292
        %v1313 = vpack.c.bf16 %v1295, %v1294
        %v1314 = vpack.c.bf16 %v1297, %v1296
        %v1315 = vpack.c.bf16 %v1299, %v1298
        %s1316 = scalar_lea.vmem [#allocation6], 192
        %v1317 = vld [vmem:[%s1316] sm:$0xf]
        %v1318 = vld [vmem:[%s1316 + $0x4] sm:$0xf]
        %v1319 = vld [vmem:[%s1316 + $0x8] sm:$0xf]
        %v1320 = vld [vmem:[%s1316 + $0xc] sm:$0xf]
        %v1321 = vld [vmem:[%s1316 + $0x10] sm:$0xf]
        %v1322 = vld [vmem:[%s1316 + $0x14] sm:$0xf]
        %v1323 = vld [vmem:[%s1316 + $0x18] sm:$0xf]
        %v1324 = vld [vmem:[%s1316 + $0x1c] sm:$0xf]
        %v1325 = vld [vmem:[%s1316 + $0x20] sm:$0xf]
        %v1326 = vld [vmem:[%s1316 + $0x24] sm:$0xf]
        %v1327 = vld [vmem:[%s1316 + $0x28] sm:$0xf]
        %v1328 = vld [vmem:[%s1316 + $0x2c] sm:$0xf]
        %v1329 = vld [vmem:[%s1316 + $0x30] sm:$0xf]
        %v1330 = vld [vmem:[%s1316 + $0x34] sm:$0xf]
        %v1331 = vld [vmem:[%s1316 + $0x38] sm:$0xf]
        %v1332 = vld [vmem:[%s1316 + $0x3c] sm:$0xf]
        %v1349 = vunpack.c.l.b16 %v1317
        %v1350 = vunpack.c.l.b16 %v1318
        %v1351 = vunpack.c.l.b16 %v1319
        %v1352 = vunpack.c.l.b16 %v1320
        %v1353 = vunpack.c.l.b16 %v1321
        %v1354 = vunpack.c.l.b16 %v1322
        %v1355 = vunpack.c.l.b16 %v1323
        %v1356 = vunpack.c.l.b16 %v1324
        %v1357 = vunpack.c.l.b16 %v1325
        %v1358 = vunpack.c.l.b16 %v1326
        %v1359 = vunpack.c.l.b16 %v1327
        %v1360 = vunpack.c.l.b16 %v1328
        %v1361 = vunpack.c.l.b16 %v1329
        %v1362 = vunpack.c.l.b16 %v1330
        %v1363 = vunpack.c.l.b16 %v1331
        %v1364 = vunpack.c.l.b16 %v1332
        %v1365 = vpack.c.b16 %v1350, %v1349
        %v1366 = vpack.c.b16 %v1352, %v1351
        %v1367 = vpack.c.b16 %v1354, %v1353
        %v1368 = vpack.c.b16 %v1356, %v1355
        %v1369 = vpack.c.b16 %v1358, %v1357
        %v1370 = vpack.c.b16 %v1360, %v1359
        %v1371 = vpack.c.b16 %v1362, %v1361
        %v1372 = vpack.c.b16 %v1364, %v1363
        %1381 = vmatprep.subr.bf16.mxu0 0
        %1382 = vmatpush1.bf16.msra.mxu0 %v1372
        %1383 = vmatprep.subr.bf16.mxu0 0
        %1384 = vmatpush1.bf16.msra.mxu0 %v1371
        %1385 = vmatprep.subr.bf16.mxu0 0
        %1386 = vmatpush1.bf16.msra.mxu0 %v1370
        %1387 = vmatprep.subr.bf16.mxu0 0
        %1388 = vmatpush1.bf16.msra.mxu0 %v1369
        %1389 = vmatprep.subr.bf16.mxu0 0
        %1390 = vmatpush1.bf16.msra.mxu0 %v1368
        %1391 = vmatprep.subr.bf16.mxu0 0
        %1392 = vmatpush1.bf16.msra.mxu0 %v1367
        %1393 = vmatprep.subr.bf16.mxu0 0
        %1394 = vmatpush1.bf16.msra.mxu0 %v1366
        %1395 = vmatprep.subr.bf16.mxu0 0
        %1396 = vmatpush1.bf16.msra.mxu0 %v1365
        %1397 = vmatprep.subr.bf16.mxu0 0
        %1398 = vmatpush2.bf16.msra.mxu0 0
        %1399 = vmatprep.subr.bf16.mxu0 0
        %1400 = vmatpush2.bf16.msra.mxu0 0
        %1401 = vmatprep.subr.bf16.mxu0 0
        %1402 = vmatpush2.bf16.msra.mxu0 0
        %1403 = vmatprep.subr.bf16.mxu0 0
        %1404 = vmatpush2.bf16.msra.mxu0 0
        %1405 = vmatprep.subr.bf16.mxu0 0
        %1406 = vmatpush2.bf16.msra.mxu0 0
        %1407 = vmatprep.subr.bf16.mxu0 0
        %1408 = vmatpush2.bf16.msra.mxu0 0
        %1409 = vmatprep.subr.bf16.mxu0 0
        %1410 = vmatpush2.bf16.msra.mxu0 0
        %1411 = vmatprep.subr.bf16.mxu0 0
        %1412 = vmatpush2.bf16.msra.mxu0 0
        %1413 = vmatprep.mubr.bf16.mxu0 0
        %1414 = vmatmul.mubr.bf16.gmra.mxu0 %v1300
        %v1415 = vpop.f32.mrf.mxu0
        %v1416 = vadd.f32 0.0, %v1415
        %v1417 = vpop.f32.mrf.mxu0
        %v1418 = vpop.f32.mrf.mxu0
        %v1419 = vadd.f32 0.0, %v1418
        %v1420 = vpop.f32.mrf.mxu0
        %1421 = vmatprep.mubr.bf16.mxu0 0
        %1422 = vmatmul.mubr.bf16.gmra.mxu0 %v1301
        %v1423 = vpop.f32.mrf.mxu0
        %v1424 = vadd.f32 0.0, %v1423
        %v1425 = vpop.f32.mrf.mxu0
        %v1426 = vpop.f32.mrf.mxu0
        %v1427 = vadd.f32 0.0, %v1426
        %v1428 = vpop.f32.mrf.mxu0
        %1429 = vmatprep.mubr.bf16.mxu0 0
        %1430 = vmatmul.mubr.bf16.gmra.mxu0 %v1302
        %v1431 = vpop.f32.mrf.mxu0
        %v1432 = vadd.f32 0.0, %v1431
        %v1433 = vpop.f32.mrf.mxu0
        %v1434 = vpop.f32.mrf.mxu0
        %v1435 = vadd.f32 0.0, %v1434
        %v1436 = vpop.f32.mrf.mxu0
        %1437 = vmatprep.mubr.bf16.mxu0 0
        %1438 = vmatmul.mubr.bf16.gmra.mxu0 %v1303
        %v1439 = vpop.f32.mrf.mxu0
        %v1440 = vadd.f32 0.0, %v1439
        %v1441 = vpop.f32.mrf.mxu0
        %v1442 = vpop.f32.mrf.mxu0
        %v1443 = vadd.f32 0.0, %v1442
        %v1444 = vpop.f32.mrf.mxu0
        %1445 = vmatprep.mubr.bf16.mxu0 0
        %1446 = vmatmul.mubr.bf16.gmra.mxu0 %v1304
        %v1447 = vpop.f32.mrf.mxu0
        %v1448 = vadd.f32 0.0, %v1447
        %v1449 = vpop.f32.mrf.mxu0
        %v1450 = vpop.f32.mrf.mxu0
        %v1451 = vadd.f32 0.0, %v1450
        %v1452 = vpop.f32.mrf.mxu0
        %1453 = vmatprep.mubr.bf16.mxu0 0
        %1454 = vmatmul.mubr.bf16.gmra.mxu0 %v1305
        %v1455 = vpop.f32.mrf.mxu0
        %v1456 = vadd.f32 0.0, %v1455
        %v1457 = vpop.f32.mrf.mxu0
        %v1458 = vpop.f32.mrf.mxu0
        %v1459 = vadd.f32 0.0, %v1458
        %v1460 = vpop.f32.mrf.mxu0
        %1461 = vmatprep.mubr.bf16.mxu0 0
        %1462 = vmatmul.mubr.bf16.gmra.mxu0 %v1306
        %v1463 = vpop.f32.mrf.mxu0
        %v1464 = vadd.f32 0.0, %v1463
        %v1465 = vpop.f32.mrf.mxu0
        %v1466 = vpop.f32.mrf.mxu0
        %v1467 = vadd.f32 0.0, %v1466
        %v1468 = vpop.f32.mrf.mxu0
        %1469 = vmatprep.mubr.bf16.mxu0 0
        %1470 = vmatmul.mubr.bf16.gmra.mxu0 %v1307
        %v1471 = vpop.f32.mrf.mxu0
        %v1472 = vadd.f32 0.0, %v1471
        %v1473 = vpop.f32.mrf.mxu0
        %v1474 = vpop.f32.mrf.mxu0
        %v1475 = vadd.f32 0.0, %v1474
        %v1476 = vpop.f32.mrf.mxu0
        %1477 = vmatprep.mubr.bf16.mxu0 0
        %1478 = vmatmul.mubr.bf16.gmra.mxu0 %v1308
        %v1479 = vpop.f32.mrf.mxu0
        %v1480 = vadd.f32 0.0, %v1479
        %v1481 = vpop.f32.mrf.mxu0
        %v1482 = vpop.f32.mrf.mxu0
        %v1483 = vadd.f32 0.0, %v1482
        %v1484 = vpop.f32.mrf.mxu0
        %1485 = vmatprep.mubr.bf16.mxu0 0
        %1486 = vmatmul.mubr.bf16.gmra.mxu0 %v1309
        %v1487 = vpop.f32.mrf.mxu0
        %v1488 = vadd.f32 0.0, %v1487
        %v1489 = vpop.f32.mrf.mxu0
        %v1490 = vpop.f32.mrf.mxu0
        %v1491 = vadd.f32 0.0, %v1490
        %v1492 = vpop.f32.mrf.mxu0
        %1493 = vmatprep.mubr.bf16.mxu0 0
        %1494 = vmatmul.mubr.bf16.gmra.mxu0 %v1310
        %v1495 = vpop.f32.mrf.mxu0
        %v1496 = vadd.f32 0.0, %v1495
        %v1497 = vpop.f32.mrf.mxu0
        %v1498 = vpop.f32.mrf.mxu0
        %v1499 = vadd.f32 0.0, %v1498
        %v1500 = vpop.f32.mrf.mxu0
        %1501 = vmatprep.mubr.bf16.mxu0 0
        %1502 = vmatmul.mubr.bf16.gmra.mxu0 %v1311
        %v1503 = vpop.f32.mrf.mxu0
        %v1504 = vadd.f32 0.0, %v1503
        %v1505 = vpop.f32.mrf.mxu0
        %v1506 = vpop.f32.mrf.mxu0
        %v1507 = vadd.f32 0.0, %v1506
        %v1508 = vpop.f32.mrf.mxu0
        %1509 = vmatprep.mubr.bf16.mxu0 0
        %1510 = vmatmul.mubr.bf16.gmra.mxu0 %v1312
        %v1511 = vpop.f32.mrf.mxu0
        %v1512 = vadd.f32 0.0, %v1511
        %v1513 = vpop.f32.mrf.mxu0
        %v1514 = vpop.f32.mrf.mxu0
        %v1515 = vadd.f32 0.0, %v1514
        %v1516 = vpop.f32.mrf.mxu0
        %1517 = vmatprep.mubr.bf16.mxu0 0
        %1518 = vmatmul.mubr.bf16.gmra.mxu0 %v1313
        %v1519 = vpop.f32.mrf.mxu0
        %v1520 = vadd.f32 0.0, %v1519
        %v1521 = vpop.f32.mrf.mxu0
        %v1522 = vpop.f32.mrf.mxu0
        %v1523 = vadd.f32 0.0, %v1522
        %v1524 = vpop.f32.mrf.mxu0
        %1525 = vmatprep.mubr.bf16.mxu0 0
        %1526 = vmatmul.mubr.bf16.gmra.mxu0 %v1314
        %v1527 = vpop.f32.mrf.mxu0
        %v1528 = vadd.f32 0.0, %v1527
        %v1529 = vpop.f32.mrf.mxu0
        %v1530 = vpop.f32.mrf.mxu0
        %v1531 = vadd.f32 0.0, %v1530
        %v1532 = vpop.f32.mrf.mxu0
        %1533 = vmatprep.mubr.bf16.mxu0 0
        %1534 = vmatmul.mubr.bf16.gmra.mxu0 %v1315
        %v1535 = vpop.f32.mrf.mxu0
        %v1536 = vadd.f32 0.0, %v1535
        %v1537 = vpop.f32.mrf.mxu0
        %v1538 = vpop.f32.mrf.mxu0
        %v1539 = vadd.f32 0.0, %v1538
        %v1540 = vpop.f32.mrf.mxu0
        %1541 = vdwg.mxu0
        %v1542 = vadd.f32 %v1233, %v1416
        %v1543 = vadd.f32 %v1234, %v1419
        %v1544 = vadd.f32 %v1235, %v1424
        %v1545 = vadd.f32 %v1236, %v1427
        %v1546 = vadd.f32 %v1237, %v1432
        %v1547 = vadd.f32 %v1238, %v1435
        %v1548 = vadd.f32 %v1239, %v1440
        %v1549 = vadd.f32 %v1240, %v1443
        %v1550 = vadd.f32 %v1241, %v1448
        %v1551 = vadd.f32 %v1242, %v1451
        %v1552 = vadd.f32 %v1243, %v1456
        %v1553 = vadd.f32 %v1244, %v1459
        %v1554 = vadd.f32 %v1245, %v1464
        %v1555 = vadd.f32 %v1246, %v1467
        %v1556 = vadd.f32 %v1247, %v1472
        %v1557 = vadd.f32 %v1248, %v1475
        %v1558 = vadd.f32 %v1249, %v1480
        %v1559 = vadd.f32 %v1250, %v1483
        %v1560 = vadd.f32 %v1251, %v1488
        %v1561 = vadd.f32 %v1252, %v1491
        %v1562 = vadd.f32 %v1253, %v1496
        %v1563 = vadd.f32 %v1254, %v1499
        %v1564 = vadd.f32 %v1255, %v1504
        %v1565 = vadd.f32 %v1256, %v1507
        %v1566 = vadd.f32 %v1257, %v1512
        %v1567 = vadd.f32 %v1258, %v1515
        %v1568 = vadd.f32 %v1259, %v1520
        %v1569 = vadd.f32 %v1260, %v1523
        %v1570 = vadd.f32 %v1261, %v1528
        %v1571 = vadd.f32 %v1262, %v1531
        %v1572 = vadd.f32 %v1263, %v1536
        %v1573 = vadd.f32 %v1264, %v1539
        %v1574 = vld [vmem:[%s1267 + $0x1] sm:$0xff]
        %v1575 = vld [vmem:[%s1267 + $0x9] sm:$0xff]
        %v1576 = vld [vmem:[%s1267 + $0x19] sm:$0xff]
        %v1577 = vld [vmem:[%s1267 + $0x21] sm:$0xff]
        %v1578 = vld [vmem:[%s1267 + $0x31] sm:$0xff]
        %v1579 = vld [vmem:[%s1267 + $0x39] sm:$0xff]
        %v1580 = vld [vmem:[%s1267 + $0x49] sm:$0xff]
        %v1581 = vld [vmem:[%s1267 + $0x51] sm:$0xff]
        %v1582 = vld [vmem:[%s1267 + $0x61] sm:$0xff]
        %v1583 = vld [vmem:[%s1267 + $0x69] sm:$0xff]
        %v1584 = vld [vmem:[%s1267 + $0x79] sm:$0xff]
        %v1585 = vld [vmem:[%s1267 + $0x81] sm:$0xff]
        %v1586 = vld [vmem:[%s1267 + $0x91] sm:$0xff]
        %v1587 = vld [vmem:[%s1267 + $0x99] sm:$0xff]
        %v1588 = vld [vmem:[%s1267 + $0xa9] sm:$0xff]
        %v1589 = vld [vmem:[%s1267 + $0xb1] sm:$0xff]
        %v1590 = vld [vmem:[%s1267 + $0xc1] sm:$0xff]
        %v1591 = vld [vmem:[%s1267 + $0xc9] sm:$0xff]
        %v1592 = vld [vmem:[%s1267 + $0xd9] sm:$0xff]
        %v1593 = vld [vmem:[%s1267 + $0xe1] sm:$0xff]
        %v1594 = vld [vmem:[%s1267 + $0xf1] sm:$0xff]
        %v1595 = vld [vmem:[%s1267 + $0xf9] sm:$0xff]
        %v1596 = vld [vmem:[%s1267 + $0x109] sm:$0xff]
        %v1597 = vld [vmem:[%s1267 + $0x111] sm:$0xff]
        %v1598 = vld [vmem:[%s1267 + $0x121] sm:$0xff]
        %v1599 = vld [vmem:[%s1267 + $0x129] sm:$0xff]
        %v1600 = vld [vmem:[%s1267 + $0x139] sm:$0xff]
        %v1601 = vld [vmem:[%s1267 + $0x141] sm:$0xff]
        %v1602 = vld [vmem:[%s1267 + $0x151] sm:$0xff]
        %v1603 = vld [vmem:[%s1267 + $0x159] sm:$0xff]
        %v1604 = vld [vmem:[%s1267 + $0x169] sm:$0xff]
        %v1605 = vld [vmem:[%s1267 + $0x171] sm:$0xff]
        %v1606 = vpack.c.bf16 %v1575, %v1574
        %v1607 = vpack.c.bf16 %v1577, %v1576
        %v1608 = vpack.c.bf16 %v1579, %v1578
        %v1609 = vpack.c.bf16 %v1581, %v1580
        %v1610 = vpack.c.bf16 %v1583, %v1582
        %v1611 = vpack.c.bf16 %v1585, %v1584
        %v1612 = vpack.c.bf16 %v1587, %v1586
        %v1613 = vpack.c.bf16 %v1589, %v1588
        %v1614 = vpack.c.bf16 %v1591, %v1590
        %v1615 = vpack.c.bf16 %v1593, %v1592
        %v1616 = vpack.c.bf16 %v1595, %v1594
        %v1617 = vpack.c.bf16 %v1597, %v1596
        %v1618 = vpack.c.bf16 %v1599, %v1598
        %v1619 = vpack.c.bf16 %v1601, %v1600
        %v1620 = vpack.c.bf16 %v1603, %v1602
        %v1621 = vpack.c.bf16 %v1605, %v1604
        %s1622 = scalar_lea.vmem [#allocation6], 256
        %v1623 = vld [vmem:[%s1622] sm:$0xf]
        %v1624 = vld [vmem:[%s1622 + $0x4] sm:$0xf]
        %v1625 = vld [vmem:[%s1622 + $0x8] sm:$0xf]
        %v1626 = vld [vmem:[%s1622 + $0xc] sm:$0xf]
        %v1627 = vld [vmem:[%s1622 + $0x10] sm:$0xf]
        %v1628 = vld [vmem:[%s1622 + $0x14] sm:$0xf]
        %v1629 = vld [vmem:[%s1622 + $0x18] sm:$0xf]
        %v1630 = vld [vmem:[%s1622 + $0x1c] sm:$0xf]
        %v1631 = vld [vmem:[%s1622 + $0x20] sm:$0xf]
        %v1632 = vld [vmem:[%s1622 + $0x24] sm:$0xf]
        %v1633 = vld [vmem:[%s1622 + $0x28] sm:$0xf]
        %v1634 = vld [vmem:[%s1622 + $0x2c] sm:$0xf]
        %v1635 = vld [vmem:[%s1622 + $0x30] sm:$0xf]
        %v1636 = vld [vmem:[%s1622 + $0x34] sm:$0xf]
        %v1637 = vld [vmem:[%s1622 + $0x38] sm:$0xf]
        %v1638 = vld [vmem:[%s1622 + $0x3c] sm:$0xf]
        %v1655 = vunpack.c.l.b16 %v1623
        %v1656 = vunpack.c.l.b16 %v1624
        %v1657 = vunpack.c.l.b16 %v1625
        %v1658 = vunpack.c.l.b16 %v1626
        %v1659 = vunpack.c.l.b16 %v1627
        %v1660 = vunpack.c.l.b16 %v1628
        %v1661 = vunpack.c.l.b16 %v1629
        %v1662 = vunpack.c.l.b16 %v1630
        %v1663 = vunpack.c.l.b16 %v1631
        %v1664 = vunpack.c.l.b16 %v1632
        %v1665 = vunpack.c.l.b16 %v1633
        %v1666 = vunpack.c.l.b16 %v1634
        %v1667 = vunpack.c.l.b16 %v1635
        %v1668 = vunpack.c.l.b16 %v1636
        %v1669 = vunpack.c.l.b16 %v1637
        %v1670 = vunpack.c.l.b16 %v1638
        %v1671 = vpack.c.b16 %v1656, %v1655
        %v1672 = vpack.c.b16 %v1658, %v1657
        %v1673 = vpack.c.b16 %v1660, %v1659
        %v1674 = vpack.c.b16 %v1662, %v1661
        %v1675 = vpack.c.b16 %v1664, %v1663
        %v1676 = vpack.c.b16 %v1666, %v1665
        %v1677 = vpack.c.b16 %v1668, %v1667
        %v1678 = vpack.c.b16 %v1670, %v1669
        %1687 = vmatprep.subr.bf16.mxu0 0
        %1688 = vmatpush1.bf16.msra.mxu0 %v1678
        %1689 = vmatprep.subr.bf16.mxu0 0
        %1690 = vmatpush1.bf16.msra.mxu0 %v1677
        %1691 = vmatprep.subr.bf16.mxu0 0
        %1692 = vmatpush1.bf16.msra.mxu0 %v1676
        %1693 = vmatprep.subr.bf16.mxu0 0
        %1694 = vmatpush1.bf16.msra.mxu0 %v1675
        %1695 = vmatprep.subr.bf16.mxu0 0
        %1696 = vmatpush1.bf16.msra.mxu0 %v1674
        %1697 = vmatprep.subr.bf16.mxu0 0
        %1698 = vmatpush1.bf16.msra.mxu0 %v1673
        %1699 = vmatprep.subr.bf16.mxu0 0
        %1700 = vmatpush1.bf16.msra.mxu0 %v1672
        %1701 = vmatprep.subr.bf16.mxu0 0
        %1702 = vmatpush1.bf16.msra.mxu0 %v1671
        %1703 = vmatprep.subr.bf16.mxu0 0
        %1704 = vmatpush2.bf16.msra.mxu0 0
        %1705 = vmatprep.subr.bf16.mxu0 0
        %1706 = vmatpush2.bf16.msra.mxu0 0
        %1707 = vmatprep.subr.bf16.mxu0 0
        %1708 = vmatpush2.bf16.msra.mxu0 0
        %1709 = vmatprep.subr.bf16.mxu0 0
        %1710 = vmatpush2.bf16.msra.mxu0 0
        %1711 = vmatprep.subr.bf16.mxu0 0
        %1712 = vmatpush2.bf16.msra.mxu0 0
        %1713 = vmatprep.subr.bf16.mxu0 0
        %1714 = vmatpush2.bf16.msra.mxu0 0
        %1715 = vmatprep.subr.bf16.mxu0 0
        %1716 = vmatpush2.bf16.msra.mxu0 0
        %1717 = vmatprep.subr.bf16.mxu0 0
        %1718 = vmatpush2.bf16.msra.mxu0 0
        %1719 = vmatprep.mubr.bf16.mxu0 0
        %1720 = vmatmul.mubr.bf16.gmra.mxu0 %v1606
        %v1721 = vpop.f32.mrf.mxu0
        %v1722 = vadd.f32 0.0, %v1721
        %v1723 = vpop.f32.mrf.mxu0
        %v1724 = vpop.f32.mrf.mxu0
        %v1725 = vadd.f32 0.0, %v1724
        %v1726 = vpop.f32.mrf.mxu0
        %1727 = vmatprep.mubr.bf16.mxu0 0
        %1728 = vmatmul.mubr.bf16.gmra.mxu0 %v1607
        %v1729 = vpop.f32.mrf.mxu0
        %v1730 = vadd.f32 0.0, %v1729
        %v1731 = vpop.f32.mrf.mxu0
        %v1732 = vpop.f32.mrf.mxu0
        %v1733 = vadd.f32 0.0, %v1732
        %v1734 = vpop.f32.mrf.mxu0
        %1735 = vmatprep.mubr.bf16.mxu0 0
        %1736 = vmatmul.mubr.bf16.gmra.mxu0 %v1608
        %v1737 = vpop.f32.mrf.mxu0
        %v1738 = vadd.f32 0.0, %v1737
        %v1739 = vpop.f32.mrf.mxu0
        %v1740 = vpop.f32.mrf.mxu0
        %v1741 = vadd.f32 0.0, %v1740
        %v1742 = vpop.f32.mrf.mxu0
        %1743 = vmatprep.mubr.bf16.mxu0 0
        %1744 = vmatmul.mubr.bf16.gmra.mxu0 %v1609
        %v1745 = vpop.f32.mrf.mxu0
        %v1746 = vadd.f32 0.0, %v1745
        %v1747 = vpop.f32.mrf.mxu0
        %v1748 = vpop.f32.mrf.mxu0
        %v1749 = vadd.f32 0.0, %v1748
        %v1750 = vpop.f32.mrf.mxu0
        %1751 = vmatprep.mubr.bf16.mxu0 0
        %1752 = vmatmul.mubr.bf16.gmra.mxu0 %v1610
        %v1753 = vpop.f32.mrf.mxu0
        %v1754 = vadd.f32 0.0, %v1753
        %v1755 = vpop.f32.mrf.mxu0
        %v1756 = vpop.f32.mrf.mxu0
        %v1757 = vadd.f32 0.0, %v1756
        %v1758 = vpop.f32.mrf.mxu0
        %1759 = vmatprep.mubr.bf16.mxu0 0
        %1760 = vmatmul.mubr.bf16.gmra.mxu0 %v1611
        %v1761 = vpop.f32.mrf.mxu0
        %v1762 = vadd.f32 0.0, %v1761
        %v1763 = vpop.f32.mrf.mxu0
        %v1764 = vpop.f32.mrf.mxu0
        %v1765 = vadd.f32 0.0, %v1764
        %v1766 = vpop.f32.mrf.mxu0
        %1767 = vmatprep.mubr.bf16.mxu0 0
        %1768 = vmatmul.mubr.bf16.gmra.mxu0 %v1612
        %v1769 = vpop.f32.mrf.mxu0
        %v1770 = vadd.f32 0.0, %v1769
        %v1771 = vpop.f32.mrf.mxu0
        %v1772 = vpop.f32.mrf.mxu0
        %v1773 = vadd.f32 0.0, %v1772
        %v1774 = vpop.f32.mrf.mxu0
        %1775 = vmatprep.mubr.bf16.mxu0 0
        %1776 = vmatmul.mubr.bf16.gmra.mxu0 %v1613
        %v1777 = vpop.f32.mrf.mxu0
        %v1778 = vadd.f32 0.0, %v1777
        %v1779 = vpop.f32.mrf.mxu0
        %v1780 = vpop.f32.mrf.mxu0
        %v1781 = vadd.f32 0.0, %v1780
        %v1782 = vpop.f32.mrf.mxu0
        %1783 = vmatprep.mubr.bf16.mxu0 0
        %1784 = vmatmul.mubr.bf16.gmra.mxu0 %v1614
        %v1785 = vpop.f32.mrf.mxu0
        %v1786 = vadd.f32 0.0, %v1785
        %v1787 = vpop.f32.mrf.mxu0
        %v1788 = vpop.f32.mrf.mxu0
        %v1789 = vadd.f32 0.0, %v1788
        %v1790 = vpop.f32.mrf.mxu0
        %1791 = vmatprep.mubr.bf16.mxu0 0
        %1792 = vmatmul.mubr.bf16.gmra.mxu0 %v1615
        %v1793 = vpop.f32.mrf.mxu0
        %v1794 = vadd.f32 0.0, %v1793
        %v1795 = vpop.f32.mrf.mxu0
        %v1796 = vpop.f32.mrf.mxu0
        %v1797 = vadd.f32 0.0, %v1796
        %v1798 = vpop.f32.mrf.mxu0
        %1799 = vmatprep.mubr.bf16.mxu0 0
        %1800 = vmatmul.mubr.bf16.gmra.mxu0 %v1616
        %v1801 = vpop.f32.mrf.mxu0
        %v1802 = vadd.f32 0.0, %v1801
        %v1803 = vpop.f32.mrf.mxu0
        %v1804 = vpop.f32.mrf.mxu0
        %v1805 = vadd.f32 0.0, %v1804
        %v1806 = vpop.f32.mrf.mxu0
        %1807 = vmatprep.mubr.bf16.mxu0 0
        %1808 = vmatmul.mubr.bf16.gmra.mxu0 %v1617
        %v1809 = vpop.f32.mrf.mxu0
        %v1810 = vadd.f32 0.0, %v1809
        %v1811 = vpop.f32.mrf.mxu0
        %v1812 = vpop.f32.mrf.mxu0
        %v1813 = vadd.f32 0.0, %v1812
        %v1814 = vpop.f32.mrf.mxu0
        %1815 = vmatprep.mubr.bf16.mxu0 0
        %1816 = vmatmul.mubr.bf16.gmra.mxu0 %v1618
        %v1817 = vpop.f32.mrf.mxu0
        %v1818 = vadd.f32 0.0, %v1817
        %v1819 = vpop.f32.mrf.mxu0
        %v1820 = vpop.f32.mrf.mxu0
        %v1821 = vadd.f32 0.0, %v1820
        %v1822 = vpop.f32.mrf.mxu0
        %1823 = vmatprep.mubr.bf16.mxu0 0
        %1824 = vmatmul.mubr.bf16.gmra.mxu0 %v1619
        %v1825 = vpop.f32.mrf.mxu0
        %v1826 = vadd.f32 0.0, %v1825
        %v1827 = vpop.f32.mrf.mxu0
        %v1828 = vpop.f32.mrf.mxu0
        %v1829 = vadd.f32 0.0, %v1828
        %v1830 = vpop.f32.mrf.mxu0
        %1831 = vmatprep.mubr.bf16.mxu0 0
        %1832 = vmatmul.mubr.bf16.gmra.mxu0 %v1620
        %v1833 = vpop.f32.mrf.mxu0
        %v1834 = vadd.f32 0.0, %v1833
        %v1835 = vpop.f32.mrf.mxu0
        %v1836 = vpop.f32.mrf.mxu0
        %v1837 = vadd.f32 0.0, %v1836
        %v1838 = vpop.f32.mrf.mxu0
        %1839 = vmatprep.mubr.bf16.mxu0 0
        %1840 = vmatmul.mubr.bf16.gmra.mxu0 %v1621
        %v1841 = vpop.f32.mrf.mxu0
        %v1842 = vadd.f32 0.0, %v1841
        %v1843 = vpop.f32.mrf.mxu0
        %v1844 = vpop.f32.mrf.mxu0
        %v1845 = vadd.f32 0.0, %v1844
        %v1846 = vpop.f32.mrf.mxu0
        %1847 = vdwg.mxu0
        %v1848 = vadd.f32 %v1542, %v1722
        %v1849 = vadd.f32 %v1543, %v1725
        %v1850 = vadd.f32 %v1544, %v1730
        %v1851 = vadd.f32 %v1545, %v1733
        %v1852 = vadd.f32 %v1546, %v1738
        %v1853 = vadd.f32 %v1547, %v1741
        %v1854 = vadd.f32 %v1548, %v1746
        %v1855 = vadd.f32 %v1549, %v1749
        %v1856 = vadd.f32 %v1550, %v1754
        %v1857 = vadd.f32 %v1551, %v1757
        %v1858 = vadd.f32 %v1552, %v1762
        %v1859 = vadd.f32 %v1553, %v1765
        %v1860 = vadd.f32 %v1554, %v1770
        %v1861 = vadd.f32 %v1555, %v1773
        %v1862 = vadd.f32 %v1556, %v1778
        %v1863 = vadd.f32 %v1557, %v1781
        %v1864 = vadd.f32 %v1558, %v1786
        %v1865 = vadd.f32 %v1559, %v1789
        %v1866 = vadd.f32 %v1560, %v1794
        %v1867 = vadd.f32 %v1561, %v1797
        %v1868 = vadd.f32 %v1562, %v1802
        %v1869 = vadd.f32 %v1563, %v1805
        %v1870 = vadd.f32 %v1564, %v1810
        %v1871 = vadd.f32 %v1565, %v1813
        %v1872 = vadd.f32 %v1566, %v1818
        %v1873 = vadd.f32 %v1567, %v1821
        %v1874 = vadd.f32 %v1568, %v1826
        %v1875 = vadd.f32 %v1569, %v1829
        %v1876 = vadd.f32 %v1570, %v1834
        %v1877 = vadd.f32 %v1571, %v1837
        %v1878 = vadd.f32 %v1572, %v1842
        %v1879 = vadd.f32 %v1573, %v1845
        %v1880 = vld [vmem:[%s1267 + $0x2] sm:$0xff]
        %v1881 = vld [vmem:[%s1267 + $0xa] sm:$0xff]
        %v1882 = vld [vmem:[%s1267 + $0x1a] sm:$0xff]
        %v1883 = vld [vmem:[%s1267 + $0x22] sm:$0xff]
        %v1884 = vld [vmem:[%s1267 + $0x32] sm:$0xff]
        %v1885 = vld [vmem:[%s1267 + $0x3a] sm:$0xff]
        %v1886 = vld [vmem:[%s1267 + $0x4a] sm:$0xff]
        %v1887 = vld [vmem:[%s1267 + $0x52] sm:$0xff]
        %v1888 = vld [vmem:[%s1267 + $0x62] sm:$0xff]
        %v1889 = vld [vmem:[%s1267 + $0x6a] sm:$0xff]
        %v1890 = vld [vmem:[%s1267 + $0x7a] sm:$0xff]
        %v1891 = vld [vmem:[%s1267 + $0x82] sm:$0xff]
        %v1892 = vld [vmem:[%s1267 + $0x92] sm:$0xff]
        %v1893 = vld [vmem:[%s1267 + $0x9a] sm:$0xff]
        %v1894 = vld [vmem:[%s1267 + $0xaa] sm:$0xff]
        %v1895 = vld [vmem:[%s1267 + $0xb2] sm:$0xff]
        %v1896 = vld [vmem:[%s1267 + $0xc2] sm:$0xff]
        %v1897 = vld [vmem:[%s1267 + $0xca] sm:$0xff]
        %v1898 = vld [vmem:[%s1267 + $0xda] sm:$0xff]
        %v1899 = vld [vmem:[%s1267 + $0xe2] sm:$0xff]
        %v1900 = vld [vmem:[%s1267 + $0xf2] sm:$0xff]
        %v1901 = vld [vmem:[%s1267 + $0xfa] sm:$0xff]
        %v1902 = vld [vmem:[%s1267 + $0x10a] sm:$0xff]
        %v1903 = vld [vmem:[%s1267 + $0x112] sm:$0xff]
        %v1904 = vld [vmem:[%s1267 + $0x122] sm:$0xff]
        %v1905 = vld [vmem:[%s1267 + $0x12a] sm:$0xff]
        %v1906 = vld [vmem:[%s1267 + $0x13a] sm:$0xff]
        %v1907 = vld [vmem:[%s1267 + $0x142] sm:$0xff]
        %v1908 = vld [vmem:[%s1267 + $0x152] sm:$0xff]
        %v1909 = vld [vmem:[%s1267 + $0x15a] sm:$0xff]
        %v1910 = vld [vmem:[%s1267 + $0x16a] sm:$0xff]
        %v1911 = vld [vmem:[%s1267 + $0x172] sm:$0xff]
        %v1912 = vpack.c.bf16 %v1881, %v1880
        %v1913 = vpack.c.bf16 %v1883, %v1882
        %v1914 = vpack.c.bf16 %v1885, %v1884
        %v1915 = vpack.c.bf16 %v1887, %v1886
        %v1916 = vpack.c.bf16 %v1889, %v1888
        %v1917 = vpack.c.bf16 %v1891, %v1890
        %v1918 = vpack.c.bf16 %v1893, %v1892
        %v1919 = vpack.c.bf16 %v1895, %v1894
        %v1920 = vpack.c.bf16 %v1897, %v1896
        %v1921 = vpack.c.bf16 %v1899, %v1898
        %v1922 = vpack.c.bf16 %v1901, %v1900
        %v1923 = vpack.c.bf16 %v1903, %v1902
        %v1924 = vpack.c.bf16 %v1905, %v1904
        %v1925 = vpack.c.bf16 %v1907, %v1906
        %v1926 = vpack.c.bf16 %v1909, %v1908
        %v1927 = vpack.c.bf16 %v1911, %v1910
        %s1928 = scalar_lea.vmem [#allocation6], 320
        %v1929 = vld [vmem:[%s1928] sm:$0xf]
        %v1930 = vld [vmem:[%s1928 + $0x4] sm:$0xf]
        %v1931 = vld [vmem:[%s1928 + $0x8] sm:$0xf]
        %v1932 = vld [vmem:[%s1928 + $0xc] sm:$0xf]
        %v1933 = vld [vmem:[%s1928 + $0x10] sm:$0xf]
        %v1934 = vld [vmem:[%s1928 + $0x14] sm:$0xf]
        %v1935 = vld [vmem:[%s1928 + $0x18] sm:$0xf]
        %v1936 = vld [vmem:[%s1928 + $0x1c] sm:$0xf]
        %v1937 = vld [vmem:[%s1928 + $0x20] sm:$0xf]
        %v1938 = vld [vmem:[%s1928 + $0x24] sm:$0xf]
        %v1939 = vld [vmem:[%s1928 + $0x28] sm:$0xf]
        %v1940 = vld [vmem:[%s1928 + $0x2c] sm:$0xf]
        %v1941 = vld [vmem:[%s1928 + $0x30] sm:$0xf]
        %v1942 = vld [vmem:[%s1928 + $0x34] sm:$0xf]
        %v1943 = vld [vmem:[%s1928 + $0x38] sm:$0xf]
        %v1944 = vld [vmem:[%s1928 + $0x3c] sm:$0xf]
        %v1961 = vunpack.c.l.b16 %v1929
        %v1962 = vunpack.c.l.b16 %v1930
        %v1963 = vunpack.c.l.b16 %v1931
        %v1964 = vunpack.c.l.b16 %v1932
        %v1965 = vunpack.c.l.b16 %v1933
        %v1966 = vunpack.c.l.b16 %v1934
        %v1967 = vunpack.c.l.b16 %v1935
        %v1968 = vunpack.c.l.b16 %v1936
        %v1969 = vunpack.c.l.b16 %v1937
        %v1970 = vunpack.c.l.b16 %v1938
        %v1971 = vunpack.c.l.b16 %v1939
        %v1972 = vunpack.c.l.b16 %v1940
        %v1973 = vunpack.c.l.b16 %v1941
        %v1974 = vunpack.c.l.b16 %v1942
        %v1975 = vunpack.c.l.b16 %v1943
        %v1976 = vunpack.c.l.b16 %v1944
        %v1977 = vpack.c.b16 %v1962, %v1961
        %v1978 = vpack.c.b16 %v1964, %v1963
        %v1979 = vpack.c.b16 %v1966, %v1965
        %v1980 = vpack.c.b16 %v1968, %v1967
        %v1981 = vpack.c.b16 %v1970, %v1969
        %v1982 = vpack.c.b16 %v1972, %v1971
        %v1983 = vpack.c.b16 %v1974, %v1973
        %v1984 = vpack.c.b16 %v1976, %v1975
        %1993 = vmatprep.subr.bf16.mxu0 0
        %1994 = vmatpush1.bf16.msra.mxu0 %v1984
        %1995 = vmatprep.subr.bf16.mxu0 0
        %1996 = vmatpush1.bf16.msra.mxu0 %v1983
        %1997 = vmatprep.subr.bf16.mxu0 0
        %1998 = vmatpush1.bf16.msra.mxu0 %v1982
        %1999 = vmatprep.subr.bf16.mxu0 0
        %2000 = vmatpush1.bf16.msra.mxu0 %v1981
        %2001 = vmatprep.subr.bf16.mxu0 0
        %2002 = vmatpush1.bf16.msra.mxu0 %v1980
        %2003 = vmatprep.subr.bf16.mxu0 0
        %2004 = vmatpush1.bf16.msra.mxu0 %v1979
        %2005 = vmatprep.subr.bf16.mxu0 0
        %2006 = vmatpush1.bf16.msra.mxu0 %v1978
        %2007 = vmatprep.subr.bf16.mxu0 0
        %2008 = vmatpush1.bf16.msra.mxu0 %v1977
        %2009 = vmatprep.subr.bf16.mxu0 0
        %2010 = vmatpush2.bf16.msra.mxu0 0
        %2011 = vmatprep.subr.bf16.mxu0 0
        %2012 = vmatpush2.bf16.msra.mxu0 0
        %2013 = vmatprep.subr.bf16.mxu0 0
        %2014 = vmatpush2.bf16.msra.mxu0 0
        %2015 = vmatprep.subr.bf16.mxu0 0
        %2016 = vmatpush2.bf16.msra.mxu0 0
        %2017 = vmatprep.subr.bf16.mxu0 0
        %2018 = vmatpush2.bf16.msra.mxu0 0
        %2019 = vmatprep.subr.bf16.mxu0 0
        %2020 = vmatpush2.bf16.msra.mxu0 0
        %2021 = vmatprep.subr.bf16.mxu0 0
        %2022 = vmatpush2.bf16.msra.mxu0 0
        %2023 = vmatprep.subr.bf16.mxu0 0
        %2024 = vmatpush2.bf16.msra.mxu0 0
        %2025 = vmatprep.mubr.bf16.mxu0 0
        %2026 = vmatmul.mubr.bf16.gmra.mxu0 %v1912
        %v2027 = vpop.f32.mrf.mxu0
        %v2028 = vadd.f32 0.0, %v2027
        %v2029 = vpop.f32.mrf.mxu0
        %v2030 = vpop.f32.mrf.mxu0
        %v2031 = vadd.f32 0.0, %v2030
        %v2032 = vpop.f32.mrf.mxu0
        %2033 = vmatprep.mubr.bf16.mxu0 0
        %2034 = vmatmul.mubr.bf16.gmra.mxu0 %v1913
        %v2035 = vpop.f32.mrf.mxu0
        %v2036 = vadd.f32 0.0, %v2035
        %v2037 = vpop.f32.mrf.mxu0
        %v2038 = vpop.f32.mrf.mxu0
        %v2039 = vadd.f32 0.0, %v2038
        %v2040 = vpop.f32.mrf.mxu0
        %2041 = vmatprep.mubr.bf16.mxu0 0
        %2042 = vmatmul.mubr.bf16.gmra.mxu0 %v1914
        %v2043 = vpop.f32.mrf.mxu0
        %v2044 = vadd.f32 0.0, %v2043
        %v2045 = vpop.f32.mrf.mxu0
        %v2046 = vpop.f32.mrf.mxu0
        %v2047 = vadd.f32 0.0, %v2046
        %v2048 = vpop.f32.mrf.mxu0
        %2049 = vmatprep.mubr.bf16.mxu0 0
        %2050 = vmatmul.mubr.bf16.gmra.mxu0 %v1915
        %v2051 = vpop.f32.mrf.mxu0
        %v2052 = vadd.f32 0.0, %v2051
        %v2053 = vpop.f32.mrf.mxu0
        %v2054 = vpop.f32.mrf.mxu0
        %v2055 = vadd.f32 0.0, %v2054
        %v2056 = vpop.f32.mrf.mxu0
        %2057 = vmatprep.mubr.bf16.mxu0 0
        %2058 = vmatmul.mubr.bf16.gmra.mxu0 %v1916
        %v2059 = vpop.f32.mrf.mxu0
        %v2060 = vadd.f32 0.0, %v2059
        %v2061 = vpop.f32.mrf.mxu0
        %v2062 = vpop.f32.mrf.mxu0
        %v2063 = vadd.f32 0.0, %v2062
        %v2064 = vpop.f32.mrf.mxu0
        %2065 = vmatprep.mubr.bf16.mxu0 0
        %2066 = vmatmul.mubr.bf16.gmra.mxu0 %v1917
        %v2067 = vpop.f32.mrf.mxu0
        %v2068 = vadd.f32 0.0, %v2067
        %v2069 = vpop.f32.mrf.mxu0
        %v2070 = vpop.f32.mrf.mxu0
        %v2071 = vadd.f32 0.0, %v2070
        %v2072 = vpop.f32.mrf.mxu0
        %2073 = vmatprep.mubr.bf16.mxu0 0
        %2074 = vmatmul.mubr.bf16.gmra.mxu0 %v1918
        %v2075 = vpop.f32.mrf.mxu0
        %v2076 = vadd.f32 0.0, %v2075
        %v2077 = vpop.f32.mrf.mxu0
        %v2078 = vpop.f32.mrf.mxu0
        %v2079 = vadd.f32 0.0, %v2078
        %v2080 = vpop.f32.mrf.mxu0
        %2081 = vmatprep.mubr.bf16.mxu0 0
        %2082 = vmatmul.mubr.bf16.gmra.mxu0 %v1919
        %v2083 = vpop.f32.mrf.mxu0
        %v2084 = vadd.f32 0.0, %v2083
        %v2085 = vpop.f32.mrf.mxu0
        %v2086 = vpop.f32.mrf.mxu0
        %v2087 = vadd.f32 0.0, %v2086
        %v2088 = vpop.f32.mrf.mxu0
        %2089 = vmatprep.mubr.bf16.mxu0 0
        %2090 = vmatmul.mubr.bf16.gmra.mxu0 %v1920
        %v2091 = vpop.f32.mrf.mxu0
        %v2092 = vadd.f32 0.0, %v2091
        %v2093 = vpop.f32.mrf.mxu0
        %v2094 = vpop.f32.mrf.mxu0
        %v2095 = vadd.f32 0.0, %v2094
        %v2096 = vpop.f32.mrf.mxu0
        %2097 = vmatprep.mubr.bf16.mxu0 0
        %2098 = vmatmul.mubr.bf16.gmra.mxu0 %v1921
        %v2099 = vpop.f32.mrf.mxu0
        %v2100 = vadd.f32 0.0, %v2099
        %v2101 = vpop.f32.mrf.mxu0
        %v2102 = vpop.f32.mrf.mxu0
        %v2103 = vadd.f32 0.0, %v2102
        %v2104 = vpop.f32.mrf.mxu0
        %2105 = vmatprep.mubr.bf16.mxu0 0
        %2106 = vmatmul.mubr.bf16.gmra.mxu0 %v1922
        %v2107 = vpop.f32.mrf.mxu0
        %v2108 = vadd.f32 0.0, %v2107
        %v2109 = vpop.f32.mrf.mxu0
        %v2110 = vpop.f32.mrf.mxu0
        %v2111 = vadd.f32 0.0, %v2110
        %v2112 = vpop.f32.mrf.mxu0
        %2113 = vmatprep.mubr.bf16.mxu0 0
        %2114 = vmatmul.mubr.bf16.gmra.mxu0 %v1923
        %v2115 = vpop.f32.mrf.mxu0
        %v2116 = vadd.f32 0.0, %v2115
        %v2117 = vpop.f32.mrf.mxu0
        %v2118 = vpop.f32.mrf.mxu0
        %v2119 = vadd.f32 0.0, %v2118
        %v2120 = vpop.f32.mrf.mxu0
        %2121 = vmatprep.mubr.bf16.mxu0 0
        %2122 = vmatmul.mubr.bf16.gmra.mxu0 %v1924
        %v2123 = vpop.f32.mrf.mxu0
        %v2124 = vadd.f32 0.0, %v2123
        %v2125 = vpop.f32.mrf.mxu0
        %v2126 = vpop.f32.mrf.mxu0
        %v2127 = vadd.f32 0.0, %v2126
        %v2128 = vpop.f32.mrf.mxu0
        %2129 = vmatprep.mubr.bf16.mxu0 0
        %2130 = vmatmul.mubr.bf16.gmra.mxu0 %v1925
        %v2131 = vpop.f32.mrf.mxu0
        %v2132 = vadd.f32 0.0, %v2131
        %v2133 = vpop.f32.mrf.mxu0
        %v2134 = vpop.f32.mrf.mxu0
        %v2135 = vadd.f32 0.0, %v2134
        %v2136 = vpop.f32.mrf.mxu0
        %2137 = vmatprep.mubr.bf16.mxu0 0
        %2138 = vmatmul.mubr.bf16.gmra.mxu0 %v1926
        %v2139 = vpop.f32.mrf.mxu0
        %v2140 = vadd.f32 0.0, %v2139
        %v2141 = vpop.f32.mrf.mxu0
        %v2142 = vpop.f32.mrf.mxu0
        %v2143 = vadd.f32 0.0, %v2142
        %v2144 = vpop.f32.mrf.mxu0
        %2145 = vmatprep.mubr.bf16.mxu0 0
        %2146 = vmatmul.mubr.bf16.gmra.mxu0 %v1927
        %v2147 = vpop.f32.mrf.mxu0
        %v2148 = vadd.f32 0.0, %v2147
        %v2149 = vpop.f32.mrf.mxu0
        %v2150 = vpop.f32.mrf.mxu0
        %v2151 = vadd.f32 0.0, %v2150
        %v2152 = vpop.f32.mrf.mxu0
        %2153 = vdwg.mxu0
        %v2154 = vadd.f32 %v1848, %v2028
        %v2155 = vadd.f32 %v1849, %v2031
        %v2156 = vadd.f32 %v1850, %v2036
        %v2157 = vadd.f32 %v1851, %v2039
        %v2158 = vadd.f32 %v1852, %v2044
        %v2159 = vadd.f32 %v1853, %v2047
        %v2160 = vadd.f32 %v1854, %v2052
        %v2161 = vadd.f32 %v1855, %v2055
        %v2162 = vadd.f32 %v1856, %v2060
        %v2163 = vadd.f32 %v1857, %v2063
        %v2164 = vadd.f32 %v1858, %v2068
        %v2165 = vadd.f32 %v1859, %v2071
        %v2166 = vadd.f32 %v1860, %v2076
        %v2167 = vadd.f32 %v1861, %v2079
        %v2168 = vadd.f32 %v1862, %v2084
        %v2169 = vadd.f32 %v1863, %v2087
        %v2170 = vadd.f32 %v1864, %v2092
        %v2171 = vadd.f32 %v1865, %v2095
        %v2172 = vadd.f32 %v1866, %v2100
        %v2173 = vadd.f32 %v1867, %v2103
        %v2174 = vadd.f32 %v1868, %v2108
        %v2175 = vadd.f32 %v1869, %v2111
        %v2176 = vadd.f32 %v1870, %v2116
        %v2177 = vadd.f32 %v1871, %v2119
        %v2178 = vadd.f32 %v1872, %v2124
        %v2179 = vadd.f32 %v1873, %v2127
        %v2180 = vadd.f32 %v1874, %v2132
        %v2181 = vadd.f32 %v1875, %v2135
        %v2182 = vadd.f32 %v1876, %v2140
        %v2183 = vadd.f32 %v1877, %v2143
        %v2184 = vadd.f32 %v1878, %v2148
        %v2185 = vadd.f32 %v1879, %v2151
        %s2186 = sadd.s32 %s409, 2
        %s2187 = smul.u32 %s2186, 24
        %s2188 = scalar_lea.vmem [#allocation2], %s2187
        %v2189 = vld [vmem:[%s2188] sm:$0xff]
        %v2190 = vld [vmem:[%s2188 + $0x8] sm:$0xff]
        %v2191 = vld [vmem:[%s2188 + $0x18] sm:$0xff]
        %v2192 = vld [vmem:[%s2188 + $0x20] sm:$0xff]
        %v2193 = vld [vmem:[%s2188 + $0x30] sm:$0xff]
        %v2194 = vld [vmem:[%s2188 + $0x38] sm:$0xff]
        %v2195 = vld [vmem:[%s2188 + $0x48] sm:$0xff]
        %v2196 = vld [vmem:[%s2188 + $0x50] sm:$0xff]
        %v2197 = vld [vmem:[%s2188 + $0x60] sm:$0xff]
        %v2198 = vld [vmem:[%s2188 + $0x68] sm:$0xff]
        %v2199 = vld [vmem:[%s2188 + $0x78] sm:$0xff]
        %v2200 = vld [vmem:[%s2188 + $0x80] sm:$0xff]
        %v2201 = vld [vmem:[%s2188 + $0x90] sm:$0xff]
        %v2202 = vld [vmem:[%s2188 + $0x98] sm:$0xff]
        %v2203 = vld [vmem:[%s2188 + $0xa8] sm:$0xff]
        %v2204 = vld [vmem:[%s2188 + $0xb0] sm:$0xff]
        %v2205 = vld [vmem:[%s2188 + $0xc0] sm:$0xff]
        %v2206 = vld [vmem:[%s2188 + $0xc8] sm:$0xff]
        %v2207 = vld [vmem:[%s2188 + $0xd8] sm:$0xff]
        %v2208 = vld [vmem:[%s2188 + $0xe0] sm:$0xff]
        %v2209 = vld [vmem:[%s2188 + $0xf0] sm:$0xff]
        %v2210 = vld [vmem:[%s2188 + $0xf8] sm:$0xff]
        %v2211 = vld [vmem:[%s2188 + $0x108] sm:$0xff]
        %v2212 = vld [vmem:[%s2188 + $0x110] sm:$0xff]
        %v2213 = vld [vmem:[%s2188 + $0x120] sm:$0xff]
        %v2214 = vld [vmem:[%s2188 + $0x128] sm:$0xff]
        %v2215 = vld [vmem:[%s2188 + $0x138] sm:$0xff]
        %v2216 = vld [vmem:[%s2188 + $0x140] sm:$0xff]
        %v2217 = vld [vmem:[%s2188 + $0x150] sm:$0xff]
        %v2218 = vld [vmem:[%s2188 + $0x158] sm:$0xff]
        %v2219 = vld [vmem:[%s2188 + $0x168] sm:$0xff]
        %v2220 = vld [vmem:[%s2188 + $0x170] sm:$0xff]
        %v2221 = vpack.c.bf16 %v2190, %v2189
        %v2222 = vpack.c.bf16 %v2192, %v2191
        %v2223 = vpack.c.bf16 %v2194, %v2193
        %v2224 = vpack.c.bf16 %v2196, %v2195
        %v2225 = vpack.c.bf16 %v2198, %v2197
        %v2226 = vpack.c.bf16 %v2200, %v2199
        %v2227 = vpack.c.bf16 %v2202, %v2201
        %v2228 = vpack.c.bf16 %v2204, %v2203
        %v2229 = vpack.c.bf16 %v2206, %v2205
        %v2230 = vpack.c.bf16 %v2208, %v2207
        %v2231 = vpack.c.bf16 %v2210, %v2209
        %v2232 = vpack.c.bf16 %v2212, %v2211
        %v2233 = vpack.c.bf16 %v2214, %v2213
        %v2234 = vpack.c.bf16 %v2216, %v2215
        %v2235 = vpack.c.bf16 %v2218, %v2217
        %v2236 = vpack.c.bf16 %v2220, %v2219
        %s2237 = scalar_lea.vmem [#allocation6], 384
        %v2238 = vld [vmem:[%s2237] sm:$0xf]
        %v2239 = vld [vmem:[%s2237 + $0x4] sm:$0xf]
        %v2240 = vld [vmem:[%s2237 + $0x8] sm:$0xf]
        %v2241 = vld [vmem:[%s2237 + $0xc] sm:$0xf]
        %v2242 = vld [vmem:[%s2237 + $0x10] sm:$0xf]
        %v2243 = vld [vmem:[%s2237 + $0x14] sm:$0xf]
        %v2244 = vld [vmem:[%s2237 + $0x18] sm:$0xf]
        %v2245 = vld [vmem:[%s2237 + $0x1c] sm:$0xf]
        %v2246 = vld [vmem:[%s2237 + $0x20] sm:$0xf]
        %v2247 = vld [vmem:[%s2237 + $0x24] sm:$0xf]
        %v2248 = vld [vmem:[%s2237 + $0x28] sm:$0xf]
        %v2249 = vld [vmem:[%s2237 + $0x2c] sm:$0xf]
        %v2250 = vld [vmem:[%s2237 + $0x30] sm:$0xf]
        %v2251 = vld [vmem:[%s2237 + $0x34] sm:$0xf]
        %v2252 = vld [vmem:[%s2237 + $0x38] sm:$0xf]
        %v2253 = vld [vmem:[%s2237 + $0x3c] sm:$0xf]
        %v2270 = vunpack.c.l.b16 %v2238
        %v2271 = vunpack.c.l.b16 %v2239
        %v2272 = vunpack.c.l.b16 %v2240
        %v2273 = vunpack.c.l.b16 %v2241
        %v2274 = vunpack.c.l.b16 %v2242
        %v2275 = vunpack.c.l.b16 %v2243
        %v2276 = vunpack.c.l.b16 %v2244
        %v2277 = vunpack.c.l.b16 %v2245
        %v2278 = vunpack.c.l.b16 %v2246
        %v2279 = vunpack.c.l.b16 %v2247
        %v2280 = vunpack.c.l.b16 %v2248
        %v2281 = vunpack.c.l.b16 %v2249
        %v2282 = vunpack.c.l.b16 %v2250
        %v2283 = vunpack.c.l.b16 %v2251
        %v2284 = vunpack.c.l.b16 %v2252
        %v2285 = vunpack.c.l.b16 %v2253
        %v2286 = vpack.c.b16 %v2271, %v2270
        %v2287 = vpack.c.b16 %v2273, %v2272
        %v2288 = vpack.c.b16 %v2275, %v2274
        %v2289 = vpack.c.b16 %v2277, %v2276
        %v2290 = vpack.c.b16 %v2279, %v2278
        %v2291 = vpack.c.b16 %v2281, %v2280
        %v2292 = vpack.c.b16 %v2283, %v2282
        %v2293 = vpack.c.b16 %v2285, %v2284
        %2302 = vmatprep.subr.bf16.mxu0 0
        %2303 = vmatpush1.bf16.msra.mxu0 %v2293
        %2304 = vmatprep.subr.bf16.mxu0 0
        %2305 = vmatpush1.bf16.msra.mxu0 %v2292
        %2306 = vmatprep.subr.bf16.mxu0 0
        %2307 = vmatpush1.bf16.msra.mxu0 %v2291
        %2308 = vmatprep.subr.bf16.mxu0 0
        %2309 = vmatpush1.bf16.msra.mxu0 %v2290
        %2310 = vmatprep.subr.bf16.mxu0 0
        %2311 = vmatpush1.bf16.msra.mxu0 %v2289
        %2312 = vmatprep.subr.bf16.mxu0 0
        %2313 = vmatpush1.bf16.msra.mxu0 %v2288
        %2314 = vmatprep.subr.bf16.mxu0 0
        %2315 = vmatpush1.bf16.msra.mxu0 %v2287
        %2316 = vmatprep.subr.bf16.mxu0 0
        %2317 = vmatpush1.bf16.msra.mxu0 %v2286
        %2318 = vmatprep.subr.bf16.mxu0 0
        %2319 = vmatpush2.bf16.msra.mxu0 0
        %2320 = vmatprep.subr.bf16.mxu0 0
        %2321 = vmatpush2.bf16.msra.mxu0 0
        %2322 = vmatprep.subr.bf16.mxu0 0
        %2323 = vmatpush2.bf16.msra.mxu0 0
        %2324 = vmatprep.subr.bf16.mxu0 0
        %2325 = vmatpush2.bf16.msra.mxu0 0
        %2326 = vmatprep.subr.bf16.mxu0 0
        %2327 = vmatpush2.bf16.msra.mxu0 0
        %2328 = vmatprep.subr.bf16.mxu0 0
        %2329 = vmatpush2.bf16.msra.mxu0 0
        %2330 = vmatprep.subr.bf16.mxu0 0
        %2331 = vmatpush2.bf16.msra.mxu0 0
        %2332 = vmatprep.subr.bf16.mxu0 0
        %2333 = vmatpush2.bf16.msra.mxu0 0
        %2334 = vmatprep.mubr.bf16.mxu0 0
        %2335 = vmatmul.mubr.bf16.gmra.mxu0 %v2221
        %v2336 = vpop.f32.mrf.mxu0
        %v2337 = vadd.f32 0.0, %v2336
        %v2338 = vpop.f32.mrf.mxu0
        %v2339 = vpop.f32.mrf.mxu0
        %v2340 = vadd.f32 0.0, %v2339
        %v2341 = vpop.f32.mrf.mxu0
        %2342 = vmatprep.mubr.bf16.mxu0 0
        %2343 = vmatmul.mubr.bf16.gmra.mxu0 %v2222
        %v2344 = vpop.f32.mrf.mxu0
        %v2345 = vadd.f32 0.0, %v2344
        %v2346 = vpop.f32.mrf.mxu0
        %v2347 = vpop.f32.mrf.mxu0
        %v2348 = vadd.f32 0.0, %v2347
        %v2349 = vpop.f32.mrf.mxu0
        %2350 = vmatprep.mubr.bf16.mxu0 0
        %2351 = vmatmul.mubr.bf16.gmra.mxu0 %v2223
        %v2352 = vpop.f32.mrf.mxu0
        %v2353 = vadd.f32 0.0, %v2352
        %v2354 = vpop.f32.mrf.mxu0
        %v2355 = vpop.f32.mrf.mxu0
        %v2356 = vadd.f32 0.0, %v2355
        %v2357 = vpop.f32.mrf.mxu0
        %2358 = vmatprep.mubr.bf16.mxu0 0
        %2359 = vmatmul.mubr.bf16.gmra.mxu0 %v2224
        %v2360 = vpop.f32.mrf.mxu0
        %v2361 = vadd.f32 0.0, %v2360
        %v2362 = vpop.f32.mrf.mxu0
        %v2363 = vpop.f32.mrf.mxu0
        %v2364 = vadd.f32 0.0, %v2363
        %v2365 = vpop.f32.mrf.mxu0
        %2366 = vmatprep.mubr.bf16.mxu0 0
        %2367 = vmatmul.mubr.bf16.gmra.mxu0 %v2225
        %v2368 = vpop.f32.mrf.mxu0
        %v2369 = vadd.f32 0.0, %v2368
        %v2370 = vpop.f32.mrf.mxu0
        %v2371 = vpop.f32.mrf.mxu0
        %v2372 = vadd.f32 0.0, %v2371
        %v2373 = vpop.f32.mrf.mxu0
        %2374 = vmatprep.mubr.bf16.mxu0 0
        %2375 = vmatmul.mubr.bf16.gmra.mxu0 %v2226
        %v2376 = vpop.f32.mrf.mxu0
        %v2377 = vadd.f32 0.0, %v2376
        %v2378 = vpop.f32.mrf.mxu0
        %v2379 = vpop.f32.mrf.mxu0
        %v2380 = vadd.f32 0.0, %v2379
        %v2381 = vpop.f32.mrf.mxu0
        %2382 = vmatprep.mubr.bf16.mxu0 0
        %2383 = vmatmul.mubr.bf16.gmra.mxu0 %v2227
        %v2384 = vpop.f32.mrf.mxu0
        %v2385 = vadd.f32 0.0, %v2384
        %v2386 = vpop.f32.mrf.mxu0
        %v2387 = vpop.f32.mrf.mxu0
        %v2388 = vadd.f32 0.0, %v2387
        %v2389 = vpop.f32.mrf.mxu0
        %2390 = vmatprep.mubr.bf16.mxu0 0
        %2391 = vmatmul.mubr.bf16.gmra.mxu0 %v2228
        %v2392 = vpop.f32.mrf.mxu0
        %v2393 = vadd.f32 0.0, %v2392
        %v2394 = vpop.f32.mrf.mxu0
        %v2395 = vpop.f32.mrf.mxu0
        %v2396 = vadd.f32 0.0, %v2395
        %v2397 = vpop.f32.mrf.mxu0
        %2398 = vmatprep.mubr.bf16.mxu0 0
        %2399 = vmatmul.mubr.bf16.gmra.mxu0 %v2229
        %v2400 = vpop.f32.mrf.mxu0
        %v2401 = vadd.f32 0.0, %v2400
        %v2402 = vpop.f32.mrf.mxu0
        %v2403 = vpop.f32.mrf.mxu0
        %v2404 = vadd.f32 0.0, %v2403
        %v2405 = vpop.f32.mrf.mxu0
        %2406 = vmatprep.mubr.bf16.mxu0 0
        %2407 = vmatmul.mubr.bf16.gmra.mxu0 %v2230
        %v2408 = vpop.f32.mrf.mxu0
        %v2409 = vadd.f32 0.0, %v2408
        %v2410 = vpop.f32.mrf.mxu0
        %v2411 = vpop.f32.mrf.mxu0
        %v2412 = vadd.f32 0.0, %v2411
        %v2413 = vpop.f32.mrf.mxu0
        %2414 = vmatprep.mubr.bf16.mxu0 0
        %2415 = vmatmul.mubr.bf16.gmra.mxu0 %v2231
        %v2416 = vpop.f32.mrf.mxu0
        %v2417 = vadd.f32 0.0, %v2416
        %v2418 = vpop.f32.mrf.mxu0
        %v2419 = vpop.f32.mrf.mxu0
        %v2420 = vadd.f32 0.0, %v2419
        %v2421 = vpop.f32.mrf.mxu0
        %2422 = vmatprep.mubr.bf16.mxu0 0
        %2423 = vmatmul.mubr.bf16.gmra.mxu0 %v2232
        %v2424 = vpop.f32.mrf.mxu0
        %v2425 = vadd.f32 0.0, %v2424
        %v2426 = vpop.f32.mrf.mxu0
        %v2427 = vpop.f32.mrf.mxu0
        %v2428 = vadd.f32 0.0, %v2427
        %v2429 = vpop.f32.mrf.mxu0
        %2430 = vmatprep.mubr.bf16.mxu0 0
        %2431 = vmatmul.mubr.bf16.gmra.mxu0 %v2233
        %v2432 = vpop.f32.mrf.mxu0
        %v2433 = vadd.f32 0.0, %v2432
        %v2434 = vpop.f32.mrf.mxu0
        %v2435 = vpop.f32.mrf.mxu0
        %v2436 = vadd.f32 0.0, %v2435
        %v2437 = vpop.f32.mrf.mxu0
        %2438 = vmatprep.mubr.bf16.mxu0 0
        %2439 = vmatmul.mubr.bf16.gmra.mxu0 %v2234
        %v2440 = vpop.f32.mrf.mxu0
        %v2441 = vadd.f32 0.0, %v2440
        %v2442 = vpop.f32.mrf.mxu0
        %v2443 = vpop.f32.mrf.mxu0
        %v2444 = vadd.f32 0.0, %v2443
        %v2445 = vpop.f32.mrf.mxu0
        %2446 = vmatprep.mubr.bf16.mxu0 0
        %2447 = vmatmul.mubr.bf16.gmra.mxu0 %v2235
        %v2448 = vpop.f32.mrf.mxu0
        %v2449 = vadd.f32 0.0, %v2448
        %v2450 = vpop.f32.mrf.mxu0
        %v2451 = vpop.f32.mrf.mxu0
        %v2452 = vadd.f32 0.0, %v2451
        %v2453 = vpop.f32.mrf.mxu0
        %2454 = vmatprep.mubr.bf16.mxu0 0
        %2455 = vmatmul.mubr.bf16.gmra.mxu0 %v2236
        %v2456 = vpop.f32.mrf.mxu0
        %v2457 = vadd.f32 0.0, %v2456
        %v2458 = vpop.f32.mrf.mxu0
        %v2459 = vpop.f32.mrf.mxu0
        %v2460 = vadd.f32 0.0, %v2459
        %v2461 = vpop.f32.mrf.mxu0
        %2462 = vdwg.mxu0
        %v2463 = vadd.f32 %v2154, %v2337
        %v2464 = vadd.f32 %v2155, %v2340
        %v2465 = vadd.f32 %v2156, %v2345
        %v2466 = vadd.f32 %v2157, %v2348
        %v2467 = vadd.f32 %v2158, %v2353
        %v2468 = vadd.f32 %v2159, %v2356
        %v2469 = vadd.f32 %v2160, %v2361
        %v2470 = vadd.f32 %v2161, %v2364
        %v2471 = vadd.f32 %v2162, %v2369
        %v2472 = vadd.f32 %v2163, %v2372
        %v2473 = vadd.f32 %v2164, %v2377
        %v2474 = vadd.f32 %v2165, %v2380
        %v2475 = vadd.f32 %v2166, %v2385
        %v2476 = vadd.f32 %v2167, %v2388
        %v2477 = vadd.f32 %v2168, %v2393
        %v2478 = vadd.f32 %v2169, %v2396
        %v2479 = vadd.f32 %v2170, %v2401
        %v2480 = vadd.f32 %v2171, %v2404
        %v2481 = vadd.f32 %v2172, %v2409
        %v2482 = vadd.f32 %v2173, %v2412
        %v2483 = vadd.f32 %v2174, %v2417
        %v2484 = vadd.f32 %v2175, %v2420
        %v2485 = vadd.f32 %v2176, %v2425
        %v2486 = vadd.f32 %v2177, %v2428
        %v2487 = vadd.f32 %v2178, %v2433
        %v2488 = vadd.f32 %v2179, %v2436
        %v2489 = vadd.f32 %v2180, %v2441
        %v2490 = vadd.f32 %v2181, %v2444
        %v2491 = vadd.f32 %v2182, %v2449
        %v2492 = vadd.f32 %v2183, %v2452
        %v2493 = vadd.f32 %v2184, %v2457
        %v2494 = vadd.f32 %v2185, %v2460
        %v2495 = vld [vmem:[%s2188 + $0x1] sm:$0xff]
        %v2496 = vld [vmem:[%s2188 + $0x9] sm:$0xff]
        %v2497 = vld [vmem:[%s2188 + $0x19] sm:$0xff]
        %v2498 = vld [vmem:[%s2188 + $0x21] sm:$0xff]
        %v2499 = vld [vmem:[%s2188 + $0x31] sm:$0xff]
        %v2500 = vld [vmem:[%s2188 + $0x39] sm:$0xff]
        %v2501 = vld [vmem:[%s2188 + $0x49] sm:$0xff]
        %v2502 = vld [vmem:[%s2188 + $0x51] sm:$0xff]
        %v2503 = vld [vmem:[%s2188 + $0x61] sm:$0xff]
        %v2504 = vld [vmem:[%s2188 + $0x69] sm:$0xff]
        %v2505 = vld [vmem:[%s2188 + $0x79] sm:$0xff]
        %v2506 = vld [vmem:[%s2188 + $0x81] sm:$0xff]
        %v2507 = vld [vmem:[%s2188 + $0x91] sm:$0xff]
        %v2508 = vld [vmem:[%s2188 + $0x99] sm:$0xff]
        %v2509 = vld [vmem:[%s2188 + $0xa9] sm:$0xff]
        %v2510 = vld [vmem:[%s2188 + $0xb1] sm:$0xff]
        %v2511 = vld [vmem:[%s2188 + $0xc1] sm:$0xff]
        %v2512 = vld [vmem:[%s2188 + $0xc9] sm:$0xff]
        %v2513 = vld [vmem:[%s2188 + $0xd9] sm:$0xff]
        %v2514 = vld [vmem:[%s2188 + $0xe1] sm:$0xff]
        %v2515 = vld [vmem:[%s2188 + $0xf1] sm:$0xff]
        %v2516 = vld [vmem:[%s2188 + $0xf9] sm:$0xff]
        %v2517 = vld [vmem:[%s2188 + $0x109] sm:$0xff]
        %v2518 = vld [vmem:[%s2188 + $0x111] sm:$0xff]
        %v2519 = vld [vmem:[%s2188 + $0x121] sm:$0xff]
        %v2520 = vld [vmem:[%s2188 + $0x129] sm:$0xff]
        %v2521 = vld [vmem:[%s2188 + $0x139] sm:$0xff]
        %v2522 = vld [vmem:[%s2188 + $0x141] sm:$0xff]
        %v2523 = vld [vmem:[%s2188 + $0x151] sm:$0xff]
        %v2524 = vld [vmem:[%s2188 + $0x159] sm:$0xff]
        %v2525 = vld [vmem:[%s2188 + $0x169] sm:$0xff]
        %v2526 = vld [vmem:[%s2188 + $0x171] sm:$0xff]
        %v2527 = vpack.c.bf16 %v2496, %v2495
        %v2528 = vpack.c.bf16 %v2498, %v2497
        %v2529 = vpack.c.bf16 %v2500, %v2499
        %v2530 = vpack.c.bf16 %v2502, %v2501
        %v2531 = vpack.c.bf16 %v2504, %v2503
        %v2532 = vpack.c.bf16 %v2506, %v2505
        %v2533 = vpack.c.bf16 %v2508, %v2507
        %v2534 = vpack.c.bf16 %v2510, %v2509
        %v2535 = vpack.c.bf16 %v2512, %v2511
        %v2536 = vpack.c.bf16 %v2514, %v2513
        %v2537 = vpack.c.bf16 %v2516, %v2515
        %v2538 = vpack.c.bf16 %v2518, %v2517
        %v2539 = vpack.c.bf16 %v2520, %v2519
        %v2540 = vpack.c.bf16 %v2522, %v2521
        %v2541 = vpack.c.bf16 %v2524, %v2523
        %v2542 = vpack.c.bf16 %v2526, %v2525
        %s2543 = scalar_lea.vmem [#allocation6], 448
        %v2544 = vld [vmem:[%s2543] sm:$0xf]
        %v2545 = vld [vmem:[%s2543 + $0x4] sm:$0xf]
        %v2546 = vld [vmem:[%s2543 + $0x8] sm:$0xf]
        %v2547 = vld [vmem:[%s2543 + $0xc] sm:$0xf]
        %v2548 = vld [vmem:[%s2543 + $0x10] sm:$0xf]
        %v2549 = vld [vmem:[%s2543 + $0x14] sm:$0xf]
        %v2550 = vld [vmem:[%s2543 + $0x18] sm:$0xf]
        %v2551 = vld [vmem:[%s2543 + $0x1c] sm:$0xf]
        %v2552 = vld [vmem:[%s2543 + $0x20] sm:$0xf]
        %v2553 = vld [vmem:[%s2543 + $0x24] sm:$0xf]
        %v2554 = vld [vmem:[%s2543 + $0x28] sm:$0xf]
        %v2555 = vld [vmem:[%s2543 + $0x2c] sm:$0xf]
        %v2556 = vld [vmem:[%s2543 + $0x30] sm:$0xf]
        %v2557 = vld [vmem:[%s2543 + $0x34] sm:$0xf]
        %v2558 = vld [vmem:[%s2543 + $0x38] sm:$0xf]
        %v2559 = vld [vmem:[%s2543 + $0x3c] sm:$0xf]
        %v2576 = vunpack.c.l.b16 %v2544
        %v2577 = vunpack.c.l.b16 %v2545
        %v2578 = vunpack.c.l.b16 %v2546
        %v2579 = vunpack.c.l.b16 %v2547
        %v2580 = vunpack.c.l.b16 %v2548
        %v2581 = vunpack.c.l.b16 %v2549
        %v2582 = vunpack.c.l.b16 %v2550
        %v2583 = vunpack.c.l.b16 %v2551
        %v2584 = vunpack.c.l.b16 %v2552
        %v2585 = vunpack.c.l.b16 %v2553
        %v2586 = vunpack.c.l.b16 %v2554
        %v2587 = vunpack.c.l.b16 %v2555
        %v2588 = vunpack.c.l.b16 %v2556
        %v2589 = vunpack.c.l.b16 %v2557
        %v2590 = vunpack.c.l.b16 %v2558
        %v2591 = vunpack.c.l.b16 %v2559
        %v2592 = vpack.c.b16 %v2577, %v2576
        %v2593 = vpack.c.b16 %v2579, %v2578
        %v2594 = vpack.c.b16 %v2581, %v2580
        %v2595 = vpack.c.b16 %v2583, %v2582
        %v2596 = vpack.c.b16 %v2585, %v2584
        %v2597 = vpack.c.b16 %v2587, %v2586
        %v2598 = vpack.c.b16 %v2589, %v2588
        %v2599 = vpack.c.b16 %v2591, %v2590
        %2608 = vmatprep.subr.bf16.mxu0 0
        %2609 = vmatpush1.bf16.msra.mxu0 %v2599
        %2610 = vmatprep.subr.bf16.mxu0 0
        %2611 = vmatpush1.bf16.msra.mxu0 %v2598
        %2612 = vmatprep.subr.bf16.mxu0 0
        %2613 = vmatpush1.bf16.msra.mxu0 %v2597
        %2614 = vmatprep.subr.bf16.mxu0 0
        %2615 = vmatpush1.bf16.msra.mxu0 %v2596
        %2616 = vmatprep.subr.bf16.mxu0 0
        %2617 = vmatpush1.bf16.msra.mxu0 %v2595
        %2618 = vmatprep.subr.bf16.mxu0 0
        %2619 = vmatpush1.bf16.msra.mxu0 %v2594
        %2620 = vmatprep.subr.bf16.mxu0 0
        %2621 = vmatpush1.bf16.msra.mxu0 %v2593
        %2622 = vmatprep.subr.bf16.mxu0 0
        %2623 = vmatpush1.bf16.msra.mxu0 %v2592
        %2624 = vmatprep.subr.bf16.mxu0 0
        %2625 = vmatpush2.bf16.msra.mxu0 0
        %2626 = vmatprep.subr.bf16.mxu0 0
        %2627 = vmatpush2.bf16.msra.mxu0 0
        %2628 = vmatprep.subr.bf16.mxu0 0
        %2629 = vmatpush2.bf16.msra.mxu0 0
        %2630 = vmatprep.subr.bf16.mxu0 0
        %2631 = vmatpush2.bf16.msra.mxu0 0
        %2632 = vmatprep.subr.bf16.mxu0 0
        %2633 = vmatpush2.bf16.msra.mxu0 0
        %2634 = vmatprep.subr.bf16.mxu0 0
        %2635 = vmatpush2.bf16.msra.mxu0 0
        %2636 = vmatprep.subr.bf16.mxu0 0
        %2637 = vmatpush2.bf16.msra.mxu0 0
        %2638 = vmatprep.subr.bf16.mxu0 0
        %2639 = vmatpush2.bf16.msra.mxu0 0
        %2640 = vmatprep.mubr.bf16.mxu0 0
        %2641 = vmatmul.mubr.bf16.gmra.mxu0 %v2527
        %v2642 = vpop.f32.mrf.mxu0
        %v2643 = vadd.f32 0.0, %v2642
        %v2644 = vpop.f32.mrf.mxu0
        %v2645 = vpop.f32.mrf.mxu0
        %v2646 = vadd.f32 0.0, %v2645
        %v2647 = vpop.f32.mrf.mxu0
        %2648 = vmatprep.mubr.bf16.mxu0 0
        %2649 = vmatmul.mubr.bf16.gmra.mxu0 %v2528
        %v2650 = vpop.f32.mrf.mxu0
        %v2651 = vadd.f32 0.0, %v2650
        %v2652 = vpop.f32.mrf.mxu0
        %v2653 = vpop.f32.mrf.mxu0
        %v2654 = vadd.f32 0.0, %v2653
        %v2655 = vpop.f32.mrf.mxu0
        %2656 = vmatprep.mubr.bf16.mxu0 0
        %2657 = vmatmul.mubr.bf16.gmra.mxu0 %v2529
        %v2658 = vpop.f32.mrf.mxu0
        %v2659 = vadd.f32 0.0, %v2658
        %v2660 = vpop.f32.mrf.mxu0
        %v2661 = vpop.f32.mrf.mxu0
        %v2662 = vadd.f32 0.0, %v2661
        %v2663 = vpop.f32.mrf.mxu0
        %2664 = vmatprep.mubr.bf16.mxu0 0
        %2665 = vmatmul.mubr.bf16.gmra.mxu0 %v2530
        %v2666 = vpop.f32.mrf.mxu0
        %v2667 = vadd.f32 0.0, %v2666
        %v2668 = vpop.f32.mrf.mxu0
        %v2669 = vpop.f32.mrf.mxu0
        %v2670 = vadd.f32 0.0, %v2669
        %v2671 = vpop.f32.mrf.mxu0
        %2672 = vmatprep.mubr.bf16.mxu0 0
        %2673 = vmatmul.mubr.bf16.gmra.mxu0 %v2531
        %v2674 = vpop.f32.mrf.mxu0
        %v2675 = vadd.f32 0.0, %v2674
        %v2676 = vpop.f32.mrf.mxu0
        %v2677 = vpop.f32.mrf.mxu0
        %v2678 = vadd.f32 0.0, %v2677
        %v2679 = vpop.f32.mrf.mxu0
        %2680 = vmatprep.mubr.bf16.mxu0 0
        %2681 = vmatmul.mubr.bf16.gmra.mxu0 %v2532
        %v2682 = vpop.f32.mrf.mxu0
        %v2683 = vadd.f32 0.0, %v2682
        %v2684 = vpop.f32.mrf.mxu0
        %v2685 = vpop.f32.mrf.mxu0
        %v2686 = vadd.f32 0.0, %v2685
        %v2687 = vpop.f32.mrf.mxu0
        %2688 = vmatprep.mubr.bf16.mxu0 0
        %2689 = vmatmul.mubr.bf16.gmra.mxu0 %v2533
        %v2690 = vpop.f32.mrf.mxu0
        %v2691 = vadd.f32 0.0, %v2690
        %v2692 = vpop.f32.mrf.mxu0
        %v2693 = vpop.f32.mrf.mxu0
        %v2694 = vadd.f32 0.0, %v2693
        %v2695 = vpop.f32.mrf.mxu0
        %2696 = vmatprep.mubr.bf16.mxu0 0
        %2697 = vmatmul.mubr.bf16.gmra.mxu0 %v2534
        %v2698 = vpop.f32.mrf.mxu0
        %v2699 = vadd.f32 0.0, %v2698
        %v2700 = vpop.f32.mrf.mxu0
        %v2701 = vpop.f32.mrf.mxu0
        %v2702 = vadd.f32 0.0, %v2701
        %v2703 = vpop.f32.mrf.mxu0
        %2704 = vmatprep.mubr.bf16.mxu0 0
        %2705 = vmatmul.mubr.bf16.gmra.mxu0 %v2535
        %v2706 = vpop.f32.mrf.mxu0
        %v2707 = vadd.f32 0.0, %v2706
        %v2708 = vpop.f32.mrf.mxu0
        %v2709 = vpop.f32.mrf.mxu0
        %v2710 = vadd.f32 0.0, %v2709
        %v2711 = vpop.f32.mrf.mxu0
        %2712 = vmatprep.mubr.bf16.mxu0 0
        %2713 = vmatmul.mubr.bf16.gmra.mxu0 %v2536
        %v2714 = vpop.f32.mrf.mxu0
        %v2715 = vadd.f32 0.0, %v2714
        %v2716 = vpop.f32.mrf.mxu0
        %v2717 = vpop.f32.mrf.mxu0
        %v2718 = vadd.f32 0.0, %v2717
        %v2719 = vpop.f32.mrf.mxu0
        %2720 = vmatprep.mubr.bf16.mxu0 0
        %2721 = vmatmul.mubr.bf16.gmra.mxu0 %v2537
        %v2722 = vpop.f32.mrf.mxu0
        %v2723 = vadd.f32 0.0, %v2722
        %v2724 = vpop.f32.mrf.mxu0
        %v2725 = vpop.f32.mrf.mxu0
        %v2726 = vadd.f32 0.0, %v2725
        %v2727 = vpop.f32.mrf.mxu0
        %2728 = vmatprep.mubr.bf16.mxu0 0
        %2729 = vmatmul.mubr.bf16.gmra.mxu0 %v2538
        %v2730 = vpop.f32.mrf.mxu0
        %v2731 = vadd.f32 0.0, %v2730
        %v2732 = vpop.f32.mrf.mxu0
        %v2733 = vpop.f32.mrf.mxu0
        %v2734 = vadd.f32 0.0, %v2733
        %v2735 = vpop.f32.mrf.mxu0
        %2736 = vmatprep.mubr.bf16.mxu0 0
        %2737 = vmatmul.mubr.bf16.gmra.mxu0 %v2539
        %v2738 = vpop.f32.mrf.mxu0
        %v2739 = vadd.f32 0.0, %v2738
        %v2740 = vpop.f32.mrf.mxu0
        %v2741 = vpop.f32.mrf.mxu0
        %v2742 = vadd.f32 0.0, %v2741
        %v2743 = vpop.f32.mrf.mxu0
        %2744 = vmatprep.mubr.bf16.mxu0 0
        %2745 = vmatmul.mubr.bf16.gmra.mxu0 %v2540
        %v2746 = vpop.f32.mrf.mxu0
        %v2747 = vadd.f32 0.0, %v2746
        %v2748 = vpop.f32.mrf.mxu0
        %v2749 = vpop.f32.mrf.mxu0
        %v2750 = vadd.f32 0.0, %v2749
        %v2751 = vpop.f32.mrf.mxu0
        %2752 = vmatprep.mubr.bf16.mxu0 0
        %2753 = vmatmul.mubr.bf16.gmra.mxu0 %v2541
        %v2754 = vpop.f32.mrf.mxu0
        %v2755 = vadd.f32 0.0, %v2754
        %v2756 = vpop.f32.mrf.mxu0
        %v2757 = vpop.f32.mrf.mxu0
        %v2758 = vadd.f32 0.0, %v2757
        %v2759 = vpop.f32.mrf.mxu0
        %2760 = vmatprep.mubr.bf16.mxu0 0
        %2761 = vmatmul.mubr.bf16.gmra.mxu0 %v2542
        %v2762 = vpop.f32.mrf.mxu0
        %v2763 = vadd.f32 0.0, %v2762
        %v2764 = vpop.f32.mrf.mxu0
        %v2765 = vpop.f32.mrf.mxu0
        %v2766 = vadd.f32 0.0, %v2765
        %v2767 = vpop.f32.mrf.mxu0
        %2768 = vdwg.mxu0
        %v2769 = vadd.f32 %v2463, %v2643
        %v2770 = vadd.f32 %v2464, %v2646
        %v2771 = vadd.f32 %v2465, %v2651
        %v2772 = vadd.f32 %v2466, %v2654
        %v2773 = vadd.f32 %v2467, %v2659
        %v2774 = vadd.f32 %v2468, %v2662
        %v2775 = vadd.f32 %v2469, %v2667
        %v2776 = vadd.f32 %v2470, %v2670
        %v2777 = vadd.f32 %v2471, %v2675
        %v2778 = vadd.f32 %v2472, %v2678
        %v2779 = vadd.f32 %v2473, %v2683
        %v2780 = vadd.f32 %v2474, %v2686
        %v2781 = vadd.f32 %v2475, %v2691
        %v2782 = vadd.f32 %v2476, %v2694
        %v2783 = vadd.f32 %v2477, %v2699
        %v2784 = vadd.f32 %v2478, %v2702
        %v2785 = vadd.f32 %v2479, %v2707
        %v2786 = vadd.f32 %v2480, %v2710
        %v2787 = vadd.f32 %v2481, %v2715
        %v2788 = vadd.f32 %v2482, %v2718
        %v2789 = vadd.f32 %v2483, %v2723
        %v2790 = vadd.f32 %v2484, %v2726
        %v2791 = vadd.f32 %v2485, %v2731
        %v2792 = vadd.f32 %v2486, %v2734
        %v2793 = vadd.f32 %v2487, %v2739
        %v2794 = vadd.f32 %v2488, %v2742
        %v2795 = vadd.f32 %v2489, %v2747
        %v2796 = vadd.f32 %v2490, %v2750
        %v2797 = vadd.f32 %v2491, %v2755
        %v2798 = vadd.f32 %v2492, %v2758
        %v2799 = vadd.f32 %v2493, %v2763
        %v2800 = vadd.f32 %v2494, %v2766
        %v2801 = vld [vmem:[%s2188 + $0x2] sm:$0xff]
        %v2802 = vld [vmem:[%s2188 + $0xa] sm:$0xff]
        %v2803 = vld [vmem:[%s2188 + $0x1a] sm:$0xff]
        %v2804 = vld [vmem:[%s2188 + $0x22] sm:$0xff]
        %v2805 = vld [vmem:[%s2188 + $0x32] sm:$0xff]
        %v2806 = vld [vmem:[%s2188 + $0x3a] sm:$0xff]
        %v2807 = vld [vmem:[%s2188 + $0x4a] sm:$0xff]
        %v2808 = vld [vmem:[%s2188 + $0x52] sm:$0xff]
        %v2809 = vld [vmem:[%s2188 + $0x62] sm:$0xff]
        %v2810 = vld [vmem:[%s2188 + $0x6a] sm:$0xff]
        %v2811 = vld [vmem:[%s2188 + $0x7a] sm:$0xff]
        %v2812 = vld [vmem:[%s2188 + $0x82] sm:$0xff]
        %v2813 = vld [vmem:[%s2188 + $0x92] sm:$0xff]
        %v2814 = vld [vmem:[%s2188 + $0x9a] sm:$0xff]
        %v2815 = vld [vmem:[%s2188 + $0xaa] sm:$0xff]
        %v2816 = vld [vmem:[%s2188 + $0xb2] sm:$0xff]
        %v2817 = vld [vmem:[%s2188 + $0xc2] sm:$0xff]
        %v2818 = vld [vmem:[%s2188 + $0xca] sm:$0xff]
        %v2819 = vld [vmem:[%s2188 + $0xda] sm:$0xff]
        %v2820 = vld [vmem:[%s2188 + $0xe2] sm:$0xff]
        %v2821 = vld [vmem:[%s2188 + $0xf2] sm:$0xff]
        %v2822 = vld [vmem:[%s2188 + $0xfa] sm:$0xff]
        %v2823 = vld [vmem:[%s2188 + $0x10a] sm:$0xff]
        %v2824 = vld [vmem:[%s2188 + $0x112] sm:$0xff]
        %v2825 = vld [vmem:[%s2188 + $0x122] sm:$0xff]
        %v2826 = vld [vmem:[%s2188 + $0x12a] sm:$0xff]
        %v2827 = vld [vmem:[%s2188 + $0x13a] sm:$0xff]
        %v2828 = vld [vmem:[%s2188 + $0x142] sm:$0xff]
        %v2829 = vld [vmem:[%s2188 + $0x152] sm:$0xff]
        %v2830 = vld [vmem:[%s2188 + $0x15a] sm:$0xff]
        %v2831 = vld [vmem:[%s2188 + $0x16a] sm:$0xff]
        %v2832 = vld [vmem:[%s2188 + $0x172] sm:$0xff]
        %v2833 = vpack.c.bf16 %v2802, %v2801
        %v2834 = vpack.c.bf16 %v2804, %v2803
        %v2835 = vpack.c.bf16 %v2806, %v2805
        %v2836 = vpack.c.bf16 %v2808, %v2807
        %v2837 = vpack.c.bf16 %v2810, %v2809
        %v2838 = vpack.c.bf16 %v2812, %v2811
        %v2839 = vpack.c.bf16 %v2814, %v2813
        %v2840 = vpack.c.bf16 %v2816, %v2815
        %v2841 = vpack.c.bf16 %v2818, %v2817
        %v2842 = vpack.c.bf16 %v2820, %v2819
        %v2843 = vpack.c.bf16 %v2822, %v2821
        %v2844 = vpack.c.bf16 %v2824, %v2823
        %v2845 = vpack.c.bf16 %v2826, %v2825
        %v2846 = vpack.c.bf16 %v2828, %v2827
        %v2847 = vpack.c.bf16 %v2830, %v2829
        %v2848 = vpack.c.bf16 %v2832, %v2831
        %s2849 = scalar_lea.vmem [#allocation6], 512
        %v2850 = vld [vmem:[%s2849] sm:$0xf]
        %v2851 = vld [vmem:[%s2849 + $0x4] sm:$0xf]
        %v2852 = vld [vmem:[%s2849 + $0x8] sm:$0xf]
        %v2853 = vld [vmem:[%s2849 + $0xc] sm:$0xf]
        %v2854 = vld [vmem:[%s2849 + $0x10] sm:$0xf]
        %v2855 = vld [vmem:[%s2849 + $0x14] sm:$0xf]
        %v2856 = vld [vmem:[%s2849 + $0x18] sm:$0xf]
        %v2857 = vld [vmem:[%s2849 + $0x1c] sm:$0xf]
        %v2858 = vld [vmem:[%s2849 + $0x20] sm:$0xf]
        %v2859 = vld [vmem:[%s2849 + $0x24] sm:$0xf]
        %v2860 = vld [vmem:[%s2849 + $0x28] sm:$0xf]
        %v2861 = vld [vmem:[%s2849 + $0x2c] sm:$0xf]
        %v2862 = vld [vmem:[%s2849 + $0x30] sm:$0xf]
        %v2863 = vld [vmem:[%s2849 + $0x34] sm:$0xf]
        %v2864 = vld [vmem:[%s2849 + $0x38] sm:$0xf]
        %v2865 = vld [vmem:[%s2849 + $0x3c] sm:$0xf]
        %v2882 = vunpack.c.l.b16 %v2850
        %v2883 = vunpack.c.l.b16 %v2851
        %v2884 = vunpack.c.l.b16 %v2852
        %v2885 = vunpack.c.l.b16 %v2853
        %v2886 = vunpack.c.l.b16 %v2854
        %v2887 = vunpack.c.l.b16 %v2855
        %v2888 = vunpack.c.l.b16 %v2856
        %v2889 = vunpack.c.l.b16 %v2857
        %v2890 = vunpack.c.l.b16 %v2858
        %v2891 = vunpack.c.l.b16 %v2859
        %v2892 = vunpack.c.l.b16 %v2860
        %v2893 = vunpack.c.l.b16 %v2861
        %v2894 = vunpack.c.l.b16 %v2862
        %v2895 = vunpack.c.l.b16 %v2863
        %v2896 = vunpack.c.l.b16 %v2864
        %v2897 = vunpack.c.l.b16 %v2865
        %v2898 = vpack.c.b16 %v2883, %v2882
        %v2899 = vpack.c.b16 %v2885, %v2884
        %v2900 = vpack.c.b16 %v2887, %v2886
        %v2901 = vpack.c.b16 %v2889, %v2888
        %v2902 = vpack.c.b16 %v2891, %v2890
        %v2903 = vpack.c.b16 %v2893, %v2892
        %v2904 = vpack.c.b16 %v2895, %v2894
        %v2905 = vpack.c.b16 %v2897, %v2896
        %2914 = vmatprep.subr.bf16.mxu0 0
        %2915 = vmatpush1.bf16.msra.mxu0 %v2905
        %2916 = vmatprep.subr.bf16.mxu0 0
        %2917 = vmatpush1.bf16.msra.mxu0 %v2904
        %2918 = vmatprep.subr.bf16.mxu0 0
        %2919 = vmatpush1.bf16.msra.mxu0 %v2903
        %2920 = vmatprep.subr.bf16.mxu0 0
        %2921 = vmatpush1.bf16.msra.mxu0 %v2902
        %2922 = vmatprep.subr.bf16.mxu0 0
        %2923 = vmatpush1.bf16.msra.mxu0 %v2901
        %2924 = vmatprep.subr.bf16.mxu0 0
        %2925 = vmatpush1.bf16.msra.mxu0 %v2900
        %2926 = vmatprep.subr.bf16.mxu0 0
        %2927 = vmatpush1.bf16.msra.mxu0 %v2899
        %2928 = vmatprep.subr.bf16.mxu0 0
        %2929 = vmatpush1.bf16.msra.mxu0 %v2898
        %2930 = vmatprep.subr.bf16.mxu0 0
        %2931 = vmatpush2.bf16.msra.mxu0 0
        %2932 = vmatprep.subr.bf16.mxu0 0
        %2933 = vmatpush2.bf16.msra.mxu0 0
        %2934 = vmatprep.subr.bf16.mxu0 0
        %2935 = vmatpush2.bf16.msra.mxu0 0
        %2936 = vmatprep.subr.bf16.mxu0 0
        %2937 = vmatpush2.bf16.msra.mxu0 0
        %2938 = vmatprep.subr.bf16.mxu0 0
        %2939 = vmatpush2.bf16.msra.mxu0 0
        %2940 = vmatprep.subr.bf16.mxu0 0
        %2941 = vmatpush2.bf16.msra.mxu0 0
        %2942 = vmatprep.subr.bf16.mxu0 0
        %2943 = vmatpush2.bf16.msra.mxu0 0
        %2944 = vmatprep.subr.bf16.mxu0 0
        %2945 = vmatpush2.bf16.msra.mxu0 0
        %2946 = vmatprep.mubr.bf16.mxu0 0
        %2947 = vmatmul.mubr.bf16.gmra.mxu0 %v2833
        %v2948 = vpop.f32.mrf.mxu0
        %v2949 = vadd.f32 0.0, %v2948
        %v2950 = vpop.f32.mrf.mxu0
        %v2951 = vpop.f32.mrf.mxu0
        %v2952 = vadd.f32 0.0, %v2951
        %v2953 = vpop.f32.mrf.mxu0
        %2954 = vmatprep.mubr.bf16.mxu0 0
        %2955 = vmatmul.mubr.bf16.gmra.mxu0 %v2834
        %v2956 = vpop.f32.mrf.mxu0
        %v2957 = vadd.f32 0.0, %v2956
        %v2958 = vpop.f32.mrf.mxu0
        %v2959 = vpop.f32.mrf.mxu0
        %v2960 = vadd.f32 0.0, %v2959
        %v2961 = vpop.f32.mrf.mxu0
        %2962 = vmatprep.mubr.bf16.mxu0 0
        %2963 = vmatmul.mubr.bf16.gmra.mxu0 %v2835
        %v2964 = vpop.f32.mrf.mxu0
        %v2965 = vadd.f32 0.0, %v2964
        %v2966 = vpop.f32.mrf.mxu0
        %v2967 = vpop.f32.mrf.mxu0
        %v2968 = vadd.f32 0.0, %v2967
        %v2969 = vpop.f32.mrf.mxu0
        %2970 = vmatprep.mubr.bf16.mxu0 0
        %2971 = vmatmul.mubr.bf16.gmra.mxu0 %v2836
        %v2972 = vpop.f32.mrf.mxu0
        %v2973 = vadd.f32 0.0, %v2972
        %v2974 = vpop.f32.mrf.mxu0
        %v2975 = vpop.f32.mrf.mxu0
        %v2976 = vadd.f32 0.0, %v2975
        %v2977 = vpop.f32.mrf.mxu0
        %2978 = vmatprep.mubr.bf16.mxu0 0
        %2979 = vmatmul.mubr.bf16.gmra.mxu0 %v2837
        %v2980 = vpop.f32.mrf.mxu0
        %v2981 = vadd.f32 0.0, %v2980
        %v2982 = vpop.f32.mrf.mxu0
        %v2983 = vpop.f32.mrf.mxu0
        %v2984 = vadd.f32 0.0, %v2983
        %v2985 = vpop.f32.mrf.mxu0
        %2986 = vmatprep.mubr.bf16.mxu0 0
        %2987 = vmatmul.mubr.bf16.gmra.mxu0 %v2838
        %v2988 = vpop.f32.mrf.mxu0
        %v2989 = vadd.f32 0.0, %v2988
        %v2990 = vpop.f32.mrf.mxu0
        %v2991 = vpop.f32.mrf.mxu0
        %v2992 = vadd.f32 0.0, %v2991
        %v2993 = vpop.f32.mrf.mxu0
        %2994 = vmatprep.mubr.bf16.mxu0 0
        %2995 = vmatmul.mubr.bf16.gmra.mxu0 %v2839
        %v2996 = vpop.f32.mrf.mxu0
        %v2997 = vadd.f32 0.0, %v2996
        %v2998 = vpop.f32.mrf.mxu0
        %v2999 = vpop.f32.mrf.mxu0
        %v3000 = vadd.f32 0.0, %v2999
        %v3001 = vpop.f32.mrf.mxu0
        %3002 = vmatprep.mubr.bf16.mxu0 0
        %3003 = vmatmul.mubr.bf16.gmra.mxu0 %v2840
        %v3004 = vpop.f32.mrf.mxu0
        %v3005 = vadd.f32 0.0, %v3004
        %v3006 = vpop.f32.mrf.mxu0
        %v3007 = vpop.f32.mrf.mxu0
        %v3008 = vadd.f32 0.0, %v3007
        %v3009 = vpop.f32.mrf.mxu0
        %3010 = vmatprep.mubr.bf16.mxu0 0
        %3011 = vmatmul.mubr.bf16.gmra.mxu0 %v2841
        %v3012 = vpop.f32.mrf.mxu0
        %v3013 = vadd.f32 0.0, %v3012
        %v3014 = vpop.f32.mrf.mxu0
        %v3015 = vpop.f32.mrf.mxu0
        %v3016 = vadd.f32 0.0, %v3015
        %v3017 = vpop.f32.mrf.mxu0
        %3018 = vmatprep.mubr.bf16.mxu0 0
        %3019 = vmatmul.mubr.bf16.gmra.mxu0 %v2842
        %v3020 = vpop.f32.mrf.mxu0
        %v3021 = vadd.f32 0.0, %v3020
        %v3022 = vpop.f32.mrf.mxu0
        %v3023 = vpop.f32.mrf.mxu0
        %v3024 = vadd.f32 0.0, %v3023
        %v3025 = vpop.f32.mrf.mxu0
        %3026 = vmatprep.mubr.bf16.mxu0 0
        %3027 = vmatmul.mubr.bf16.gmra.mxu0 %v2843
        %v3028 = vpop.f32.mrf.mxu0
        %v3029 = vadd.f32 0.0, %v3028
        %v3030 = vpop.f32.mrf.mxu0
        %v3031 = vpop.f32.mrf.mxu0
        %v3032 = vadd.f32 0.0, %v3031
        %v3033 = vpop.f32.mrf.mxu0
        %3034 = vmatprep.mubr.bf16.mxu0 0
        %3035 = vmatmul.mubr.bf16.gmra.mxu0 %v2844
        %v3036 = vpop.f32.mrf.mxu0
        %v3037 = vadd.f32 0.0, %v3036
        %v3038 = vpop.f32.mrf.mxu0
        %v3039 = vpop.f32.mrf.mxu0
        %v3040 = vadd.f32 0.0, %v3039
        %v3041 = vpop.f32.mrf.mxu0
        %3042 = vmatprep.mubr.bf16.mxu0 0
        %3043 = vmatmul.mubr.bf16.gmra.mxu0 %v2845
        %v3044 = vpop.f32.mrf.mxu0
        %v3045 = vadd.f32 0.0, %v3044
        %v3046 = vpop.f32.mrf.mxu0
        %v3047 = vpop.f32.mrf.mxu0
        %v3048 = vadd.f32 0.0, %v3047
        %v3049 = vpop.f32.mrf.mxu0
        %3050 = vmatprep.mubr.bf16.mxu0 0
        %3051 = vmatmul.mubr.bf16.gmra.mxu0 %v2846
        %v3052 = vpop.f32.mrf.mxu0
        %v3053 = vadd.f32 0.0, %v3052
        %v3054 = vpop.f32.mrf.mxu0
        %v3055 = vpop.f32.mrf.mxu0
        %v3056 = vadd.f32 0.0, %v3055
        %v3057 = vpop.f32.mrf.mxu0
        %3058 = vmatprep.mubr.bf16.mxu0 0
        %3059 = vmatmul.mubr.bf16.gmra.mxu0 %v2847
        %v3060 = vpop.f32.mrf.mxu0
        %v3061 = vadd.f32 0.0, %v3060
        %v3062 = vpop.f32.mrf.mxu0
        %v3063 = vpop.f32.mrf.mxu0
        %v3064 = vadd.f32 0.0, %v3063
        %v3065 = vpop.f32.mrf.mxu0
        %3066 = vmatprep.mubr.bf16.mxu0 0
        %3067 = vmatmul.mubr.bf16.gmra.mxu0 %v2848
        %v3068 = vpop.f32.mrf.mxu0
        %v3069 = vadd.f32 0.0, %v3068
        %v3070 = vpop.f32.mrf.mxu0
        %v3071 = vpop.f32.mrf.mxu0
        %v3072 = vadd.f32 0.0, %v3071
        %v3073 = vpop.f32.mrf.mxu0
        %3074 = vdwg.mxu0
        %v3075 = vadd.f32 %v2769, %v2949
        %v3076 = vadd.f32 %v2770, %v2952
        %v3077 = vadd.f32 %v2771, %v2957
        %v3078 = vadd.f32 %v2772, %v2960
        %v3079 = vadd.f32 %v2773, %v2965
        %v3080 = vadd.f32 %v2774, %v2968
        %v3081 = vadd.f32 %v2775, %v2973
        %v3082 = vadd.f32 %v2776, %v2976
        %v3083 = vadd.f32 %v2777, %v2981
        %v3084 = vadd.f32 %v2778, %v2984
        %v3085 = vadd.f32 %v2779, %v2989
        %v3086 = vadd.f32 %v2780, %v2992
        %v3087 = vadd.f32 %v2781, %v2997
        %v3088 = vadd.f32 %v2782, %v3000
        %v3089 = vadd.f32 %v2783, %v3005
        %v3090 = vadd.f32 %v2784, %v3008
        %v3091 = vadd.f32 %v2785, %v3013
        %v3092 = vadd.f32 %v2786, %v3016
        %v3093 = vadd.f32 %v2787, %v3021
        %v3094 = vadd.f32 %v2788, %v3024
        %v3095 = vadd.f32 %v2789, %v3029
        %v3096 = vadd.f32 %v2790, %v3032
        %v3097 = vadd.f32 %v2791, %v3037
        %v3098 = vadd.f32 %v2792, %v3040
        %v3099 = vadd.f32 %v2793, %v3045
        %v3100 = vadd.f32 %v2794, %v3048
        %v3101 = vadd.f32 %v2795, %v3053
        %v3102 = vadd.f32 %v2796, %v3056
        %v3103 = vadd.f32 %v2797, %v3061
        %v3104 = vadd.f32 %v2798, %v3064
        %v3105 = vadd.f32 %v2799, %v3069
        %v3106 = vadd.f32 %v2800, %v3072
        %3107 = vst [vmem:[%s275] sm:$0xff] %v3075
        %3108 = vst [vmem:[%s275 + $0x8] sm:$0xff] %v3076
        %3109 = vst [vmem:[%s275 + $0x10] sm:$0xff] %v3077
        %3110 = vst [vmem:[%s275 + $0x18] sm:$0xff] %v3078
        %3111 = vst [vmem:[%s275 + $0x20] sm:$0xff] %v3079
        %3112 = vst [vmem:[%s275 + $0x28] sm:$0xff] %v3080
        %3113 = vst [vmem:[%s275 + $0x30] sm:$0xff] %v3081
        %3114 = vst [vmem:[%s275 + $0x38] sm:$0xff] %v3082
        %3115 = vst [vmem:[%s275 + $0x40] sm:$0xff] %v3083
        %3116 = vst [vmem:[%s275 + $0x48] sm:$0xff] %v3084
        %3117 = vst [vmem:[%s275 + $0x50] sm:$0xff] %v3085
        %3118 = vst [vmem:[%s275 + $0x58] sm:$0xff] %v3086
        %3119 = vst [vmem:[%s275 + $0x60] sm:$0xff] %v3087
        %3120 = vst [vmem:[%s275 + $0x68] sm:$0xff] %v3088
        %3121 = vst [vmem:[%s275 + $0x70] sm:$0xff] %v3089
        %3122 = vst [vmem:[%s275 + $0x78] sm:$0xff] %v3090
        %3123 = vst [vmem:[%s275 + $0x80] sm:$0xff] %v3091
        %3124 = vst [vmem:[%s275 + $0x88] sm:$0xff] %v3092
        %3125 = vst [vmem:[%s275 + $0x90] sm:$0xff] %v3093
        %3126 = vst [vmem:[%s275 + $0x98] sm:$0xff] %v3094
        %3127 = vst [vmem:[%s275 + $0xa0] sm:$0xff] %v3095
        %3128 = vst [vmem:[%s275 + $0xa8] sm:$0xff] %v3096
        %3129 = vst [vmem:[%s275 + $0xb0] sm:$0xff] %v3097
        %3130 = vst [vmem:[%s275 + $0xb8] sm:$0xff] %v3098
        %3131 = vst [vmem:[%s275 + $0xc0] sm:$0xff] %v3099
        %3132 = vst [vmem:[%s275 + $0xc8] sm:$0xff] %v3100
        %3133 = vst [vmem:[%s275 + $0xd0] sm:$0xff] %v3101
        %3134 = vst [vmem:[%s275 + $0xd8] sm:$0xff] %v3102
        %3135 = vst [vmem:[%s275 + $0xe0] sm:$0xff] %v3103
        %3136 = vst [vmem:[%s275 + $0xe8] sm:$0xff] %v3104
        %3137 = vst [vmem:[%s275 + $0xf0] sm:$0xff] %v3105
        %3138 = vst [vmem:[%s275 + $0xf8] sm:$0xff] %v3106
        %v3139 = vld [vmem:[%s282] sm:$0x1]
        %v3140 = vadd.f32 %v3075, %v3076
        %v3141 = vadd.f32 %v3140, %v3077
        %v3142 = vadd.f32 %v3141, %v3078
        %v3143 = vadd.f32 %v3142, %v3079
        %v3144 = vadd.f32 %v3143, %v3080
        %v3145 = vadd.f32 %v3144, %v3081
        %v3146 = vadd.f32 %v3145, %v3082
        %v3147 = vadd.f32 %v3146, %v3083
        %v3148 = vadd.f32 %v3147, %v3084
        %v3149 = vadd.f32 %v3148, %v3085
        %v3150 = vadd.f32 %v3149, %v3086
        %v3151 = vadd.f32 %v3150, %v3087
        %v3152 = vadd.f32 %v3151, %v3088
        %v3153 = vadd.f32 %v3152, %v3089
        %v3154 = vadd.f32 %v3153, %v3090
        %v3155 = vadd.f32 %v3154, %v3091
        %v3156 = vadd.f32 %v3155, %v3092
        %v3157 = vadd.f32 %v3156, %v3093
        %v3158 = vadd.f32 %v3157, %v3094
        %v3159 = vadd.f32 %v3158, %v3095
        %v3160 = vadd.f32 %v3159, %v3096
        %v3161 = vadd.f32 %v3160, %v3097
        %v3162 = vadd.f32 %v3161, %v3098
        %v3163 = vadd.f32 %v3162, %v3099
        %v3164 = vadd.f32 %v3163, %v3100
        %v3165 = vadd.f32 %v3164, %v3101
        %v3166 = vadd.f32 %v3165, %v3102
        %v3167 = vadd.f32 %v3166, %v3103
        %v3168 = vadd.f32 %v3167, %v3104
        %v3169 = vadd.f32 %v3168, %v3105
        %v3170 = vadd.f32 %v3169, %v3106
        %v3171 = vrot.slane %v3170, 4
        %v3172 = vadd.f32 %v3170, %v3171
        %v3173 = vrot.slane %v3172, 2
        %v3174 = vadd.f32 %v3172, %v3173
        %v3175 = vrot.slane %v3174, 1
        %v3176 = vadd.f32 %v3174, %v3175
        %v3177 = vadd.f32 %v3139, %v3176
        %3178 = vst [vmem:[%s282] sm:$0x1] %v3177
        %v3179 = vld [vmem:[%s282 + $0x1] sm:$0x1]
        %v3180 = vmul.f32 %v3075, %v3075
        %v3181 = vmul.f32 %v3076, %v3076
        %v3182 = vmul.f32 %v3077, %v3077
        %v3183 = vmul.f32 %v3078, %v3078
        %v3184 = vmul.f32 %v3079, %v3079
        %v3185 = vmul.f32 %v3080, %v3080
        %v3186 = vmul.f32 %v3081, %v3081
        %v3187 = vmul.f32 %v3082, %v3082
        %v3188 = vmul.f32 %v3083, %v3083
        %v3189 = vmul.f32 %v3084, %v3084
        %v3190 = vmul.f32 %v3085, %v3085
        %v3191 = vmul.f32 %v3086, %v3086
        %v3192 = vmul.f32 %v3087, %v3087
        %v3193 = vmul.f32 %v3088, %v3088
        %v3194 = vmul.f32 %v3089, %v3089
        %v3195 = vmul.f32 %v3090, %v3090
        %v3196 = vmul.f32 %v3091, %v3091
        %v3197 = vmul.f32 %v3092, %v3092
        %v3198 = vmul.f32 %v3093, %v3093
        %v3199 = vmul.f32 %v3094, %v3094
        %v3200 = vmul.f32 %v3095, %v3095
        %v3201 = vmul.f32 %v3096, %v3096
        %v3202 = vmul.f32 %v3097, %v3097
        %v3203 = vmul.f32 %v3098, %v3098
        %v3204 = vmul.f32 %v3099, %v3099
        %v3205 = vmul.f32 %v3100, %v3100
        %v3206 = vmul.f32 %v3101, %v3101
        %v3207 = vmul.f32 %v3102, %v3102
        %v3208 = vmul.f32 %v3103, %v3103
        %v3209 = vmul.f32 %v3104, %v3104
        %v3210 = vmul.f32 %v3105, %v3105
        %v3211 = vmul.f32 %v3106, %v3106
        %v3212 = vadd.f32 %v3180, %v3181
        %v3213 = vadd.f32 %v3212, %v3182
        %v3214 = vadd.f32 %v3213, %v3183
        %v3215 = vadd.f32 %v3214, %v3184
        %v3216 = vadd.f32 %v3215, %v3185
        %v3217 = vadd.f32 %v3216, %v3186
        %v3218 = vadd.f32 %v3217, %v3187
        %v3219 = vadd.f32 %v3218, %v3188
        %v3220 = vadd.f32 %v3219, %v3189
        %v3221 = vadd.f32 %v3220, %v3190
        %v3222 = vadd.f32 %v3221, %v3191
        %v3223 = vadd.f32 %v3222, %v3192
        %v3224 = vadd.f32 %v3223, %v3193
        %v3225 = vadd.f32 %v3224, %v3194
        %v3226 = vadd.f32 %v3225, %v3195
        %v3227 = vadd.f32 %v3226, %v3196
        %v3228 = vadd.f32 %v3227, %v3197
        %v3229 = vadd.f32 %v3228, %v3198
        %v3230 = vadd.f32 %v3229, %v3199
        %v3231 = vadd.f32 %v3230, %v3200
        %v3232 = vadd.f32 %v3231, %v3201
        %v3233 = vadd.f32 %v3232, %v3202
        %v3234 = vadd.f32 %v3233, %v3203
        %v3235 = vadd.f32 %v3234, %v3204
        %v3236 = vadd.f32 %v3235, %v3205
        %v3237 = vadd.f32 %v3236, %v3206
        %v3238 = vadd.f32 %v3237, %v3207
        %v3239 = vadd.f32 %v3238, %v3208
        %v3240 = vadd.f32 %v3239, %v3209
        %v3241 = vadd.f32 %v3240, %v3210
        %v3242 = vadd.f32 %v3241, %v3211
        %v3243 = vrot.slane %v3242, 4
        %v3244 = vadd.f32 %v3242, %v3243
        %v3245 = vrot.slane %v3244, 2
        %v3246 = vadd.f32 %v3244, %v3245
        %v3247 = vrot.slane %v3246, 1
        %v3248 = vadd.f32 %v3246, %v3247
        %v3249 = vadd.f32 %v3179, %v3248
        %3250 = vst [vmem:[%s282 + $0x1] sm:$0x1] %v3249
        %s3251 = sand.u32 %s138, 1
        %s3252 = scalar_lea.sflag [#allocation5], %s3251
        %s3253 = sand.u32 %s138, 1
        %s3254 = smul.addr %s3253, 256
        %s3255 = scalar_lea.vmem [#allocation8], %s3254
        %s3256 = sand.u32 %s164, 1
        %s3257 = scalar_lea.sflag [#allocation10], %s3256
        %s3258 = sand.u32 %s164, 1
        %s3259 = smul.addr %s3258, 8
        %s3260 = scalar_lea.vmem [#allocation9], %s3259
        // Predicated region
        $region49: #{tpu_custom_call.1} parent=35 // pred_check
          %p3261 = pneg %p148
        $region50: #{tpu_custom_call.1} parent=35 // pred_check_branch
          %3263 = sbr.rel (%p3261) target = $region52
        $region51: #{tpu_custom_call.1} parent=35 // pred_region
          %s3264 = smul.u32 16, %s32
          %s3266 = ssub.s32 4096, 4096
          %3267 = vsyncadd %s3252, %s3266
          %s3268 = smul.addr %s3264, 2
          %s3269 = smul.addr %s31, 32
          %s3270 = sadd.s32 %s3268, %s3269
          %s3271 = smul.addr %s3270, 128
          %s3272 = scalar_lea.hbm %s4, %s3271
          %s3273 = sshll.u32 %s3255, 4
          %s3274 = int_to_ptr.vmem [resolvable:$true] %s3273
          %3279 = dma.vmem_to_hbm [thread:$0]  %s3274, 4096, %s3272, %s3252, 128, 128, 8
        $region52: #{tpu_custom_call.1} parent=35 // pred_fallthru
          _
        // Predicated region
        $region53: #{tpu_custom_call.1} parent=35 // pred_check
          %p3280 = pneg %p174
        $region54: #{tpu_custom_call.1} parent=35 // pred_check_branch
          %3282 = sbr.rel (%p3280) target = $region56
        $region55: #{tpu_custom_call.1} parent=35 // pred_region
          %s3284 = ssub.s32 128, 128
          %3285 = vsyncadd %s3257, %s3284
          %s3286 = smul.addr %s31, 128
          %s3287 = scalar_lea.hbm %s5, %s3286
          %s3289 = sshll.u32 %s3260, 4
          %s3290 = int_to_ptr.vmem [resolvable:$true] %s3289
          %3292 = dma.vmem_to_hbm [thread:$0]  %s3290, 128, %s3287, %s3257
        $region56: #{tpu_custom_call.1} parent=35 // pred_fallthru
          _
      $region36: #{tpu_custom_call.1} parent=5 // pred_fallthru
        _
      %p3293 = scmp.le.s32.totalorder 2, %s22
      // Predicated region
      $region57: #{tpu_custom_call.1} parent=5 // pred_check
        %p3294 = pneg %p3293
      $region58: #{tpu_custom_call.1} parent=5 // pred_check_branch
        %3296 = sbr.rel (%p3294) target = $region60
      $region59: #{tpu_custom_call.1} parent=5 // pred_region
        %s3297 = ssub.s32 %s22, 2
        // Predicated region
        $region61: #{tpu_custom_call.1} parent=59 // pred_check
          %p3298 = pneg %p154
        $region62: #{tpu_custom_call.1} parent=59 // pred_check_branch
          %3300 = sbr.rel (%p3298) target = $region64
        $region63: #{tpu_custom_call.1} parent=59 // pred_region
          %s3301 = sand.u32 %s139, 1
          %s3302 = scalar_lea.sflag [#allocation5], %s3301
          %s3303 = sand.u32 %s139, 1
          %s3304 = smul.addr %s3303, 256
          %s3305 = scalar_lea.vmem [#allocation8], %s3304
          %3306 = dma.done %s3302, 4096
        $region64: #{tpu_custom_call.1} parent=59 // pred_fallthru
          _
        // Predicated region
        $region65: #{tpu_custom_call.1} parent=59 // pred_check
          %p3307 = pneg %p180
        $region66: #{tpu_custom_call.1} parent=59 // pred_check_branch
          %3309 = sbr.rel (%p3307) target = $region68
        $region67: #{tpu_custom_call.1} parent=59 // pred_region
          %s3310 = sand.u32 %s165, 1
          %s3311 = scalar_lea.sflag [#allocation10], %s3310
          %s3312 = sand.u32 %s165, 1
          %s3313 = smul.addr %s3312, 8
          %s3314 = scalar_lea.vmem [#allocation9], %s3313
          %3315 = dma.done %s3311, 128
        $region68: #{tpu_custom_call.1} parent=59 // pred_fallthru
          _
      $region60: #{tpu_custom_call.1} parent=5 // pred_fallthru
        _
    $region6: #{tpu_custom_call.1} parent=1 // loop_footer
      %s26 = sadd.s32 1, %s22
    $region7: #{tpu_custom_call.1} parent=1 // loop_footer_branch
      %21 = sbr.rel target = $region3
    $region8: #{tpu_custom_call.1} parent=1 // loop_exit
      _
    %3316 = vsyncpa [#allocation4], 1
    %s3317 = scalar_lea.sflag [#allocation4], 1
    %3318 = vsyncpa %s3317, 1
    %3319 = vsyncpa [#allocation7], 1
    %3320 = vsyncpa [#allocation5], 1
    %s3321 = scalar_lea.sflag [#allocation5], 1
    %3322 = vsyncpa %s3321, 1
    %3323 = vsyncpa [#allocation10], 1
    %s3324 = scalar_lea.sflag [#allocation10], 1
    %3325 = vsyncpa %s3324, 1

</llo_original>
